<compile_context>
chip_gen: v7x
topology: tpu7x:2x2x1
jax: 0.10.0
libtpu: 0.0.40
codegen_flags: <defaults>
</compile_context>

<pallas_src>
import jax
import jax.numpy as jnp
from jax.experimental import pallas as pl
from jax.experimental.pallas import tpu as pltpu

# ---- model hyper-parameters (small, consistent with the module) ----
B = 2                        # batch
N = 8                        # set size (points per periodic set)
INITIAL_FEA_LEN = 12         # module arg; input tensor has INITIAL_FEA_LEN + 1 cols
STR_DIM = INITIAL_FEA_LEN - 1    # 11 structural columns
COMP_DIM = 92                # atom feature length (AtomFeaturizer rows)
EMBED_DIM = 32               # embed_dim
NUM_HEADS = 2                # num_heads
DH = EMBED_DIM * NUM_HEADS   # encoder hidden width = 64
HEAD_DIM = DH // NUM_HEADS   # 32
N_ENCODERS = 3
N_ATOM_TYPES = 100
BN = B * N

# ---- packed-slab layout constants ----
ACT_W = 128                  # data / input-weight contraction width
STR_ROW0 = 8                 # str features live at lanes/rows 8:19
ATOM_ROW0 = STR_ROW0 + STR_DIM            # atom one-hot fires at lanes 19:119
ENC_W_ROWS = 5 * DH                       # emb, q(fused heads), k(fused), v, out
W_ENC0 = ACT_W
W_FIN = W_ENC0 + N_ENCODERS * ENC_W_ROWS  # 1088
W_ROWS = W_FIN + DH                       # 1152
ENC_B_ROWS = 7                            # emb_b, bq, bk, bv, ln_g, ln_b, out_b
B_FIN_ROW = 3 + N_ENCODERS * ENC_B_ROWS   # 24
B_ROWS = 32
LN_EPS = 1e-5


# ---------------- the Pallas kernel ----------------
def pst_kernel(data_ref, wslab_ref, bslab_ref, o_ref):
    bv = bslab_ref[...]                                  # [32, 64] f32, loaded once

    def brow(i):                                         # [1, 64] bias / LN row
        return bv[i:i + 1, :]

    def linear(x_bf, w_off, b_row):                      # bf16 LHS @ bf16 W -> f32
        return jnp.dot(x_bf, wslab_ref[w_off:w_off + DH, :],
                       preferred_element_type=jnp.float32) + brow(b_row)

    lane_i = jax.lax.broadcasted_iota(jnp.int32, (1, DH), 1)
    mask32 = jnp.where(lane_i < EMBED_DIM, 1.0, 0.0)     # [1, 64] pad mask for LN

    def layernorm(x, g_row, b_row, d_real, mask):
        # Pads beyond d_real are exact zeros (zero-padded weights/biases), so the
        # mean over the full 64 lanes with divisor d_real is exact; the variance
        # uses the subtracted form with pad lanes masked out; zero pad LN gain /
        # bias keeps output pads at zero.
        inv_d = 1.0 / float(d_real)
        mu = jnp.sum(x, axis=-1, keepdims=True) * inv_d
        xc = x - mu
        sq = xc * xc
        if mask is not None:
            sq = sq * mask
        var = jnp.sum(sq, axis=-1, keepdims=True) * inv_d
        return xc * jax.lax.rsqrt(var + LN_EPS) * brow(g_row) + brow(b_row)

    # ---- build the activation slab in-kernel (one-hot folded into the matmul) ----
    d = data_ref[...]                                    # [B*N, 128] f32
    w_pool = d[:, 0:1]                                   # [B*N, 1] PDD weights
    idx_i = d[:, 1:2].astype(jnp.int32) + ATOM_ROW0      # [B*N, 1] atom row index
    liota = jax.lax.broadcasted_iota(jnp.int32, (BN, ACT_W), 1)
    onehot = jnp.where(liota == idx_i, 1.0, 0.0)         # [B*N, 128]
    # data lanes 0,1 (w_pool, idx) hit zero weight rows, so adding them is harmless
    act = (d + onehot).astype(jnp.bfloat16)

    # fused comp_embedding + embedding_layer (atom gather folded into W) + shared LN
    x = jnp.dot(act, wslab_ref[0:ACT_W, :],
                preferred_element_type=jnp.float32) + brow(0)    # [B*N, 64], cols 32: = 0
    x = layernorm(x, 1, 2, EMBED_DIM, mask32)
    x_init = x

    w3 = w_pool.reshape(B, N, 1).astype(jnp.bfloat16)    # PDD weights as a column
    inv_sqrt_hd = float(HEAD_DIM) ** -0.5

    for e in range(N_ENCODERS):
        wb = W_ENC0 + e * ENC_W_ROWS
        bb = 3 + e * ENC_B_ROWS

        xe = linear(x.astype(jnp.bfloat16), wb, bb)      # encoder.embedding: [B*N, 64]
        xe_bf = xe.astype(jnp.bfloat16)
        q = linear(xe_bf, wb + 1 * DH, bb + 1)           # both heads: lanes 0:32 | 32:64
        k = linear(xe_bf, wb + 2 * DH, bb + 2)
        v = linear(xe_bf, wb + 3 * DH, bb + 3)           # W_v(x): [B*N, 64]

        # TODO(synk): key_padding_mask (= sum(|embedding(x)|, -1) == 0) omitted:
        # with the nonzero embedding bias it is never active, so it never changes
        # the module output.

        q3 = q.reshape(B, N, DH)
        kT = jnp.transpose(k.reshape(B, N, DH), (0, 2, 1))       # [B, 64, N], 1 transpose
        s0 = jnp.einsum("bid,bdj->bij",
                        q3[:, :, :HEAD_DIM].astype(jnp.bfloat16),
                        kT[:, :HEAD_DIM, :].astype(jnp.bfloat16),
                        preferred_element_type=jnp.float32)
        s1 = jnp.einsum("bid,bdj->bij",
                        q3[:, :, HEAD_DIM:].astype(jnp.bfloat16),
                        kT[:, HEAD_DIM:, :].astype(jnp.bfloat16),
                        preferred_element_type=jnp.float32)
        # one softmax for both heads (torch MHA default: averaged attn weights;
        # the 1/num_heads factor cancels in the PDD renormalization below)
        s = jnp.concatenate([s0, s1], axis=0) * inv_sqrt_hd       # [2B, N, N]
        s = s - jnp.max(s, axis=-1, keepdims=True)
        p = jnp.exp(s)
        p = p * pl.reciprocal(jnp.sum(p, axis=-1, keepdims=True), approx=True)
        attn = (p[:B] + p[B:]).astype(jnp.bfloat16)               # head sum [B, N, N]

        # PDD reweight + renorm folded into the value matmul:
        #   att_out = (attn @ (w * V)) / (attn @ w)
        vw = (v * w_pool).reshape(B, N, DH).astype(jnp.bfloat16)
        num = jnp.einsum("bij,bjd->bid", attn, vw,
                         preferred_element_type=jnp.float32)      # [B, N, 64]
        den = jnp.einsum("bij,bjk->bik", attn, w3,
                         preferred_element_type=jnp.float32)      # [B, N, 1]
        att_out = (num * pl.reciprocal(den, approx=True)).reshape(BN, DH)

        x2 = xe + jnp.logaddexp(att_out, 0.0)                     # softplus
        x2 = layernorm(x2, bb + 4, bb + 5, DH, None)
        x = linear(x2.astype(jnp.bfloat16), wb + 4 * DH, bb + 6)  # [B*N, 64], cols 32: = 0

    # weighted pooling over the set, shared LayerNorm, final head
    xs = (x + x_init) * w_pool                                    # [B*N, 64]
    pooled = jnp.sum(xs.reshape(B, N, DH), axis=1)                # [B, 64]
    pooled = layernorm(pooled, 1, 2, EMBED_DIM, mask32)
    # decoder_layers = 1 -> decoder / activation lists are empty (no-op)
    out = linear(pooled.astype(jnp.bfloat16), W_FIN, B_FIN_ROW)
    o_ref[...] = out.astype(o_ref.dtype)                          # [B, 64]; col 0 is real


# ---------------- host-side parameter packing ----------------
def pack_params(p):
    """Fold / transpose / pad all PyTorch-layout params into two slabs (W in bf16)."""
    def padw(w):
        out = jnp.zeros((DH, DH), jnp.float32)
        return out.at[:w.shape[0], :w.shape[1]].set(w)

    def padb(v):
        v = v.reshape(-1)
        out = jnp.zeros((DH,), jnp.float32)
        return out.at[:v.shape[0]].set(v)

    w_blocks, b_rows = [], []

    # combined comp + structural input embedding (atom table folded into W)
    w_in = jnp.zeros((ACT_W, DH), jnp.float32)
    w_in = w_in.at[STR_ROW0:STR_ROW0 + STR_DIM, :EMBED_DIM].set(p["ws"].T)
    atom_emb = p["atom_table"] @ p["wc"].T                        # [100, 32]
    w_in = w_in.at[ATOM_ROW0:ATOM_ROW0 + N_ATOM_TYPES, :EMBED_DIM].set(atom_emb)
    w_blocks.append(w_in)
    b_rows += [padb(p["bc"] + p["bs"]),                            # row 0: combined input bias
               padb(p["ln_g"]), padb(p["ln_b"])]                   # rows 1,2: shared LN

    for e in range(N_ENCODERS):
        # fold W_q -> in_proj_q (and W_k -> in_proj_k); head columns stay in the
        # natural order (head0 = cols 0:32, head1 = 32:64), so one fused block each.
        wq_eff = (p["e_ipq_w"][e] @ p["e_wq"][e]).T                # [64, 64] (in, out)
        bq_eff = p["e_ipq_w"][e] @ p["e_bq"][e] + p["e_ipq_b"][e]
        wk_eff = (p["e_ipk_w"][e] @ p["e_wk"][e]).T
        bk_eff = p["e_ipk_w"][e] @ p["e_bk"][e] + p["e_ipk_b"][e]

        w_blocks += [padw(p["e_emb_w"][e].T),                      # embedding  [32->64, 64]
                     padw(wq_eff), padw(wk_eff),                   # fused-head Q, K
                     padw(p["e_wv"][e].T),                         # W_v
                     padw(p["e_out_w"][e].T)]                      # encoder.out [64, 32->64]
        b_rows += [padb(p["e_emb_b"][e]), padb(bq_eff), padb(bk_eff),
                   padb(p["e_bv"][e]), padb(p["e_ln_g"][e]), padb(p["e_ln_b"][e]),
                   padb(p["e_out_b"][e])]

    w_blocks.append(padw(p["w_out"].T))                            # final head [32->64, 1->64]
    b_rows.append(padb(p["b_out"]))

    wslab = jnp.concatenate(w_blocks, axis=0).astype(jnp.bfloat16)
    bslab = jnp.stack(b_rows, axis=0)
    pad = B_ROWS - bslab.shape[0]
    bslab = jnp.concatenate([bslab, jnp.zeros((pad, DH), jnp.float32)], axis=0)
    assert wslab.shape == (W_ROWS, DH) and bslab.shape == (B_ROWS, DH)
    return {"wslab": wslab, "bslab": bslab}


# ---------------- wrapper (layout-only glue) ----------------
@jax.jit
def periodic_set_transformer(features, packed):
    """features: [B, N, INITIAL_FEA_LEN + 1] = [weight | structural | atom-index]."""
    bb, nn, _ = features.shape
    w_col = features[:, :, 0]                                      # [B, N]
    feats = features[:, :, 1:]
    atom_idx = feats[:, :, -1]                                     # [B, N] (int-valued f32)
    strf = feats[:, :, :-1].reshape(bb * nn, STR_DIM)              # [B*N, 11]

    # single data operand: lane 0 = PDD weight, lane 1 = atom index, 8:19 = str
    data = jnp.zeros((bb * nn, ACT_W), jnp.float32)
    data = data.at[:, 0].set(w_col.reshape(-1))
    data = data.at[:, 1].set(atom_idx.reshape(-1))
    data = data.at[:, STR_ROW0:STR_ROW0 + STR_DIM].set(strf)

    vmem = pl.BlockSpec(memory_space=pltpu.MemorySpace.VMEM)
    out = pl.pallas_call(
        pst_kernel,
        out_shape=jax.ShapeDtypeStruct((bb, DH), jnp.float32),
        in_specs=[vmem, vmem, vmem],
        out_specs=vmem,
    )(data, packed["wslab"], packed["bslab"])
    return out[:, :1]                                              # real output is column 0


# ---------------- deterministic parameter init (PyTorch layout) ----------------
def init_params(key):
    keys = iter(jax.random.split(key, 40))

    def rnd(shape, scale=0.05):
        return jax.random.normal(next(keys), shape, jnp.float32) * scale

    p = {}
    # TODO(synk): AtomFeaturizer loads atom_init.json; replaced by a deterministic
    # random embedding table of the same shape [n_atom_types, 92].
    p["atom_table"] = rnd((N_ATOM_TYPES, COMP_DIM), 1.0)
    p["wc"] = rnd((EMBED_DIM, COMP_DIM)); p["bc"] = rnd((EMBED_DIM,))
    p["ws"] = rnd((EMBED_DIM, STR_DIM));  p["bs"] = rnd((EMBED_DIM,))
    p["ln_g"] = jnp.ones((EMBED_DIM,), jnp.float32)
    p["ln_b"] = jnp.zeros((EMBED_DIM,), jnp.float32)
    p["e_emb_w"] = rnd((N_ENCODERS, DH, EMBED_DIM))
    p["e_emb_b"] = rnd((N_ENCODERS, DH))
    for nm in ("q", "k", "v"):
        p[f"e_w{nm}"] = rnd((N_ENCODERS, DH, DH))
        p[f"e_b{nm}"] = rnd((N_ENCODERS, DH))
    p["e_ipq_w"] = rnd((N_ENCODERS, DH, DH)); p["e_ipq_b"] = rnd((N_ENCODERS, DH))
    p["e_ipk_w"] = rnd((N_ENCODERS, DH, DH)); p["e_ipk_b"] = rnd((N_ENCODERS, DH))
    p["e_ln_g"] = jnp.ones((N_ENCODERS, DH), jnp.float32)
    p["e_ln_b"] = jnp.zeros((N_ENCODERS, DH), jnp.float32)
    p["e_out_w"] = rnd((N_ENCODERS, EMBED_DIM, DH))
    p["e_out_b"] = rnd((N_ENCODERS, EMBED_DIM))
    p["w_out"] = rnd((1, EMBED_DIM)); p["b_out"] = rnd((1,))
    return p


if __name__ == "__main__":
    key = jax.random.PRNGKey(0)
    kp, kw, kf, ka = jax.random.split(key, 4)
    raw_params = init_params(kp)
    packed = pack_params(raw_params)

    # build input: [weight col | structural cols | atom-index col]
    w_col = jax.random.uniform(kw, (B, N, 1), jnp.float32, 0.1, 1.0)
    w_col = w_col / jnp.sum(w_col, axis=1, keepdims=True)
    str_cols = jax.random.normal(kf, (B, N, STR_DIM), jnp.float32)
    atom_col = jax.random.randint(ka, (B, N, 1), 0, N_ATOM_TYPES).astype(jnp.float32)
    features = jnp.concatenate([w_col, str_cols, atom_col], axis=-1)  # [B, N, 13]

    out = periodic_set_transformer(features, packed)
    out = jax.block_until_ready(out)
    assert out.shape == (B, 1), out.shape
    print("KERNEL_OK")
</pallas_src>

<mosaic_0001>
module attributes {stable_mosaic.version = 11 : i64} {
  func.func @pst_kernel(%arg0: memref<16x128xf32, #tpu.memory_space<vmem>>, %arg1: memref<1152x64xbf16, #tpu.memory_space<vmem>>, %arg2: memref<32x64xf32, #tpu.memory_space<vmem>>, %arg3: memref<2x64xf32, #tpu.memory_space<vmem>>) attributes {dimension_semantics = [], scalar_prefetch = 0 : i64, scratch_operands = 0 : i64, tpu.core_type = #tpu.core_type<tc>} {
    %c0 = arith.constant 0 : index
    %c0_0 = arith.constant 0 : index
    %0 = vector.load %arg2[%c0, %c0_0] : memref<32x64xf32, #tpu.memory_space<vmem>>, vector<32x64xf32>
    %1 = tpu.iota {dimensions = array<i32: 1>} : vector<1x64xi32>
    %c32_i32 = arith.constant 32 : i32
    %2 = vector.broadcast %c32_i32 : i32 to vector<1x64xi32>
    %3 = arith.cmpi slt, %1, %2 : vector<1x64xi32>
    %cst = arith.constant 1.000000e+00 : f32
    %cst_1 = arith.constant 0.000000e+00 : f32
    %4 = vector.broadcast %cst : f32 to vector<1x64xf32>
    %5 = vector.broadcast %cst_1 : f32 to vector<1x64xf32>
    %6 = arith.select %3, %4, %5 : vector<1x64xi1>, vector<1x64xf32>
    %c0_2 = arith.constant 0 : index
    %c0_3 = arith.constant 0 : index
    %7 = vector.load %arg0[%c0_2, %c0_3] : memref<16x128xf32, #tpu.memory_space<vmem>>, vector<16x128xf32>
    %8 = vector.extract_strided_slice %7 {offsets = [0, 0], sizes = [16, 1], strides = [1, 1]} : vector<16x128xf32> to vector<16x1xf32>
    %9 = vector.extract_strided_slice %7 {offsets = [0, 1], sizes = [16, 1], strides = [1, 1]} : vector<16x128xf32> to vector<16x1xf32>
    %10 = arith.fptosi %9 : vector<16x1xf32> to vector<16x1xi32>
    %c19_i32 = arith.constant 19 : i32
    %11 = vector.broadcast %c19_i32 : i32 to vector<16x1xi32>
    %12 = arith.addi %10, %11 : vector<16x1xi32>
    %13 = tpu.iota {dimensions = array<i32: 1>} : vector<16x128xi32>
    %14 = vector.broadcast %12 : vector<16x1xi32> to vector<16x128xi32>
    %15 = arith.cmpi eq, %13, %14 : vector<16x128xi32>
    %cst_4 = arith.constant 1.000000e+00 : f32
    %cst_5 = arith.constant 0.000000e+00 : f32
    %16 = vector.broadcast %cst_4 : f32 to vector<16x128xf32>
    %17 = vector.broadcast %cst_5 : f32 to vector<16x128xf32>
    %18 = arith.select %15, %16, %17 : vector<16x128xi1>, vector<16x128xf32>
    %19 = arith.addf %7, %18 : vector<16x128xf32>
    %20 = arith.truncf %19 : vector<16x128xf32> to vector<16x128xbf16>
    %c0_6 = arith.constant 0 : index
    %c0_7 = arith.constant 0 : index
    %21 = vector.load %arg1[%c0_6, %c0_7] : memref<1152x64xbf16, #tpu.memory_space<vmem>>, vector<128x64xbf16>
    %cst_8 = arith.constant dense<0.000000e+00> : vector<16x64xf32>
    %22 = tpu.matmul %20, %21, %cst_8 {dimension_numbers = #tpu.dot_dimension_numbers<[1], [0], [0], [1], [0, 0, 1, 1], [], []>} : vector<16x128xbf16>, vector<128x64xbf16>, vector<16x64xf32> -> vector<16x64xf32>
    %23 = vector.extract_strided_slice %0 {offsets = [0, 0], sizes = [1, 64], strides = [1, 1]} : vector<32x64xf32> to vector<1x64xf32>
    %24 = vector.broadcast %23 : vector<1x64xf32> to vector<16x64xf32>
    %25 = arith.addf %22, %24 : vector<16x64xf32>
    %cst_9 = arith.constant dense<0.000000e+00> : vector<16xf32>
    %26 = vector.multi_reduction <add>, %25, %cst_9 [1] : vector<16x64xf32> to vector<16xf32>
    %27 = vector.shape_cast %26 : vector<16xf32> to vector<16x1xf32>
    %cst_10 = arith.constant 3.125000e-02 : f32
    %28 = vector.broadcast %cst_10 : f32 to vector<16x1xf32>
    %29 = arith.mulf %27, %28 : vector<16x1xf32>
    %30 = vector.broadcast %29 : vector<16x1xf32> to vector<16x64xf32>
    %31 = arith.subf %25, %30 : vector<16x64xf32>
    %32 = arith.mulf %31, %31 : vector<16x64xf32>
    %33 = vector.broadcast %6 : vector<1x64xf32> to vector<16x64xf32>
    %34 = arith.mulf %32, %33 : vector<16x64xf32>
    %cst_11 = arith.constant dense<0.000000e+00> : vector<16xf32>
    %35 = vector.multi_reduction <add>, %34, %cst_11 [1] : vector<16x64xf32> to vector<16xf32>
    %36 = vector.shape_cast %35 : vector<16xf32> to vector<16x1xf32>
    %cst_12 = arith.constant 3.125000e-02 : f32
    %37 = vector.broadcast %cst_12 : f32 to vector<16x1xf32>
    %38 = arith.mulf %36, %37 : vector<16x1xf32>
    %cst_13 = arith.constant 9.99999974E-6 : f32
    %39 = vector.broadcast %cst_13 : f32 to vector<16x1xf32>
    %40 = arith.addf %38, %39 : vector<16x1xf32>
    %41 = math.rsqrt %40 : vector<16x1xf32>
    %42 = vector.broadcast %41 : vector<16x1xf32> to vector<16x64xf32>
    %43 = arith.mulf %31, %42 : vector<16x64xf32>
    %44 = vector.extract_strided_slice %0 {offsets = [1, 0], sizes = [1, 64], strides = [1, 1]} : vector<32x64xf32> to vector<1x64xf32>
    %45 = vector.broadcast %44 : vector<1x64xf32> to vector<16x64xf32>
    %46 = arith.mulf %43, %45 : vector<16x64xf32>
    %47 = vector.extract_strided_slice %0 {offsets = [2, 0], sizes = [1, 64], strides = [1, 1]} : vector<32x64xf32> to vector<1x64xf32>
    %48 = vector.broadcast %47 : vector<1x64xf32> to vector<16x64xf32>
    %49 = arith.addf %46, %48 : vector<16x64xf32>
    %50 = vector.shape_cast %8 : vector<16x1xf32> to vector<2x8x1xf32>
    %51 = arith.truncf %50 : vector<2x8x1xf32> to vector<2x8x1xbf16>
    %52 = arith.truncf %49 : vector<16x64xf32> to vector<16x64xbf16>
    %c128 = arith.constant 128 : index
    %c0_14 = arith.constant 0 : index
    %53 = vector.load %arg1[%c128, %c0_14] : memref<1152x64xbf16, #tpu.memory_space<vmem>>, vector<64x64xbf16>
    %cst_15 = arith.constant dense<0.000000e+00> : vector<16x64xf32>
    %54 = tpu.matmul %52, %53, %cst_15 {dimension_numbers = #tpu.dot_dimension_numbers<[1], [0], [0], [1], [0, 0, 1, 1], [], []>} : vector<16x64xbf16>, vector<64x64xbf16>, vector<16x64xf32> -> vector<16x64xf32>
    %55 = vector.extract_strided_slice %0 {offsets = [3, 0], sizes = [1, 64], strides = [1, 1]} : vector<32x64xf32> to vector<1x64xf32>
    %56 = vector.broadcast %55 : vector<1x64xf32> to vector<16x64xf32>
    %57 = arith.addf %54, %56 : vector<16x64xf32>
    %58 = arith.truncf %57 : vector<16x64xf32> to vector<16x64xbf16>
    %c192 = arith.constant 192 : index
    %c0_16 = arith.constant 0 : index
    %59 = vector.load %arg1[%c192, %c0_16] : memref<1152x64xbf16, #tpu.memory_space<vmem>>, vector<64x64xbf16>
    %cst_17 = arith.constant dense<0.000000e+00> : vector<16x64xf32>
    %60 = tpu.matmul %58, %59, %cst_17 {dimension_numbers = #tpu.dot_dimension_numbers<[1], [0], [0], [1], [0, 0, 1, 1], [], []>} : vector<16x64xbf16>, vector<64x64xbf16>, vector<16x64xf32> -> vector<16x64xf32>
    %61 = vector.extract_strided_slice %0 {offsets = [4, 0], sizes = [1, 64], strides = [1, 1]} : vector<32x64xf32> to vector<1x64xf32>
    %62 = vector.broadcast %61 : vector<1x64xf32> to vector<16x64xf32>
    %63 = arith.addf %60, %62 : vector<16x64xf32>
    %c256 = arith.constant 256 : index
    %c0_18 = arith.constant 0 : index
    %64 = vector.load %arg1[%c256, %c0_18] : memref<1152x64xbf16, #tpu.memory_space<vmem>>, vector<64x64xbf16>
    %cst_19 = arith.constant dense<0.000000e+00> : vector<16x64xf32>
    %65 = tpu.matmul %58, %64, %cst_19 {dimension_numbers = #tpu.dot_dimension_numbers<[1], [0], [0], [1], [0, 0, 1, 1], [], []>} : vector<16x64xbf16>, vector<64x64xbf16>, vector<16x64xf32> -> vector<16x64xf32>
    %66 = vector.extract_strided_slice %0 {offsets = [5, 0], sizes = [1, 64], strides = [1, 1]} : vector<32x64xf32> to vector<1x64xf32>
    %67 = vector.broadcast %66 : vector<1x64xf32> to vector<16x64xf32>
    %68 = arith.addf %65, %67 : vector<16x64xf32>
    %c320 = arith.constant 320 : index
    %c0_20 = arith.constant 0 : index
    %69 = vector.load %arg1[%c320, %c0_20] : memref<1152x64xbf16, #tpu.memory_space<vmem>>, vector<64x64xbf16>
    %cst_21 = arith.constant dense<0.000000e+00> : vector<16x64xf32>
    %70 = tpu.matmul %58, %69, %cst_21 {dimension_numbers = #tpu.dot_dimension_numbers<[1], [0], [0], [1], [0, 0, 1, 1], [], []>} : vector<16x64xbf16>, vector<64x64xbf16>, vector<16x64xf32> -> vector<16x64xf32>
    %71 = vector.extract_strided_slice %0 {offsets = [6, 0], sizes = [1, 64], strides = [1, 1]} : vector<32x64xf32> to vector<1x64xf32>
    %72 = vector.broadcast %71 : vector<1x64xf32> to vector<16x64xf32>
    %73 = arith.addf %70, %72 : vector<16x64xf32>
    %74 = vector.shape_cast %63 : vector<16x64xf32> to vector<2x8x64xf32>
    %75 = vector.shape_cast %68 : vector<16x64xf32> to vector<2x8x64xf32>
    %76 = tpu.transpose %75, [0, 2, 1] : vector<2x8x64xf32> -> vector<2x64x8xf32>
    %77 = vector.extract_strided_slice %74 {offsets = [0, 0, 0], sizes = [2, 8, 32], strides = [1, 1, 1]} : vector<2x8x64xf32> to vector<2x8x32xf32>
    %78 = arith.truncf %77 : vector<2x8x32xf32> to vector<2x8x32xbf16>
    %79 = vector.extract_strided_slice %76 {offsets = [0, 0, 0], sizes = [2, 32, 8], strides = [1, 1, 1]} : vector<2x64x8xf32> to vector<2x32x8xf32>
    %80 = arith.truncf %79 : vector<2x32x8xf32> to vector<2x32x8xbf16>
    "tpu.trace_start"() <{level = 10 : i32, message = "bid,bdj->bij"}> : () -> ()
    %cst_22 = arith.constant dense<0.000000e+00> : vector<2x8x8xf32>
    %81 = tpu.matmul %78, %80, %cst_22 {dimension_numbers = #tpu.dot_dimension_numbers<[2], [1], [1], [2], [0, 0, 0, 1, 1, 2], [0], [0]>} : vector<2x8x32xbf16>, vector<2x32x8xbf16>, vector<2x8x8xf32> -> vector<2x8x8xf32>
    "tpu.trace_stop"() : () -> ()
    %82 = vector.extract_strided_slice %74 {offsets = [0, 0, 32], sizes = [2, 8, 32], strides = [1, 1, 1]} : vector<2x8x64xf32> to vector<2x8x32xf32>
    %83 = arith.truncf %82 : vector<2x8x32xf32> to vector<2x8x32xbf16>
    %84 = vector.extract_strided_slice %76 {offsets = [0, 32, 0], sizes = [2, 32, 8], strides = [1, 1, 1]} : vector<2x64x8xf32> to vector<2x32x8xf32>
    %85 = arith.truncf %84 : vector<2x32x8xf32> to vector<2x32x8xbf16>
    "tpu.trace_start"() <{level = 10 : i32, message = "bid,bdj->bij"}> : () -> ()
    %cst_23 = arith.constant dense<0.000000e+00> : vector<2x8x8xf32>
    %86 = tpu.matmul %83, %85, %cst_23 {dimension_numbers = #tpu.dot_dimension_numbers<[2], [1], [1], [2], [0, 0, 0, 1, 1, 2], [0], [0]>} : vector<2x8x32xbf16>, vector<2x32x8xbf16>, vector<2x8x8xf32> -> vector<2x8x8xf32>
    "tpu.trace_stop"() : () -> ()
    %87 = tpu.concatenate %81, %86 in 0 : vector<2x8x8xf32>, vector<2x8x8xf32> -> vector<4x8x8xf32>
    %cst_24 = arith.constant 0.176776692 : f32
    %88 = vector.broadcast %cst_24 : f32 to vector<4x8x8xf32>
    %89 = arith.mulf %87, %88 : vector<4x8x8xf32>
    %cst_25 = arith.constant dense<0xFF800000> : vector<4x8xf32>
    %90 = vector.multi_reduction <maximumf>, %89, %cst_25 [2] : vector<4x8x8xf32> to vector<4x8xf32>
    %91 = vector.shape_cast %90 : vector<4x8xf32> to vector<4x8x1xf32>
    %92 = vector.broadcast %91 : vector<4x8x1xf32> to vector<4x8x8xf32>
    %93 = arith.subf %89, %92 : vector<4x8x8xf32>
    %94 = math.exp %93 : vector<4x8x8xf32>
    %cst_26 = arith.constant dense<0.000000e+00> : vector<4x8xf32>
    %95 = vector.multi_reduction <add>, %94, %cst_26 [2] : vector<4x8x8xf32> to vector<4x8xf32>
    %96 = vector.shape_cast %95 : vector<4x8xf32> to vector<4x8x1xf32>
    %97 = tpu.reciprocal %96 {approx = true} : vector<4x8x1xf32> -> vector<4x8x1xf32>
    %98 = vector.broadcast %97 : vector<4x8x1xf32> to vector<4x8x8xf32>
    %99 = arith.mulf %94, %98 : vector<4x8x8xf32>
    %100 = vector.extract_strided_slice %99 {offsets = [0, 0, 0], sizes = [2, 8, 8], strides = [1, 1, 1]} : vector<4x8x8xf32> to vector<2x8x8xf32>
    %101 = vector.extract_strided_slice %99 {offsets = [2, 0, 0], sizes = [2, 8, 8], strides = [1, 1, 1]} : vector<4x8x8xf32> to vector<2x8x8xf32>
    %102 = arith.addf %100, %101 : vector<2x8x8xf32>
    %103 = arith.truncf %102 : vector<2x8x8xf32> to vector<2x8x8xbf16>
    %104 = vector.broadcast %8 : vector<16x1xf32> to vector<16x64xf32>
    %105 = arith.mulf %73, %104 : vector<16x64xf32>
    %106 = vector.shape_cast %105 : vector<16x64xf32> to vector<2x8x64xf32>
    %107 = arith.truncf %106 : vector<2x8x64xf32> to vector<2x8x64xbf16>
    "tpu.trace_start"() <{level = 10 : i32, message = "bij,bjd->bid"}> : () -> ()
    %cst_27 = arith.constant dense<0.000000e+00> : vector<2x8x64xf32>
    %108 = tpu.matmul %103, %107, %cst_27 {dimension_numbers = #tpu.dot_dimension_numbers<[2], [1], [1], [2], [0, 0, 0, 1, 1, 2], [0], [0]>} : vector<2x8x8xbf16>, vector<2x8x64xbf16>, vector<2x8x64xf32> -> vector<2x8x64xf32>
    "tpu.trace_stop"() : () -> ()
    "tpu.trace_start"() <{level = 10 : i32, message = "bij,bjk->bik"}> : () -> ()
    %cst_28 = arith.constant dense<0.000000e+00> : vector<2x8x1xf32>
    %109 = tpu.matmul %103, %51, %cst_28 {dimension_numbers = #tpu.dot_dimension_numbers<[2], [1], [1], [2], [0, 0, 0, 1, 1, 2], [0], [0]>} : vector<2x8x8xbf16>, vector<2x8x1xbf16>, vector<2x8x1xf32> -> vector<2x8x1xf32>
    "tpu.trace_stop"() : () -> ()
    %110 = tpu.reciprocal %109 {approx = true} : vector<2x8x1xf32> -> vector<2x8x1xf32>
    %111 = vector.broadcast %110 : vector<2x8x1xf32> to vector<2x8x64xf32>
    %112 = arith.mulf %108, %111 : vector<2x8x64xf32>
    %113 = vector.shape_cast %112 : vector<2x8x64xf32> to vector<16x64xf32>
    %cst_29 = arith.constant 0.000000e+00 : f32
    %114 = vector.broadcast %cst_29 : f32 to vector<16x64xf32>
    %115 = arith.maximumf %113, %114 : vector<16x64xf32>
    %116 = vector.broadcast %cst_29 : f32 to vector<16x64xf32>
    %117 = arith.subf %113, %116 : vector<16x64xf32>
    %118 = arith.cmpf one, %117, %117 : vector<16x64xf32>
    %119 = vector.broadcast %cst_29 : f32 to vector<16x64xf32>
    %120 = arith.addf %113, %119 : vector<16x64xf32>
    %121 = math.absf %117 : vector<16x64xf32>
    %cst_30 = arith.constant 0.000000e+00 : f32
    %122 = vector.broadcast %cst_30 : f32 to vector<16x64xf32>
    %123 = arith.subf %122, %121 : vector<16x64xf32>
    %124 = math.exp %123 : vector<16x64xf32>
    %125 = math.log1p %124 : vector<16x64xf32>
    %126 = arith.addf %115, %125 : vector<16x64xf32>
    %127 = arith.select %118, %120, %126 : vector<16x64xi1>, vector<16x64xf32>
    %128 = arith.addf %57, %127 : vector<16x64xf32>
    %cst_31 = arith.constant dense<0.000000e+00> : vector<16xf32>
    %129 = vector.multi_reduction <add>, %128, %cst_31 [1] : vector<16x64xf32> to vector<16xf32>
    %130 = vector.shape_cast %129 : vector<16xf32> to vector<16x1xf32>
    %cst_32 = arith.constant 1.562500e-02 : f32
    %131 = vector.broadcast %cst_32 : f32 to vector<16x1xf32>
    %132 = arith.mulf %130, %131 : vector<16x1xf32>
    %133 = vector.broadcast %132 : vector<16x1xf32> to vector<16x64xf32>
    %134 = arith.subf %128, %133 : vector<16x64xf32>
    %135 = arith.mulf %134, %134 : vector<16x64xf32>
    %cst_33 = arith.constant dense<0.000000e+00> : vector<16xf32>
    %136 = vector.multi_reduction <add>, %135, %cst_33 [1] : vector<16x64xf32> to vector<16xf32>
    %137 = vector.shape_cast %136 : vector<16xf32> to vector<16x1xf32>
    %cst_34 = arith.constant 1.562500e-02 : f32
    %138 = vector.broadcast %cst_34 : f32 to vector<16x1xf32>
    %139 = arith.mulf %137, %138 : vector<16x1xf32>
    %cst_35 = arith.constant 9.99999974E-6 : f32
    %140 = vector.broadcast %cst_35 : f32 to vector<16x1xf32>
    %141 = arith.addf %139, %140 : vector<16x1xf32>
    %142 = math.rsqrt %141 : vector<16x1xf32>
    %143 = vector.broadcast %142 : vector<16x1xf32> to vector<16x64xf32>
    %144 = arith.mulf %134, %143 : vector<16x64xf32>
    %145 = vector.extract_strided_slice %0 {offsets = [7, 0], sizes = [1, 64], strides = [1, 1]} : vector<32x64xf32> to vector<1x64xf32>
    %146 = vector.broadcast %145 : vector<1x64xf32> to vector<16x64xf32>
    %147 = arith.mulf %144, %146 : vector<16x64xf32>
    %148 = vector.extract_strided_slice %0 {offsets = [8, 0], sizes = [1, 64], strides = [1, 1]} : vector<32x64xf32> to vector<1x64xf32>
    %149 = vector.broadcast %148 : vector<1x64xf32> to vector<16x64xf32>
    %150 = arith.addf %147, %149 : vector<16x64xf32>
    %151 = arith.truncf %150 : vector<16x64xf32> to vector<16x64xbf16>
    %c384 = arith.constant 384 : index
    %c0_36 = arith.constant 0 : index
    %152 = vector.load %arg1[%c384, %c0_36] : memref<1152x64xbf16, #tpu.memory_space<vmem>>, vector<64x64xbf16>
    %cst_37 = arith.constant dense<0.000000e+00> : vector<16x64xf32>
    %153 = tpu.matmul %151, %152, %cst_37 {dimension_numbers = #tpu.dot_dimension_numbers<[1], [0], [0], [1], [0, 0, 1, 1], [], []>} : vector<16x64xbf16>, vector<64x64xbf16>, vector<16x64xf32> -> vector<16x64xf32>
    %154 = vector.extract_strided_slice %0 {offsets = [9, 0], sizes = [1, 64], strides = [1, 1]} : vector<32x64xf32> to vector<1x64xf32>
    %155 = vector.broadcast %154 : vector<1x64xf32> to vector<16x64xf32>
    %156 = arith.addf %153, %155 : vector<16x64xf32>
    %157 = arith.truncf %156 : vector<16x64xf32> to vector<16x64xbf16>
    %c448 = arith.constant 448 : index
    %c0_38 = arith.constant 0 : index
    %158 = vector.load %arg1[%c448, %c0_38] : memref<1152x64xbf16, #tpu.memory_space<vmem>>, vector<64x64xbf16>
    %cst_39 = arith.constant dense<0.000000e+00> : vector<16x64xf32>
    %159 = tpu.matmul %157, %158, %cst_39 {dimension_numbers = #tpu.dot_dimension_numbers<[1], [0], [0], [1], [0, 0, 1, 1], [], []>} : vector<16x64xbf16>, vector<64x64xbf16>, vector<16x64xf32> -> vector<16x64xf32>
    %160 = vector.extract_strided_slice %0 {offsets = [10, 0], sizes = [1, 64], strides = [1, 1]} : vector<32x64xf32> to vector<1x64xf32>
    %161 = vector.broadcast %160 : vector<1x64xf32> to vector<16x64xf32>
    %162 = arith.addf %159, %161 : vector<16x64xf32>
    %163 = arith.truncf %162 : vector<16x64xf32> to vector<16x64xbf16>
    %c512 = arith.constant 512 : index
    %c0_40 = arith.constant 0 : index
    %164 = vector.load %arg1[%c512, %c0_40] : memref<1152x64xbf16, #tpu.memory_space<vmem>>, vector<64x64xbf16>
    %cst_41 = arith.constant dense<0.000000e+00> : vector<16x64xf32>
    %165 = tpu.matmul %163, %164, %cst_41 {dimension_numbers = #tpu.dot_dimension_numbers<[1], [0], [0], [1], [0, 0, 1, 1], [], []>} : vector<16x64xbf16>, vector<64x64xbf16>, vector<16x64xf32> -> vector<16x64xf32>
    %166 = vector.extract_strided_slice %0 {offsets = [11, 0], sizes = [1, 64], strides = [1, 1]} : vector<32x64xf32> to vector<1x64xf32>
    %167 = vector.broadcast %166 : vector<1x64xf32> to vector<16x64xf32>
    %168 = arith.addf %165, %167 : vector<16x64xf32>
    %c576 = arith.constant 576 : index
    %c0_42 = arith.constant 0 : index
    %169 = vector.load %arg1[%c576, %c0_42] : memref<1152x64xbf16, #tpu.memory_space<vmem>>, vector<64x64xbf16>
    %cst_43 = arith.constant dense<0.000000e+00> : vector<16x64xf32>
    %170 = tpu.matmul %163, %169, %cst_43 {dimension_numbers = #tpu.dot_dimension_numbers<[1], [0], [0], [1], [0, 0, 1, 1], [], []>} : vector<16x64xbf16>, vector<64x64xbf16>, vector<16x64xf32> -> vector<16x64xf32>
    %171 = vector.extract_strided_slice %0 {offsets = [12, 0], sizes = [1, 64], strides = [1, 1]} : vector<32x64xf32> to vector<1x64xf32>
    %172 = vector.broadcast %171 : vector<1x64xf32> to vector<16x64xf32>
    %173 = arith.addf %170, %172 : vector<16x64xf32>
    %c640 = arith.constant 640 : index
    %c0_44 = arith.constant 0 : index
    %174 = vector.load %arg1[%c640, %c0_44] : memref<1152x64xbf16, #tpu.memory_space<vmem>>, vector<64x64xbf16>
    %cst_45 = arith.constant dense<0.000000e+00> : vector<16x64xf32>
    %175 = tpu.matmul %163, %174, %cst_45 {dimension_numbers = #tpu.dot_dimension_numbers<[1], [0], [0], [1], [0, 0, 1, 1], [], []>} : vector<16x64xbf16>, vector<64x64xbf16>, vector<16x64xf32> -> vector<16x64xf32>
    %176 = vector.extract_strided_slice %0 {offsets = [13, 0], sizes = [1, 64], strides = [1, 1]} : vector<32x64xf32> to vector<1x64xf32>
    %177 = vector.broadcast %176 : vector<1x64xf32> to vector<16x64xf32>
    %178 = arith.addf %175, %177 : vector<16x64xf32>
    %179 = vector.shape_cast %168 : vector<16x64xf32> to vector<2x8x64xf32>
    %180 = vector.shape_cast %173 : vector<16x64xf32> to vector<2x8x64xf32>
    %181 = tpu.transpose %180, [0, 2, 1] : vector<2x8x64xf32> -> vector<2x64x8xf32>
    %182 = vector.extract_strided_slice %179 {offsets = [0, 0, 0], sizes = [2, 8, 32], strides = [1, 1, 1]} : vector<2x8x64xf32> to vector<2x8x32xf32>
    %183 = arith.truncf %182 : vector<2x8x32xf32> to vector<2x8x32xbf16>
    %184 = vector.extract_strided_slice %181 {offsets = [0, 0, 0], sizes = [2, 32, 8], strides = [1, 1, 1]} : vector<2x64x8xf32> to vector<2x32x8xf32>
    %185 = arith.truncf %184 : vector<2x32x8xf32> to vector<2x32x8xbf16>
    "tpu.trace_start"() <{level = 10 : i32, message = "bid,bdj->bij"}> : () -> ()
    %cst_46 = arith.constant dense<0.000000e+00> : vector<2x8x8xf32>
    %186 = tpu.matmul %183, %185, %cst_46 {dimension_numbers = #tpu.dot_dimension_numbers<[2], [1], [1], [2], [0, 0, 0, 1, 1, 2], [0], [0]>} : vector<2x8x32xbf16>, vector<2x32x8xbf16>, vector<2x8x8xf32> -> vector<2x8x8xf32>
    "tpu.trace_stop"() : () -> ()
    %187 = vector.extract_strided_slice %179 {offsets = [0, 0, 32], sizes = [2, 8, 32], strides = [1, 1, 1]} : vector<2x8x64xf32> to vector<2x8x32xf32>
    %188 = arith.truncf %187 : vector<2x8x32xf32> to vector<2x8x32xbf16>
    %189 = vector.extract_strided_slice %181 {offsets = [0, 32, 0], sizes = [2, 32, 8], strides = [1, 1, 1]} : vector<2x64x8xf32> to vector<2x32x8xf32>
    %190 = arith.truncf %189 : vector<2x32x8xf32> to vector<2x32x8xbf16>
    "tpu.trace_start"() <{level = 10 : i32, message = "bid,bdj->bij"}> : () -> ()
    %cst_47 = arith.constant dense<0.000000e+00> : vector<2x8x8xf32>
    %191 = tpu.matmul %188, %190, %cst_47 {dimension_numbers = #tpu.dot_dimension_numbers<[2], [1], [1], [2], [0, 0, 0, 1, 1, 2], [0], [0]>} : vector<2x8x32xbf16>, vector<2x32x8xbf16>, vector<2x8x8xf32> -> vector<2x8x8xf32>
    "tpu.trace_stop"() : () -> ()
    %192 = tpu.concatenate %186, %191 in 0 : vector<2x8x8xf32>, vector<2x8x8xf32> -> vector<4x8x8xf32>
    %cst_48 = arith.constant 0.176776692 : f32
    %193 = vector.broadcast %cst_48 : f32 to vector<4x8x8xf32>
    %194 = arith.mulf %192, %193 : vector<4x8x8xf32>
    %cst_49 = arith.constant dense<0xFF800000> : vector<4x8xf32>
    %195 = vector.multi_reduction <maximumf>, %194, %cst_49 [2] : vector<4x8x8xf32> to vector<4x8xf32>
    %196 = vector.shape_cast %195 : vector<4x8xf32> to vector<4x8x1xf32>
    %197 = vector.broadcast %196 : vector<4x8x1xf32> to vector<4x8x8xf32>
    %198 = arith.subf %194, %197 : vector<4x8x8xf32>
    %199 = math.exp %198 : vector<4x8x8xf32>
    %cst_50 = arith.constant dense<0.000000e+00> : vector<4x8xf32>
    %200 = vector.multi_reduction <add>, %199, %cst_50 [2] : vector<4x8x8xf32> to vector<4x8xf32>
    %201 = vector.shape_cast %200 : vector<4x8xf32> to vector<4x8x1xf32>
    %202 = tpu.reciprocal %201 {approx = true} : vector<4x8x1xf32> -> vector<4x8x1xf32>
    %203 = vector.broadcast %202 : vector<4x8x1xf32> to vector<4x8x8xf32>
    %204 = arith.mulf %199, %203 : vector<4x8x8xf32>
    %205 = vector.extract_strided_slice %204 {offsets = [0, 0, 0], sizes = [2, 8, 8], strides = [1, 1, 1]} : vector<4x8x8xf32> to vector<2x8x8xf32>
    %206 = vector.extract_strided_slice %204 {offsets = [2, 0, 0], sizes = [2, 8, 8], strides = [1, 1, 1]} : vector<4x8x8xf32> to vector<2x8x8xf32>
    %207 = arith.addf %205, %206 : vector<2x8x8xf32>
    %208 = arith.truncf %207 : vector<2x8x8xf32> to vector<2x8x8xbf16>
    %209 = vector.broadcast %8 : vector<16x1xf32> to vector<16x64xf32>
    %210 = arith.mulf %178, %209 : vector<16x64xf32>
    %211 = vector.shape_cast %210 : vector<16x64xf32> to vector<2x8x64xf32>
    %212 = arith.truncf %211 : vector<2x8x64xf32> to vector<2x8x64xbf16>
    "tpu.trace_start"() <{level = 10 : i32, message = "bij,bjd->bid"}> : () -> ()
    %cst_51 = arith.constant dense<0.000000e+00> : vector<2x8x64xf32>
    %213 = tpu.matmul %208, %212, %cst_51 {dimension_numbers = #tpu.dot_dimension_numbers<[2], [1], [1], [2], [0, 0, 0, 1, 1, 2], [0], [0]>} : vector<2x8x8xbf16>, vector<2x8x64xbf16>, vector<2x8x64xf32> -> vector<2x8x64xf32>
    "tpu.trace_stop"() : () -> ()
    "tpu.trace_start"() <{level = 10 : i32, message = "bij,bjk->bik"}> : () -> ()
    %cst_52 = arith.constant dense<0.000000e+00> : vector<2x8x1xf32>
    %214 = tpu.matmul %208, %51, %cst_52 {dimension_numbers = #tpu.dot_dimension_numbers<[2], [1], [1], [2], [0, 0, 0, 1, 1, 2], [0], [0]>} : vector<2x8x8xbf16>, vector<2x8x1xbf16>, vector<2x8x1xf32> -> vector<2x8x1xf32>
    "tpu.trace_stop"() : () -> ()
    %215 = tpu.reciprocal %214 {approx = true} : vector<2x8x1xf32> -> vector<2x8x1xf32>
    %216 = vector.broadcast %215 : vector<2x8x1xf32> to vector<2x8x64xf32>
    %217 = arith.mulf %213, %216 : vector<2x8x64xf32>
    %218 = vector.shape_cast %217 : vector<2x8x64xf32> to vector<16x64xf32>
    %cst_53 = arith.constant 0.000000e+00 : f32
    %219 = vector.broadcast %cst_53 : f32 to vector<16x64xf32>
    %220 = arith.maximumf %218, %219 : vector<16x64xf32>
    %221 = vector.broadcast %cst_53 : f32 to vector<16x64xf32>
    %222 = arith.subf %218, %221 : vector<16x64xf32>
    %223 = arith.cmpf one, %222, %222 : vector<16x64xf32>
    %224 = vector.broadcast %cst_53 : f32 to vector<16x64xf32>
    %225 = arith.addf %218, %224 : vector<16x64xf32>
    %226 = math.absf %222 : vector<16x64xf32>
    %cst_54 = arith.constant 0.000000e+00 : f32
    %227 = vector.broadcast %cst_54 : f32 to vector<16x64xf32>
    %228 = arith.subf %227, %226 : vector<16x64xf32>
    %229 = math.exp %228 : vector<16x64xf32>
    %230 = math.log1p %229 : vector<16x64xf32>
    %231 = arith.addf %220, %230 : vector<16x64xf32>
    %232 = arith.select %223, %225, %231 : vector<16x64xi1>, vector<16x64xf32>
    %233 = arith.addf %162, %232 : vector<16x64xf32>
    %cst_55 = arith.constant dense<0.000000e+00> : vector<16xf32>
    %234 = vector.multi_reduction <add>, %233, %cst_55 [1] : vector<16x64xf32> to vector<16xf32>
    %235 = vector.shape_cast %234 : vector<16xf32> to vector<16x1xf32>
    %cst_56 = arith.constant 1.562500e-02 : f32
    %236 = vector.broadcast %cst_56 : f32 to vector<16x1xf32>
    %237 = arith.mulf %235, %236 : vector<16x1xf32>
    %238 = vector.broadcast %237 : vector<16x1xf32> to vector<16x64xf32>
    %239 = arith.subf %233, %238 : vector<16x64xf32>
    %240 = arith.mulf %239, %239 : vector<16x64xf32>
    %cst_57 = arith.constant dense<0.000000e+00> : vector<16xf32>
    %241 = vector.multi_reduction <add>, %240, %cst_57 [1] : vector<16x64xf32> to vector<16xf32>
    %242 = vector.shape_cast %241 : vector<16xf32> to vector<16x1xf32>
    %cst_58 = arith.constant 1.562500e-02 : f32
    %243 = vector.broadcast %cst_58 : f32 to vector<16x1xf32>
    %244 = arith.mulf %242, %243 : vector<16x1xf32>
    %cst_59 = arith.constant 9.99999974E-6 : f32
    %245 = vector.broadcast %cst_59 : f32 to vector<16x1xf32>
    %246 = arith.addf %244, %245 : vector<16x1xf32>
    %247 = math.rsqrt %246 : vector<16x1xf32>
    %248 = vector.broadcast %247 : vector<16x1xf32> to vector<16x64xf32>
    %249 = arith.mulf %239, %248 : vector<16x64xf32>
    %250 = vector.extract_strided_slice %0 {offsets = [14, 0], sizes = [1, 64], strides = [1, 1]} : vector<32x64xf32> to vector<1x64xf32>
    %251 = vector.broadcast %250 : vector<1x64xf32> to vector<16x64xf32>
    %252 = arith.mulf %249, %251 : vector<16x64xf32>
    %253 = vector.extract_strided_slice %0 {offsets = [15, 0], sizes = [1, 64], strides = [1, 1]} : vector<32x64xf32> to vector<1x64xf32>
    %254 = vector.broadcast %253 : vector<1x64xf32> to vector<16x64xf32>
    %255 = arith.addf %252, %254 : vector<16x64xf32>
    %256 = arith.truncf %255 : vector<16x64xf32> to vector<16x64xbf16>
    %c704 = arith.constant 704 : index
    %c0_60 = arith.constant 0 : index
    %257 = vector.load %arg1[%c704, %c0_60] : memref<1152x64xbf16, #tpu.memory_space<vmem>>, vector<64x64xbf16>
    %cst_61 = arith.constant dense<0.000000e+00> : vector<16x64xf32>
    %258 = tpu.matmul %256, %257, %cst_61 {dimension_numbers = #tpu.dot_dimension_numbers<[1], [0], [0], [1], [0, 0, 1, 1], [], []>} : vector<16x64xbf16>, vector<64x64xbf16>, vector<16x64xf32> -> vector<16x64xf32>
    %259 = vector.extract_strided_slice %0 {offsets = [16, 0], sizes = [1, 64], strides = [1, 1]} : vector<32x64xf32> to vector<1x64xf32>
    %260 = vector.broadcast %259 : vector<1x64xf32> to vector<16x64xf32>
    %261 = arith.addf %258, %260 : vector<16x64xf32>
    %262 = arith.truncf %261 : vector<16x64xf32> to vector<16x64xbf16>
    %c768 = arith.constant 768 : index
    %c0_62 = arith.constant 0 : index
    %263 = vector.load %arg1[%c768, %c0_62] : memref<1152x64xbf16, #tpu.memory_space<vmem>>, vector<64x64xbf16>
    %cst_63 = arith.constant dense<0.000000e+00> : vector<16x64xf32>
    %264 = tpu.matmul %262, %263, %cst_63 {dimension_numbers = #tpu.dot_dimension_numbers<[1], [0], [0], [1], [0, 0, 1, 1], [], []>} : vector<16x64xbf16>, vector<64x64xbf16>, vector<16x64xf32> -> vector<16x64xf32>
    %265 = vector.extract_strided_slice %0 {offsets = [17, 0], sizes = [1, 64], strides = [1, 1]} : vector<32x64xf32> to vector<1x64xf32>
    %266 = vector.broadcast %265 : vector<1x64xf32> to vector<16x64xf32>
    %267 = arith.addf %264, %266 : vector<16x64xf32>
    %268 = arith.truncf %267 : vector<16x64xf32> to vector<16x64xbf16>
    %c832 = arith.constant 832 : index
    %c0_64 = arith.constant 0 : index
    %269 = vector.load %arg1[%c832, %c0_64] : memref<1152x64xbf16, #tpu.memory_space<vmem>>, vector<64x64xbf16>
    %cst_65 = arith.constant dense<0.000000e+00> : vector<16x64xf32>
    %270 = tpu.matmul %268, %269, %cst_65 {dimension_numbers = #tpu.dot_dimension_numbers<[1], [0], [0], [1], [0, 0, 1, 1], [], []>} : vector<16x64xbf16>, vector<64x64xbf16>, vector<16x64xf32> -> vector<16x64xf32>
    %271 = vector.extract_strided_slice %0 {offsets = [18, 0], sizes = [1, 64], strides = [1, 1]} : vector<32x64xf32> to vector<1x64xf32>
    %272 = vector.broadcast %271 : vector<1x64xf32> to vector<16x64xf32>
    %273 = arith.addf %270, %272 : vector<16x64xf32>
    %c896 = arith.constant 896 : index
    %c0_66 = arith.constant 0 : index
    %274 = vector.load %arg1[%c896, %c0_66] : memref<1152x64xbf16, #tpu.memory_space<vmem>>, vector<64x64xbf16>
    %cst_67 = arith.constant dense<0.000000e+00> : vector<16x64xf32>
    %275 = tpu.matmul %268, %274, %cst_67 {dimension_numbers = #tpu.dot_dimension_numbers<[1], [0], [0], [1], [0, 0, 1, 1], [], []>} : vector<16x64xbf16>, vector<64x64xbf16>, vector<16x64xf32> -> vector<16x64xf32>
    %276 = vector.extract_strided_slice %0 {offsets = [19, 0], sizes = [1, 64], strides = [1, 1]} : vector<32x64xf32> to vector<1x64xf32>
    %277 = vector.broadcast %276 : vector<1x64xf32> to vector<16x64xf32>
    %278 = arith.addf %275, %277 : vector<16x64xf32>
    %c960 = arith.constant 960 : index
    %c0_68 = arith.constant 0 : index
    %279 = vector.load %arg1[%c960, %c0_68] : memref<1152x64xbf16, #tpu.memory_space<vmem>>, vector<64x64xbf16>
    %cst_69 = arith.constant dense<0.000000e+00> : vector<16x64xf32>
    %280 = tpu.matmul %268, %279, %cst_69 {dimension_numbers = #tpu.dot_dimension_numbers<[1], [0], [0], [1], [0, 0, 1, 1], [], []>} : vector<16x64xbf16>, vector<64x64xbf16>, vector<16x64xf32> -> vector<16x64xf32>
    %281 = vector.extract_strided_slice %0 {offsets = [20, 0], sizes = [1, 64], strides = [1, 1]} : vector<32x64xf32> to vector<1x64xf32>
    %282 = vector.broadcast %281 : vector<1x64xf32> to vector<16x64xf32>
    %283 = arith.addf %280, %282 : vector<16x64xf32>
    %284 = vector.shape_cast %273 : vector<16x64xf32> to vector<2x8x64xf32>
    %285 = vector.shape_cast %278 : vector<16x64xf32> to vector<2x8x64xf32>
    %286 = tpu.transpose %285, [0, 2, 1] : vector<2x8x64xf32> -> vector<2x64x8xf32>
    %287 = vector.extract_strided_slice %284 {offsets = [0, 0, 0], sizes = [2, 8, 32], strides = [1, 1, 1]} : vector<2x8x64xf32> to vector<2x8x32xf32>
    %288 = arith.truncf %287 : vector<2x8x32xf32> to vector<2x8x32xbf16>
    %289 = vector.extract_strided_slice %286 {offsets = [0, 0, 0], sizes = [2, 32, 8], strides = [1, 1, 1]} : vector<2x64x8xf32> to vector<2x32x8xf32>
    %290 = arith.truncf %289 : vector<2x32x8xf32> to vector<2x32x8xbf16>
    "tpu.trace_start"() <{level = 10 : i32, message = "bid,bdj->bij"}> : () -> ()
    %cst_70 = arith.constant dense<0.000000e+00> : vector<2x8x8xf32>
    %291 = tpu.matmul %288, %290, %cst_70 {dimension_numbers = #tpu.dot_dimension_numbers<[2], [1], [1], [2], [0, 0, 0, 1, 1, 2], [0], [0]>} : vector<2x8x32xbf16>, vector<2x32x8xbf16>, vector<2x8x8xf32> -> vector<2x8x8xf32>
    "tpu.trace_stop"() : () -> ()
    %292 = vector.extract_strided_slice %284 {offsets = [0, 0, 32], sizes = [2, 8, 32], strides = [1, 1, 1]} : vector<2x8x64xf32> to vector<2x8x32xf32>
    %293 = arith.truncf %292 : vector<2x8x32xf32> to vector<2x8x32xbf16>
    %294 = vector.extract_strided_slice %286 {offsets = [0, 32, 0], sizes = [2, 32, 8], strides = [1, 1, 1]} : vector<2x64x8xf32> to vector<2x32x8xf32>
    %295 = arith.truncf %294 : vector<2x32x8xf32> to vector<2x32x8xbf16>
    "tpu.trace_start"() <{level = 10 : i32, message = "bid,bdj->bij"}> : () -> ()
    %cst_71 = arith.constant dense<0.000000e+00> : vector<2x8x8xf32>
    %296 = tpu.matmul %293, %295, %cst_71 {dimension_numbers = #tpu.dot_dimension_numbers<[2], [1], [1], [2], [0, 0, 0, 1, 1, 2], [0], [0]>} : vector<2x8x32xbf16>, vector<2x32x8xbf16>, vector<2x8x8xf32> -> vector<2x8x8xf32>
    "tpu.trace_stop"() : () -> ()
    %297 = tpu.concatenate %291, %296 in 0 : vector<2x8x8xf32>, vector<2x8x8xf32> -> vector<4x8x8xf32>
    %cst_72 = arith.constant 0.176776692 : f32
    %298 = vector.broadcast %cst_72 : f32 to vector<4x8x8xf32>
    %299 = arith.mulf %297, %298 : vector<4x8x8xf32>
    %cst_73 = arith.constant dense<0xFF800000> : vector<4x8xf32>
    %300 = vector.multi_reduction <maximumf>, %299, %cst_73 [2] : vector<4x8x8xf32> to vector<4x8xf32>
    %301 = vector.shape_cast %300 : vector<4x8xf32> to vector<4x8x1xf32>
    %302 = vector.broadcast %301 : vector<4x8x1xf32> to vector<4x8x8xf32>
    %303 = arith.subf %299, %302 : vector<4x8x8xf32>
    %304 = math.exp %303 : vector<4x8x8xf32>
    %cst_74 = arith.constant dense<0.000000e+00> : vector<4x8xf32>
    %305 = vector.multi_reduction <add>, %304, %cst_74 [2] : vector<4x8x8xf32> to vector<4x8xf32>
    %306 = vector.shape_cast %305 : vector<4x8xf32> to vector<4x8x1xf32>
    %307 = tpu.reciprocal %306 {approx = true} : vector<4x8x1xf32> -> vector<4x8x1xf32>
    %308 = vector.broadcast %307 : vector<4x8x1xf32> to vector<4x8x8xf32>
    %309 = arith.mulf %304, %308 : vector<4x8x8xf32>
    %310 = vector.extract_strided_slice %309 {offsets = [0, 0, 0], sizes = [2, 8, 8], strides = [1, 1, 1]} : vector<4x8x8xf32> to vector<2x8x8xf32>
    %311 = vector.extract_strided_slice %309 {offsets = [2, 0, 0], sizes = [2, 8, 8], strides = [1, 1, 1]} : vector<4x8x8xf32> to vector<2x8x8xf32>
    %312 = arith.addf %310, %311 : vector<2x8x8xf32>
    %313 = arith.truncf %312 : vector<2x8x8xf32> to vector<2x8x8xbf16>
    %314 = vector.broadcast %8 : vector<16x1xf32> to vector<16x64xf32>
    %315 = arith.mulf %283, %314 : vector<16x64xf32>
    %316 = vector.shape_cast %315 : vector<16x64xf32> to vector<2x8x64xf32>
    %317 = arith.truncf %316 : vector<2x8x64xf32> to vector<2x8x64xbf16>
    "tpu.trace_start"() <{level = 10 : i32, message = "bij,bjd->bid"}> : () -> ()
    %cst_75 = arith.constant dense<0.000000e+00> : vector<2x8x64xf32>
    %318 = tpu.matmul %313, %317, %cst_75 {dimension_numbers = #tpu.dot_dimension_numbers<[2], [1], [1], [2], [0, 0, 0, 1, 1, 2], [0], [0]>} : vector<2x8x8xbf16>, vector<2x8x64xbf16>, vector<2x8x64xf32> -> vector<2x8x64xf32>
    "tpu.trace_stop"() : () -> ()
    "tpu.trace_start"() <{level = 10 : i32, message = "bij,bjk->bik"}> : () -> ()
    %cst_76 = arith.constant dense<0.000000e+00> : vector<2x8x1xf32>
    %319 = tpu.matmul %313, %51, %cst_76 {dimension_numbers = #tpu.dot_dimension_numbers<[2], [1], [1], [2], [0, 0, 0, 1, 1, 2], [0], [0]>} : vector<2x8x8xbf16>, vector<2x8x1xbf16>, vector<2x8x1xf32> -> vector<2x8x1xf32>
    "tpu.trace_stop"() : () -> ()
    %320 = tpu.reciprocal %319 {approx = true} : vector<2x8x1xf32> -> vector<2x8x1xf32>
    %321 = vector.broadcast %320 : vector<2x8x1xf32> to vector<2x8x64xf32>
    %322 = arith.mulf %318, %321 : vector<2x8x64xf32>
    %323 = vector.shape_cast %322 : vector<2x8x64xf32> to vector<16x64xf32>
    %cst_77 = arith.constant 0.000000e+00 : f32
    %324 = vector.broadcast %cst_77 : f32 to vector<16x64xf32>
    %325 = arith.maximumf %323, %324 : vector<16x64xf32>
    %326 = vector.broadcast %cst_77 : f32 to vector<16x64xf32>
    %327 = arith.subf %323, %326 : vector<16x64xf32>
    %328 = arith.cmpf one, %327, %327 : vector<16x64xf32>
    %329 = vector.broadcast %cst_77 : f32 to vector<16x64xf32>
    %330 = arith.addf %323, %329 : vector<16x64xf32>
    %331 = math.absf %327 : vector<16x64xf32>
    %cst_78 = arith.constant 0.000000e+00 : f32
    %332 = vector.broadcast %cst_78 : f32 to vector<16x64xf32>
    %333 = arith.subf %332, %331 : vector<16x64xf32>
    %334 = math.exp %333 : vector<16x64xf32>
    %335 = math.log1p %334 : vector<16x64xf32>
    %336 = arith.addf %325, %335 : vector<16x64xf32>
    %337 = arith.select %328, %330, %336 : vector<16x64xi1>, vector<16x64xf32>
    %338 = arith.addf %267, %337 : vector<16x64xf32>
    %cst_79 = arith.constant dense<0.000000e+00> : vector<16xf32>
    %339 = vector.multi_reduction <add>, %338, %cst_79 [1] : vector<16x64xf32> to vector<16xf32>
    %340 = vector.shape_cast %339 : vector<16xf32> to vector<16x1xf32>
    %cst_80 = arith.constant 1.562500e-02 : f32
    %341 = vector.broadcast %cst_80 : f32 to vector<16x1xf32>
    %342 = arith.mulf %340, %341 : vector<16x1xf32>
    %343 = vector.broadcast %342 : vector<16x1xf32> to vector<16x64xf32>
    %344 = arith.subf %338, %343 : vector<16x64xf32>
    %345 = arith.mulf %344, %344 : vector<16x64xf32>
    %cst_81 = arith.constant dense<0.000000e+00> : vector<16xf32>
    %346 = vector.multi_reduction <add>, %345, %cst_81 [1] : vector<16x64xf32> to vector<16xf32>
    %347 = vector.shape_cast %346 : vector<16xf32> to vector<16x1xf32>
    %cst_82 = arith.constant 1.562500e-02 : f32
    %348 = vector.broadcast %cst_82 : f32 to vector<16x1xf32>
    %349 = arith.mulf %347, %348 : vector<16x1xf32>
    %cst_83 = arith.constant 9.99999974E-6 : f32
    %350 = vector.broadcast %cst_83 : f32 to vector<16x1xf32>
    %351 = arith.addf %349, %350 : vector<16x1xf32>
    %352 = math.rsqrt %351 : vector<16x1xf32>
    %353 = vector.broadcast %352 : vector<16x1xf32> to vector<16x64xf32>
    %354 = arith.mulf %344, %353 : vector<16x64xf32>
    %355 = vector.extract_strided_slice %0 {offsets = [21, 0], sizes = [1, 64], strides = [1, 1]} : vector<32x64xf32> to vector<1x64xf32>
    %356 = vector.broadcast %355 : vector<1x64xf32> to vector<16x64xf32>
    %357 = arith.mulf %354, %356 : vector<16x64xf32>
    %358 = vector.extract_strided_slice %0 {offsets = [22, 0], sizes = [1, 64], strides = [1, 1]} : vector<32x64xf32> to vector<1x64xf32>
    %359 = vector.broadcast %358 : vector<1x64xf32> to vector<16x64xf32>
    %360 = arith.addf %357, %359 : vector<16x64xf32>
    %361 = arith.truncf %360 : vector<16x64xf32> to vector<16x64xbf16>
    %c1024 = arith.constant 1024 : index
    %c0_84 = arith.constant 0 : index
    %362 = vector.load %arg1[%c1024, %c0_84] : memref<1152x64xbf16, #tpu.memory_space<vmem>>, vector<64x64xbf16>
    %cst_85 = arith.constant dense<0.000000e+00> : vector<16x64xf32>
    %363 = tpu.matmul %361, %362, %cst_85 {dimension_numbers = #tpu.dot_dimension_numbers<[1], [0], [0], [1], [0, 0, 1, 1], [], []>} : vector<16x64xbf16>, vector<64x64xbf16>, vector<16x64xf32> -> vector<16x64xf32>
    %364 = vector.extract_strided_slice %0 {offsets = [23, 0], sizes = [1, 64], strides = [1, 1]} : vector<32x64xf32> to vector<1x64xf32>
    %365 = vector.broadcast %364 : vector<1x64xf32> to vector<16x64xf32>
    %366 = arith.addf %363, %365 : vector<16x64xf32>
    %367 = arith.addf %366, %49 : vector<16x64xf32>
    %368 = vector.broadcast %8 : vector<16x1xf32> to vector<16x64xf32>
    %369 = arith.mulf %367, %368 : vector<16x64xf32>
    %370 = vector.shape_cast %369 : vector<16x64xf32> to vector<2x8x64xf32>
    %cst_86 = arith.constant dense<0.000000e+00> : vector<2x64xf32>
    %371 = vector.multi_reduction <add>, %370, %cst_86 [1] : vector<2x8x64xf32> to vector<2x64xf32>
    %cst_87 = arith.constant dense<0.000000e+00> : vector<2xf32>
    %372 = vector.multi_reduction <add>, %371, %cst_87 [1] : vector<2x64xf32> to vector<2xf32>
    %373 = vector.shape_cast %372 : vector<2xf32> to vector<2x1xf32>
    %cst_88 = arith.constant 3.125000e-02 : f32
    %374 = vector.broadcast %cst_88 : f32 to vector<2x1xf32>
    %375 = arith.mulf %373, %374 : vector<2x1xf32>
    %376 = vector.broadcast %375 : vector<2x1xf32> to vector<2x64xf32>
    %377 = arith.subf %371, %376 : vector<2x64xf32>
    %378 = arith.mulf %377, %377 : vector<2x64xf32>
    %379 = vector.broadcast %6 : vector<1x64xf32> to vector<2x64xf32>
    %380 = arith.mulf %378, %379 : vector<2x64xf32>
    %cst_89 = arith.constant dense<0.000000e+00> : vector<2xf32>
    %381 = vector.multi_reduction <add>, %380, %cst_89 [1] : vector<2x64xf32> to vector<2xf32>
    %382 = vector.shape_cast %381 : vector<2xf32> to vector<2x1xf32>
    %cst_90 = arith.constant 3.125000e-02 : f32
    %383 = vector.broadcast %cst_90 : f32 to vector<2x1xf32>
    %384 = arith.mulf %382, %383 : vector<2x1xf32>
    %cst_91 = arith.constant 9.99999974E-6 : f32
    %385 = vector.broadcast %cst_91 : f32 to vector<2x1xf32>
    %386 = arith.addf %384, %385 : vector<2x1xf32>
    %387 = math.rsqrt %386 : vector<2x1xf32>
    %388 = vector.broadcast %387 : vector<2x1xf32> to vector<2x64xf32>
    %389 = arith.mulf %377, %388 : vector<2x64xf32>
    %390 = vector.extract_strided_slice %0 {offsets = [1, 0], sizes = [1, 64], strides = [1, 1]} : vector<32x64xf32> to vector<1x64xf32>
    %391 = vector.broadcast %390 : vector<1x64xf32> to vector<2x64xf32>
    %392 = arith.mulf %389, %391 : vector<2x64xf32>
    %393 = vector.extract_strided_slice %0 {offsets = [2, 0], sizes = [1, 64], strides = [1, 1]} : vector<32x64xf32> to vector<1x64xf32>
    %394 = vector.broadcast %393 : vector<1x64xf32> to vector<2x64xf32>
    %395 = arith.addf %392, %394 : vector<2x64xf32>
    %396 = arith.truncf %395 : vector<2x64xf32> to vector<2x64xbf16>
    %c1088 = arith.constant 1088 : index
    %c0_92 = arith.constant 0 : index
    %397 = vector.load %arg1[%c1088, %c0_92] : memref<1152x64xbf16, #tpu.memory_space<vmem>>, vector<64x64xbf16>
    %cst_93 = arith.constant dense<0.000000e+00> : vector<2x64xf32>
    %398 = tpu.matmul %396, %397, %cst_93 {dimension_numbers = #tpu.dot_dimension_numbers<[1], [0], [0], [1], [0, 0, 1, 1], [], []>} : vector<2x64xbf16>, vector<64x64xbf16>, vector<2x64xf32> -> vector<2x64xf32>
    %399 = vector.extract_strided_slice %0 {offsets = [24, 0], sizes = [1, 64], strides = [1, 1]} : vector<32x64xf32> to vector<1x64xf32>
    %400 = vector.broadcast %399 : vector<1x64xf32> to vector<2x64xf32>
    %401 = arith.addf %398, %400 : vector<2x64xf32>
    %c0_94 = arith.constant 0 : index
    %c0_95 = arith.constant 0 : index
    %402 = vector.load %arg3[%c0_94, %c0_95] : memref<2x64xf32, #tpu.memory_space<vmem>>, vector<2x64xf32>
    tpu.vector_store %arg3[%c0_94, %c0_95], %401 {strides = array<i32>} : memref<2x64xf32, #tpu.memory_space<vmem>>, vector<2x64xf32>,
    return
  }
}

</mosaic_0001>

<llo_original>
// kernel: periodic_set_transformer.1
$region0: #{periodic_set_transformer.1}
  #allocation0 [shape = 'u32[]', space=smem, size = 0x4, offset = 0x4, fixed_abs, tag = 'smem constant byte address 0x4 - core index']
  #allocation1 [shape = 'u32[144,128]{1,0:T(1,128)}', space=vmem, size = 0x12000, scoped, tag = 'internal scratch']
  %s0 = inlined_call_operand.vmem [shape: f32[16,128], index: 0, kind: input, shape index: {}]
  %s1 = inlined_call_operand.vmem [shape: bf16[1152,64], index: 1, kind: input, shape index: {}]
  %s2 = inlined_call_operand.vmem [shape: f32[32,64], index: 2, kind: input, shape index: {}]
  %s3 = inlined_call_operand.vmem [shape: f32[2,64], index: 3, kind: output, shape index: {}]
  %s4 = sld [smem:[#allocation0]]
  $region22: #{periodic_set_transformer.1} parent=0
    _
  %s6 = ssub.s32 1, %s4
  %s7 = scalar_select 0, %s6, %s4
  // Predicated region
  $region2: #{periodic_set_transformer.1} parent=0 // pred_check
    _
  $region3: #{periodic_set_transformer.1} parent=0 // pred_check_branch
    %9 = sbr.rel (0) target = $region5
  $region4: #{periodic_set_transformer.1} parent=0 // pred_region
    _
  $region5: #{periodic_set_transformer.1} parent=0 // pred_fallthru
    _
  // Predicated region
  $region6: #{periodic_set_transformer.1} parent=0 // pred_check
    _
  $region7: #{periodic_set_transformer.1} parent=0 // pred_check_branch
    %11 = sbr.rel (0) target = $region9
  $region8: #{periodic_set_transformer.1} parent=0 // pred_region
    _
  $region9: #{periodic_set_transformer.1} parent=0 // pred_fallthru
    _
  // Predicated region
  $region10: #{periodic_set_transformer.1} parent=0 // pred_check
    _
  $region11: #{periodic_set_transformer.1} parent=0 // pred_check_branch
    %13 = sbr.rel (0) target = $region13
  $region12: #{periodic_set_transformer.1} parent=0 // pred_region
    _
  $region13: #{periodic_set_transformer.1} parent=0 // pred_fallthru
    _
  %v15 = vld [vmem:[%s2] sm:$0xff]
  %v16 = vld [vmem:[%s2 + $0x8] sm:$0xff]
  %v17 = vld [vmem:[%s2 + $0x10] sm:$0xff]
  %v18 = vld [vmem:[%s2 + $0x18] sm:$0xff]
  %v19 = vlaneseq
  %v20 = vand.u32 %v19, 127
  %vm21 = vcmp.lt.s32.totalorder %v20, 32
  %v22 = vsel %vm21, 1.0, 0.0
  %v23 = vld [vmem:[%s0] sm:$0xff]
  %v24 = vld [vmem:[%s0 + $0x8] sm:$0xff]
  %v25 = vcvt.f32.s32.to.zero.pseudo %v23
  %v26 = vcvt.f32.s32.to.zero.pseudo %v24
  %v27 = vadd.s32 %v25, 19
  %v28 = vadd.s32 %v26, 19
  %29 = vset.pattern.permute.xlu0 1
  %30 = vperm.xlu0 %29, %v27
  %v31 = vpop.permute.xlu0 %30
  %32 = vset.pattern.permute.xlu0 1
  %33 = vperm.xlu0 %32, %v28
  %v34 = vpop.permute.xlu0 %33
  %vm35 = vcmp.eq.s32.totalorder %v20, %v31
  %vm36 = vcmp.eq.s32.totalorder %v20, %v34
  %v37 = vsel %vm35, 1.0, 0.0
  %v38 = vsel %vm36, 1.0, 0.0
  %v39 = vadd.f32 %v23, %v37
  %v40 = vadd.f32 %v24, %v38
  %v41 = vpack.c.bf16 %v40, %v39
  %v42 = vld [vmem:[%s1] sm:$0xf]
  %v43 = vld [vmem:[%s1 + $0x4] sm:$0xf]
  %v44 = vld [vmem:[%s1 + $0x8] sm:$0xf]
  %v45 = vld [vmem:[%s1 + $0xc] sm:$0xf]
  %v46 = vld [vmem:[%s1 + $0x10] sm:$0xf]
  %v47 = vld [vmem:[%s1 + $0x14] sm:$0xf]
  %v48 = vld [vmem:[%s1 + $0x18] sm:$0xf]
  %v49 = vld [vmem:[%s1 + $0x1c] sm:$0xf]
  %v50 = vld [vmem:[%s1 + $0x20] sm:$0xf]
  %v51 = vld [vmem:[%s1 + $0x24] sm:$0xf]
  %v52 = vld [vmem:[%s1 + $0x28] sm:$0xf]
  %v53 = vld [vmem:[%s1 + $0x2c] sm:$0xf]
  %v54 = vld [vmem:[%s1 + $0x30] sm:$0xf]
  %v55 = vld [vmem:[%s1 + $0x34] sm:$0xf]
  %v56 = vld [vmem:[%s1 + $0x38] sm:$0xf]
  %v57 = vld [vmem:[%s1 + $0x3c] sm:$0xf]
  %v58 = vlaneseq
  %v59 = vshrl.u32 %v58, 7
  %v60 = vsub.s32 0, %v59
  %v61 = vrot.slane %v15, %v60
  %v78 = vunpack.c.l.b16 %v42
  %v79 = vunpack.c.l.b16 %v43
  %v80 = vunpack.c.l.b16 %v44
  %v81 = vunpack.c.l.b16 %v45
  %v82 = vunpack.c.l.b16 %v46
  %v83 = vunpack.c.l.b16 %v47
  %v84 = vunpack.c.l.b16 %v48
  %v85 = vunpack.c.l.b16 %v49
  %v86 = vunpack.c.l.b16 %v50
  %v87 = vunpack.c.l.b16 %v51
  %v88 = vunpack.c.l.b16 %v52
  %v89 = vunpack.c.l.b16 %v53
  %v90 = vunpack.c.l.b16 %v54
  %v91 = vunpack.c.l.b16 %v55
  %v92 = vunpack.c.l.b16 %v56
  %v93 = vunpack.c.l.b16 %v57
  %v94 = vpack.c.b16 %v79, %v78
  %v95 = vpack.c.b16 %v81, %v80
  %v96 = vpack.c.b16 %v83, %v82
  %v97 = vpack.c.b16 %v85, %v84
  %v98 = vpack.c.b16 %v87, %v86
  %v99 = vpack.c.b16 %v89, %v88
  %v100 = vpack.c.b16 %v91, %v90
  %v101 = vpack.c.b16 %v93, %v92
  %110 = vmatprep.subr.bf16.mxu0 0
  %111 = vmatpush1.bf16.msra.mxu0 %v94
  %112 = vmatprep.subr.bf16.mxu0 0
  %113 = vmatpush1.bf16.msra.mxu0 %v95
  %114 = vmatprep.subr.bf16.mxu0 0
  %115 = vmatpush1.bf16.msra.mxu0 %v96
  %116 = vmatprep.subr.bf16.mxu0 0
  %117 = vmatpush1.bf16.msra.mxu0 %v97
  %118 = vmatprep.subr.bf16.mxu0 0
  %119 = vmatpush1.bf16.msra.mxu0 %v98
  %120 = vmatprep.subr.bf16.mxu0 0
  %121 = vmatpush1.bf16.msra.mxu0 %v99
  %122 = vmatprep.subr.bf16.mxu0 0
  %123 = vmatpush1.bf16.msra.mxu0 %v100
  %124 = vmatprep.subr.bf16.mxu0 0
  %125 = vmatpush1.bf16.msra.mxu0 %v101
  %126 = vmatprep.subr.bf16.mxu0 0
  %127 = vmatpush1.bf16.msra.mxu0 0
  %128 = vmatprep.subr.bf16.mxu0 0
  %129 = vmatpush1.bf16.msra.mxu0 0
  %130 = vmatprep.subr.bf16.mxu0 0
  %131 = vmatpush1.bf16.msra.mxu0 0
  %132 = vmatprep.subr.bf16.mxu0 0
  %133 = vmatpush1.bf16.msra.mxu0 0
  %134 = vmatprep.subr.bf16.mxu0 0
  %135 = vmatpush1.bf16.msra.mxu0 0
  %136 = vmatprep.subr.bf16.mxu0 0
  %137 = vmatpush1.bf16.msra.mxu0 0
  %138 = vmatprep.subr.bf16.mxu0 0
  %139 = vmatpush1.bf16.msra.mxu0 0
  %140 = vmatprep.subr.bf16.mxu0 0
  %141 = vmatpush1.bf16.msra.mxu0 0
  %142 = vmatprep.mubr.bf16.mxu0 0
  %143 = vmatmul.mubr.bf16.gmra.mrb[0].mxu0 %v41
  %v144 = vpop.f32.mrb[0].mxu0
  %v145 = vadd.f32 %v61, %v144
  %v146 = vpop.f32.mrb[0].mxu0
  %v147 = vpop.f32.mrb[0].mxu0
  %v148 = vadd.f32 %v61, %v147
  %v149 = vpop.f32.mrb[0].mxu0
  %150 = vdwg.mxu0
  %vm151 = vcmask 523264
  %v152 = vsel %vm151, %v145, 0.0
  %153 = vadd.xlane.f32.xlu0 %v152
  %v154 = vpop.xlane.xlu0 %153
  %v155 = vsel %vm151, %v148, 0.0
  %156 = vadd.xlane.f32.xlu0 %v155
  %v157 = vpop.xlane.xlu0 %156
  %v158 = vmul.f32 %v154, 0.03125
  %v159 = vmul.f32 %v157, 0.03125
  %v160 = vsub.f32 %v145, %v158
  %v161 = vsub.f32 %v148, %v159
  %v162 = vmul.f32 %v160, %v160
  %v163 = vmul.f32 %v161, %v161
  %v164 = vmul.f32 %v162, %v22
  %v165 = vmul.f32 %v163, %v22
  %v166 = vsel %vm151, %v164, 0.0
  %167 = vadd.xlane.f32.xlu0 %v166
  %v168 = vpop.xlane.xlu0 %167
  %v169 = vsel %vm151, %v165, 0.0
  %170 = vadd.xlane.f32.xlu0 %v169
  %v171 = vpop.xlane.xlu0 %170
  %v172 = vmul.f32 %v168, 0.03125
  %v173 = vmul.f32 %v171, 0.03125
  %v174 = vadd.f32 %v172, 1e-05
  %v175 = vadd.f32 %v173, 1e-05
  %v176 = vrsqrt.pop %v174
  %v177 = vrsqrt.pop %v175
  %v178 = vmul.f32 %v160, %v176
  %v179 = vmul.f32 %v161, %v177
  %v180 = vlaneseq
  %v181 = vshrl.u32 %v180, 7
  %v182 = vsub.s32 1, %v181
  %v183 = vrot.slane %v15, %v182
  %v184 = vmul.f32 %v178, %v183
  %v185 = vmul.f32 %v179, %v183
  %v186 = vlaneseq
  %v187 = vshrl.u32 %v186, 7
  %v188 = vsub.s32 2, %v187
  %v189 = vrot.slane %v15, %v188
  %v190 = vadd.f32 %v184, %v189
  %v191 = vadd.f32 %v185, %v189
  %v192 = vpack.c.bf16 %v23, %v23
  %v193 = vpack.c.bf16 %v24, %v24
  %v194 = vpack.c.bf16 %v191, %v190
  %v195 = vld [vmem:[%s1 + $0x40] sm:$0xf]
  %v196 = vld [vmem:[%s1 + $0x44] sm:$0xf]
  %v197 = vld [vmem:[%s1 + $0x48] sm:$0xf]
  %v198 = vld [vmem:[%s1 + $0x4c] sm:$0xf]
  %v199 = vld [vmem:[%s1 + $0x50] sm:$0xf]
  %v200 = vld [vmem:[%s1 + $0x54] sm:$0xf]
  %v201 = vld [vmem:[%s1 + $0x58] sm:$0xf]
  %v202 = vld [vmem:[%s1 + $0x5c] sm:$0xf]
  %v203 = vlaneseq
  %v204 = vshrl.u32 %v203, 7
  %v205 = vsub.s32 3, %v204
  %v206 = vrot.slane %v15, %v205
  %v215 = vunpack.c.l.b16 %v195
  %v216 = vunpack.c.l.b16 %v196
  %v217 = vunpack.c.l.b16 %v197
  %v218 = vunpack.c.l.b16 %v198
  %v219 = vunpack.c.l.b16 %v199
  %v220 = vunpack.c.l.b16 %v200
  %v221 = vunpack.c.l.b16 %v201
  %v222 = vunpack.c.l.b16 %v202
  %v223 = vpack.c.b16 %v216, %v215
  %v224 = vpack.c.b16 %v218, %v217
  %v225 = vpack.c.b16 %v220, %v219
  %v226 = vpack.c.b16 %v222, %v221
  %v232 = vsel %vm151, %v194, 0
  %234 = vmatprep.subr.bf16.mxu0 0
  %235 = vmatpush1.bf16.msra.mxu0 %v223
  %236 = vmatprep.subr.bf16.mxu0 0
  %237 = vmatpush1.bf16.msra.mxu0 %v224
  %238 = vmatprep.subr.bf16.mxu0 0
  %239 = vmatpush1.bf16.msra.mxu0 %v225
  %240 = vmatprep.subr.bf16.mxu0 0
  %241 = vmatpush1.bf16.msra.mxu0 %v226
  %242 = vmatprep.subr.bf16.mxu0 0
  %243 = vmatpush1.bf16.msra.mxu0 0
  %244 = vmatprep.subr.bf16.mxu0 0
  %245 = vmatpush1.bf16.msra.mxu0 0
  %246 = vmatprep.subr.bf16.mxu0 0
  %247 = vmatpush1.bf16.msra.mxu0 0
  %248 = vmatprep.subr.bf16.mxu0 0
  %249 = vmatpush1.bf16.msra.mxu0 0
  %250 = vmatprep.subr.bf16.mxu0 0
  %251 = vmatpush1.bf16.msra.mxu0 0
  %252 = vmatprep.subr.bf16.mxu0 0
  %253 = vmatpush1.bf16.msra.mxu0 0
  %254 = vmatprep.subr.bf16.mxu0 0
  %255 = vmatpush1.bf16.msra.mxu0 0
  %256 = vmatprep.subr.bf16.mxu0 0
  %257 = vmatpush1.bf16.msra.mxu0 0
  %258 = vmatprep.subr.bf16.mxu0 0
  %259 = vmatpush1.bf16.msra.mxu0 0
  %260 = vmatprep.subr.bf16.mxu0 0
  %261 = vmatpush1.bf16.msra.mxu0 0
  %262 = vmatprep.subr.bf16.mxu0 0
  %263 = vmatpush1.bf16.msra.mxu0 0
  %264 = vmatprep.subr.bf16.mxu0 0
  %265 = vmatpush1.bf16.msra.mxu0 0
  %266 = vmatprep.mubr.bf16.mxu0 0
  %267 = vmatmul.mubr.bf16.gmra.mrb[0].mxu0 %v232
  %v268 = vpop.f32.mrb[0].mxu0
  %v269 = vadd.f32 %v206, %v268
  %v270 = vpop.f32.mrb[0].mxu0
  %v271 = vpop.f32.mrb[0].mxu0
  %v272 = vadd.f32 %v206, %v271
  %v273 = vpop.f32.mrb[0].mxu0
  %274 = vdwg.mxu0
  %v275 = vpack.c.bf16 %v272, %v269
  %v276 = vld [vmem:[%s1 + $0x60] sm:$0xf]
  %v277 = vld [vmem:[%s1 + $0x64] sm:$0xf]
  %v278 = vld [vmem:[%s1 + $0x68] sm:$0xf]
  %v279 = vld [vmem:[%s1 + $0x6c] sm:$0xf]
  %v280 = vld [vmem:[%s1 + $0x70] sm:$0xf]
  %v281 = vld [vmem:[%s1 + $0x74] sm:$0xf]
  %v282 = vld [vmem:[%s1 + $0x78] sm:$0xf]
  %v283 = vld [vmem:[%s1 + $0x7c] sm:$0xf]
  %v284 = vlaneseq
  %v285 = vshrl.u32 %v284, 7
  %v286 = vsub.s32 4, %v285
  %v287 = vrot.slane %v15, %v286
  %v296 = vunpack.c.l.b16 %v276
  %v297 = vunpack.c.l.b16 %v277
  %v298 = vunpack.c.l.b16 %v278
  %v299 = vunpack.c.l.b16 %v279
  %v300 = vunpack.c.l.b16 %v280
  %v301 = vunpack.c.l.b16 %v281
  %v302 = vunpack.c.l.b16 %v282
  %v303 = vunpack.c.l.b16 %v283
  %v304 = vpack.c.b16 %v297, %v296
  %v305 = vpack.c.b16 %v299, %v298
  %v306 = vpack.c.b16 %v301, %v300
  %v307 = vpack.c.b16 %v303, %v302
  %v313 = vsel %vm151, %v275, 0
  %315 = vmatprep.subr.bf16.mxu0 0
  %316 = vmatpush1.bf16.msra.mxu0 %v304
  %317 = vmatprep.subr.bf16.mxu0 0
  %318 = vmatpush1.bf16.msra.mxu0 %v305
  %319 = vmatprep.subr.bf16.mxu0 0
  %320 = vmatpush1.bf16.msra.mxu0 %v306
  %321 = vmatprep.subr.bf16.mxu0 0
  %322 = vmatpush1.bf16.msra.mxu0 %v307
  %323 = vmatprep.subr.bf16.mxu0 0
  %324 = vmatpush1.bf16.msra.mxu0 0
  %325 = vmatprep.subr.bf16.mxu0 0
  %326 = vmatpush1.bf16.msra.mxu0 0
  %327 = vmatprep.subr.bf16.mxu0 0
  %328 = vmatpush1.bf16.msra.mxu0 0
  %329 = vmatprep.subr.bf16.mxu0 0
  %330 = vmatpush1.bf16.msra.mxu0 0
  %331 = vmatprep.subr.bf16.mxu0 0
  %332 = vmatpush1.bf16.msra.mxu0 0
  %333 = vmatprep.subr.bf16.mxu0 0
  %334 = vmatpush1.bf16.msra.mxu0 0
  %335 = vmatprep.subr.bf16.mxu0 0
  %336 = vmatpush1.bf16.msra.mxu0 0
  %337 = vmatprep.subr.bf16.mxu0 0
  %338 = vmatpush1.bf16.msra.mxu0 0
  %339 = vmatprep.subr.bf16.mxu0 0
  %340 = vmatpush1.bf16.msra.mxu0 0
  %341 = vmatprep.subr.bf16.mxu0 0
  %342 = vmatpush1.bf16.msra.mxu0 0
  %343 = vmatprep.subr.bf16.mxu0 0
  %344 = vmatpush1.bf16.msra.mxu0 0
  %345 = vmatprep.subr.bf16.mxu0 0
  %346 = vmatpush1.bf16.msra.mxu0 0
  %347 = vmatprep.mubr.bf16.mxu0 0
  %348 = vmatmul.mubr.bf16.gmra.mrb[0].mxu0 %v313
  %v349 = vpop.f32.mrb[0].mxu0
  %v350 = vadd.f32 %v287, %v349
  %v351 = vpop.f32.mrb[0].mxu0
  %v352 = vpop.f32.mrb[0].mxu0
  %v353 = vadd.f32 %v287, %v352
  %v354 = vpop.f32.mrb[0].mxu0
  %355 = vdwg.mxu0
  %v356 = vld [vmem:[%s1 + $0x80] sm:$0xf]
  %v357 = vld [vmem:[%s1 + $0x84] sm:$0xf]
  %v358 = vld [vmem:[%s1 + $0x88] sm:$0xf]
  %v359 = vld [vmem:[%s1 + $0x8c] sm:$0xf]
  %v360 = vld [vmem:[%s1 + $0x90] sm:$0xf]
  %v361 = vld [vmem:[%s1 + $0x94] sm:$0xf]
  %v362 = vld [vmem:[%s1 + $0x98] sm:$0xf]
  %v363 = vld [vmem:[%s1 + $0x9c] sm:$0xf]
  %v364 = vlaneseq
  %v365 = vshrl.u32 %v364, 7
  %v366 = vsub.s32 5, %v365
  %v367 = vrot.slane %v15, %v366
  %v376 = vunpack.c.l.b16 %v356
  %v377 = vunpack.c.l.b16 %v357
  %v378 = vunpack.c.l.b16 %v358
  %v379 = vunpack.c.l.b16 %v359
  %v380 = vunpack.c.l.b16 %v360
  %v381 = vunpack.c.l.b16 %v361
  %v382 = vunpack.c.l.b16 %v362
  %v383 = vunpack.c.l.b16 %v363
  %v384 = vpack.c.b16 %v377, %v376
  %v385 = vpack.c.b16 %v379, %v378
  %v386 = vpack.c.b16 %v381, %v380
  %v387 = vpack.c.b16 %v383, %v382
  %392 = vmatprep.subr.bf16.mxu0 0
  %393 = vmatpush1.bf16.msra.mxu0 %v384
  %394 = vmatprep.subr.bf16.mxu0 0
  %395 = vmatpush1.bf16.msra.mxu0 %v385
  %396 = vmatprep.subr.bf16.mxu0 0
  %397 = vmatpush1.bf16.msra.mxu0 %v386
  %398 = vmatprep.subr.bf16.mxu0 0
  %399 = vmatpush1.bf16.msra.mxu0 %v387
  %400 = vmatprep.subr.bf16.mxu0 0
  %401 = vmatpush1.bf16.msra.mxu0 0
  %402 = vmatprep.subr.bf16.mxu0 0
  %403 = vmatpush1.bf16.msra.mxu0 0
  %404 = vmatprep.subr.bf16.mxu0 0
  %405 = vmatpush1.bf16.msra.mxu0 0
  %406 = vmatprep.subr.bf16.mxu0 0
  %407 = vmatpush1.bf16.msra.mxu0 0
  %408 = vmatprep.subr.bf16.mxu0 0
  %409 = vmatpush1.bf16.msra.mxu0 0
  %410 = vmatprep.subr.bf16.mxu0 0
  %411 = vmatpush1.bf16.msra.mxu0 0
  %412 = vmatprep.subr.bf16.mxu0 0
  %413 = vmatpush1.bf16.msra.mxu0 0
  %414 = vmatprep.subr.bf16.mxu0 0
  %415 = vmatpush1.bf16.msra.mxu0 0
  %416 = vmatprep.subr.bf16.mxu0 0
  %417 = vmatpush1.bf16.msra.mxu0 0
  %418 = vmatprep.subr.bf16.mxu0 0
  %419 = vmatpush1.bf16.msra.mxu0 0
  %420 = vmatprep.subr.bf16.mxu0 0
  %421 = vmatpush1.bf16.msra.mxu0 0
  %422 = vmatprep.subr.bf16.mxu0 0
  %423 = vmatpush1.bf16.msra.mxu0 0
  %424 = vmatprep.mubr.bf16.mxu0 0
  %425 = vmatmul.mubr.bf16.gmra.mrb[0].mxu0 %v313
  %v426 = vpop.f32.mrb[0].mxu0
  %v427 = vadd.f32 %v367, %v426
  %v428 = vpop.f32.mrb[0].mxu0
  %v429 = vpop.f32.mrb[0].mxu0
  %v430 = vadd.f32 %v367, %v429
  %v431 = vpop.f32.mrb[0].mxu0
  %432 = vdwg.mxu0
  %v433 = vld [vmem:[%s1 + $0xa0] sm:$0xf]
  %v434 = vld [vmem:[%s1 + $0xa4] sm:$0xf]
  %v435 = vld [vmem:[%s1 + $0xa8] sm:$0xf]
  %v436 = vld [vmem:[%s1 + $0xac] sm:$0xf]
  %v437 = vld [vmem:[%s1 + $0xb0] sm:$0xf]
  %v438 = vld [vmem:[%s1 + $0xb4] sm:$0xf]
  %v439 = vld [vmem:[%s1 + $0xb8] sm:$0xf]
  %v440 = vld [vmem:[%s1 + $0xbc] sm:$0xf]
  %v441 = vlaneseq
  %v442 = vshrl.u32 %v441, 7
  %v443 = vsub.s32 6, %v442
  %v444 = vrot.slane %v15, %v443
  %v453 = vunpack.c.l.b16 %v433
  %v454 = vunpack.c.l.b16 %v434
  %v455 = vunpack.c.l.b16 %v435
  %v456 = vunpack.c.l.b16 %v436
  %v457 = vunpack.c.l.b16 %v437
  %v458 = vunpack.c.l.b16 %v438
  %v459 = vunpack.c.l.b16 %v439
  %v460 = vunpack.c.l.b16 %v440
  %v461 = vpack.c.b16 %v454, %v453
  %v462 = vpack.c.b16 %v456, %v455
  %v463 = vpack.c.b16 %v458, %v457
  %v464 = vpack.c.b16 %v460, %v459
  %469 = vmatprep.subr.bf16.mxu0 0
  %470 = vmatpush1.bf16.msra.mxu0 %v461
  %471 = vmatprep.subr.bf16.mxu0 0
  %472 = vmatpush1.bf16.msra.mxu0 %v462
  %473 = vmatprep.subr.bf16.mxu0 0
  %474 = vmatpush1.bf16.msra.mxu0 %v463
  %475 = vmatprep.subr.bf16.mxu0 0
  %476 = vmatpush1.bf16.msra.mxu0 %v464
  %477 = vmatprep.subr.bf16.mxu0 0
  %478 = vmatpush1.bf16.msra.mxu0 0
  %479 = vmatprep.subr.bf16.mxu0 0
  %480 = vmatpush1.bf16.msra.mxu0 0
  %481 = vmatprep.subr.bf16.mxu0 0
  %482 = vmatpush1.bf16.msra.mxu0 0
  %483 = vmatprep.subr.bf16.mxu0 0
  %484 = vmatpush1.bf16.msra.mxu0 0
  %485 = vmatprep.subr.bf16.mxu0 0
  %486 = vmatpush1.bf16.msra.mxu0 0
  %487 = vmatprep.subr.bf16.mxu0 0
  %488 = vmatpush1.bf16.msra.mxu0 0
  %489 = vmatprep.subr.bf16.mxu0 0
  %490 = vmatpush1.bf16.msra.mxu0 0
  %491 = vmatprep.subr.bf16.mxu0 0
  %492 = vmatpush1.bf16.msra.mxu0 0
  %493 = vmatprep.subr.bf16.mxu0 0
  %494 = vmatpush1.bf16.msra.mxu0 0
  %495 = vmatprep.subr.bf16.mxu0 0
  %496 = vmatpush1.bf16.msra.mxu0 0
  %497 = vmatprep.subr.bf16.mxu0 0
  %498 = vmatpush1.bf16.msra.mxu0 0
  %499 = vmatprep.subr.bf16.mxu0 0
  %500 = vmatpush1.bf16.msra.mxu0 0
  %501 = vmatprep.mubr.bf16.mxu0 0
  %502 = vmatmul.mubr.bf16.gmra.mrb[0].mxu0 %v313
  %v503 = vpop.f32.mrb[0].mxu0
  %v504 = vadd.f32 %v444, %v503
  %v505 = vpop.f32.mrb[0].mxu0
  %v506 = vpop.f32.mrb[0].mxu0
  %v507 = vadd.f32 %v444, %v506
  %v508 = vpop.f32.mrb[0].mxu0
  %509 = vdwg.mxu0
  %510 = vxpose.xlu0.b32.start [1/16] %v427, 128
  %511 = vxpose.xlu0.b32.cont [2/16] 0.0, 128
  %512 = vxpose.xlu0.b32.cont [3/16] 0.0, 128
  %513 = vxpose.xlu0.b32.cont [4/16] 0.0, 128
  %514 = vxpose.xlu0.b32.cont [5/16] 0.0, 128
  %515 = vxpose.xlu0.b32.cont [6/16] 0.0, 128
  %516 = vxpose.xlu0.b32.cont [7/16] 0.0, 128
  %517 = vxpose.xlu0.b32.cont [8/16] 0.0, 128
  %518 = vxpose.xlu0.b32.cont [9/16] 0.0, 128
  %519 = vxpose.xlu0.b32.cont [10/16] 0.0, 128
  %520 = vxpose.xlu0.b32.cont [11/16] 0.0, 128
  %521 = vxpose.xlu0.b32.cont [12/16] 0.0, 128
  %522 = vxpose.xlu0.b32.cont [13/16] 0.0, 128
  %523 = vxpose.xlu0.b32.cont [14/16] 0.0, 128
  %524 = vxpose.xlu0.b32.cont [15/16] 0.0, 128
  %525 = vxpose.xlu0.b32.end [16/16] 0.0, 128
  %v526 = vpop.trf.xlu0
  %v527 = vpop.trf.xlu0
  %v528 = vpop.trf.xlu0
  %v529 = vpop.trf.xlu0
  %v530 = vpop.trf.xlu0
  %v531 = vpop.trf.xlu0
  %v532 = vpop.trf.xlu0
  %v533 = vpop.trf.xlu0
  %v534 = vpop.trf.xlu0
  %v535 = vpop.trf.xlu0
  %v536 = vpop.trf.xlu0
  %v537 = vpop.trf.xlu0
  %v538 = vpop.trf.xlu0
  %v539 = vpop.trf.xlu0
  %v540 = vpop.trf.xlu0
  %v541 = vpop.trf.xlu0
  %542 = vxpose.xlu0.b32.start [1/16] %v430, 128
  %543 = vxpose.xlu0.b32.cont [2/16] 0.0, 128
  %544 = vxpose.xlu0.b32.cont [3/16] 0.0, 128
  %545 = vxpose.xlu0.b32.cont [4/16] 0.0, 128
  %546 = vxpose.xlu0.b32.cont [5/16] 0.0, 128
  %547 = vxpose.xlu0.b32.cont [6/16] 0.0, 128
  %548 = vxpose.xlu0.b32.cont [7/16] 0.0, 128
  %549 = vxpose.xlu0.b32.cont [8/16] 0.0, 128
  %550 = vxpose.xlu0.b32.cont [9/16] 0.0, 128
  %551 = vxpose.xlu0.b32.cont [10/16] 0.0, 128
  %552 = vxpose.xlu0.b32.cont [11/16] 0.0, 128
  %553 = vxpose.xlu0.b32.cont [12/16] 0.0, 128
  %554 = vxpose.xlu0.b32.cont [13/16] 0.0, 128
  %555 = vxpose.xlu0.b32.cont [14/16] 0.0, 128
  %556 = vxpose.xlu0.b32.cont [15/16] 0.0, 128
  %557 = vxpose.xlu0.b32.end [16/16] 0.0, 128
  %v558 = vpop.trf.xlu0
  %v559 = vpop.trf.xlu0
  %v560 = vpop.trf.xlu0
  %v561 = vpop.trf.xlu0
  %v562 = vpop.trf.xlu0
  %v563 = vpop.trf.xlu0
  %v564 = vpop.trf.xlu0
  %v565 = vpop.trf.xlu0
  %v566 = vpop.trf.xlu0
  %v567 = vpop.trf.xlu0
  %v568 = vpop.trf.xlu0
  %v569 = vpop.trf.xlu0
  %v570 = vpop.trf.xlu0
  %v571 = vpop.trf.xlu0
  %v572 = vpop.trf.xlu0
  %v573 = vpop.trf.xlu0
  %v574 = vpack.c.bf16 %v350, %v350
  %v575 = vpack.c.bf16 %v353, %v353
  %v576 = vpack.c.bf16 %v527, %v526
  %v577 = vpack.c.bf16 %v529, %v528
  %v578 = vpack.c.bf16 %v559, %v558
  %v579 = vpack.c.bf16 %v561, %v560
  %vm580 = vcmask 261120
  %v582 = vsel %vm580, %v574, 0
  %584 = vmatprep.subr.bf16.mxu0 0
  %585 = vmatpush1.bf16.msra.mxu0 %v576
  %586 = vmatprep.subr.bf16.mxu0 0
  %587 = vmatpush1.bf16.msra.mxu0 %v577
  %588 = vmatprep.subr.bf16.mxu0 0
  %589 = vmatpush1.bf16.msra.mxu0 0
  %590 = vmatprep.subr.bf16.mxu0 0
  %591 = vmatpush1.bf16.msra.mxu0 0
  %592 = vmatprep.subr.bf16.mxu0 0
  %593 = vmatpush1.bf16.msra.mxu0 0
  %594 = vmatprep.subr.bf16.mxu0 0
  %595 = vmatpush1.bf16.msra.mxu0 0
  %596 = vmatprep.subr.bf16.mxu0 0
  %597 = vmatpush1.bf16.msra.mxu0 0
  %598 = vmatprep.subr.bf16.mxu0 0
  %599 = vmatpush1.bf16.msra.mxu0 0
  %600 = vmatprep.subr.bf16.mxu0 0
  %601 = vmatpush1.bf16.msra.mxu0 0
  %602 = vmatprep.subr.bf16.mxu0 0
  %603 = vmatpush1.bf16.msra.mxu0 0
  %604 = vmatprep.subr.bf16.mxu0 0
  %605 = vmatpush1.bf16.msra.mxu0 0
  %606 = vmatprep.subr.bf16.mxu0 0
  %607 = vmatpush1.bf16.msra.mxu0 0
  %608 = vmatprep.subr.bf16.mxu0 0
  %609 = vmatpush1.bf16.msra.mxu0 0
  %610 = vmatprep.subr.bf16.mxu0 0
  %611 = vmatpush1.bf16.msra.mxu0 0
  %612 = vmatprep.subr.bf16.mxu0 0
  %613 = vmatpush1.bf16.msra.mxu0 0
  %614 = vmatprep.subr.bf16.mxu0 0
  %615 = vmatpush1.bf16.msra.mxu0 0
  %616 = vmatprep.mubr.bf16.mxu0 0
  %617 = vmatmul.mubr.bf16.gmra.mrb[0].mxu0 %v582
  %v618 = vpop.f32.mrb[0].mxu0
  %v619 = vadd.f32 0.0, %v618
  %v620 = vpop.f32.mrb[0].mxu0
  %v621 = vpop.f32.mrb[0].mxu0
  %v622 = vpop.f32.mrb[0].mxu0
  %623 = vdwg.mxu0
  %v625 = vsel %vm580, %v575, 0
  %627 = vmatprep.subr.bf16.mxu0 0
  %628 = vmatpush1.bf16.msra.mxu0 %v578
  %629 = vmatprep.subr.bf16.mxu0 0
  %630 = vmatpush1.bf16.msra.mxu0 %v579
  %631 = vmatprep.subr.bf16.mxu0 0
  %632 = vmatpush1.bf16.msra.mxu0 0
  %633 = vmatprep.subr.bf16.mxu0 0
  %634 = vmatpush1.bf16.msra.mxu0 0
  %635 = vmatprep.subr.bf16.mxu0 0
  %636 = vmatpush1.bf16.msra.mxu0 0
  %637 = vmatprep.subr.bf16.mxu0 0
  %638 = vmatpush1.bf16.msra.mxu0 0
  %639 = vmatprep.subr.bf16.mxu0 0
  %640 = vmatpush1.bf16.msra.mxu0 0
  %641 = vmatprep.subr.bf16.mxu0 0
  %642 = vmatpush1.bf16.msra.mxu0 0
  %643 = vmatprep.subr.bf16.mxu0 0
  %644 = vmatpush1.bf16.msra.mxu0 0
  %645 = vmatprep.subr.bf16.mxu0 0
  %646 = vmatpush1.bf16.msra.mxu0 0
  %647 = vmatprep.subr.bf16.mxu0 0
  %648 = vmatpush1.bf16.msra.mxu0 0
  %649 = vmatprep.subr.bf16.mxu0 0
  %650 = vmatpush1.bf16.msra.mxu0 0
  %651 = vmatprep.subr.bf16.mxu0 0
  %652 = vmatpush1.bf16.msra.mxu0 0
  %653 = vmatprep.subr.bf16.mxu0 0
  %654 = vmatpush1.bf16.msra.mxu0 0
  %655 = vmatprep.subr.bf16.mxu0 0
  %656 = vmatpush1.bf16.msra.mxu0 0
  %657 = vmatprep.subr.bf16.mxu0 0
  %658 = vmatpush1.bf16.msra.mxu0 0
  %659 = vmatprep.mubr.bf16.mxu0 0
  %660 = vmatmul.mubr.bf16.gmra.mrb[0].mxu0 %v625
  %v661 = vpop.f32.mrb[0].mxu0
  %v662 = vadd.f32 0.0, %v661
  %v663 = vpop.f32.mrb[0].mxu0
  %v664 = vpop.f32.mrb[0].mxu0
  %v665 = vpop.f32.mrb[0].mxu0
  %666 = vdwg.mxu0
  %v667 = vpack.c.bf16 %v531, %v530
  %v668 = vpack.c.bf16 %v533, %v532
  %v669 = vpack.c.bf16 %v563, %v562
  %v670 = vpack.c.bf16 %v565, %v564
  %672 = vrot.lane.b32.xlu0 %v574, 96
  %v673 = vpop.permute.xlu0 %672
  %v675 = vsel %vm580, %v673, 0
  %677 = vmatprep.subr.bf16.mxu0 0
  %678 = vmatpush1.bf16.msra.mxu0 %v667
  %679 = vmatprep.subr.bf16.mxu0 0
  %680 = vmatpush1.bf16.msra.mxu0 %v668
  %681 = vmatprep.subr.bf16.mxu0 0
  %682 = vmatpush1.bf16.msra.mxu0 0
  %683 = vmatprep.subr.bf16.mxu0 0
  %684 = vmatpush1.bf16.msra.mxu0 0
  %685 = vmatprep.subr.bf16.mxu0 0
  %686 = vmatpush1.bf16.msra.mxu0 0
  %687 = vmatprep.subr.bf16.mxu0 0
  %688 = vmatpush1.bf16.msra.mxu0 0
  %689 = vmatprep.subr.bf16.mxu0 0
  %690 = vmatpush1.bf16.msra.mxu0 0
  %691 = vmatprep.subr.bf16.mxu0 0
  %692 = vmatpush1.bf16.msra.mxu0 0
  %693 = vmatprep.subr.bf16.mxu0 0
  %694 = vmatpush1.bf16.msra.mxu0 0
  %695 = vmatprep.subr.bf16.mxu0 0
  %696 = vmatpush1.bf16.msra.mxu0 0
  %697 = vmatprep.subr.bf16.mxu0 0
  %698 = vmatpush1.bf16.msra.mxu0 0
  %699 = vmatprep.subr.bf16.mxu0 0
  %700 = vmatpush1.bf16.msra.mxu0 0
  %701 = vmatprep.subr.bf16.mxu0 0
  %702 = vmatpush1.bf16.msra.mxu0 0
  %703 = vmatprep.subr.bf16.mxu0 0
  %704 = vmatpush1.bf16.msra.mxu0 0
  %705 = vmatprep.subr.bf16.mxu0 0
  %706 = vmatpush1.bf16.msra.mxu0 0
  %707 = vmatprep.subr.bf16.mxu0 0
  %708 = vmatpush1.bf16.msra.mxu0 0
  %709 = vmatprep.mubr.bf16.mxu0 0
  %710 = vmatmul.mubr.bf16.gmra.mrb[0].mxu0 %v675
  %v711 = vpop.f32.mrb[0].mxu0
  %v712 = vadd.f32 0.0, %v711
  %v713 = vpop.f32.mrb[0].mxu0
  %v714 = vpop.f32.mrb[0].mxu0
  %v715 = vpop.f32.mrb[0].mxu0
  %716 = vdwg.mxu0
  %718 = vrot.lane.b32.xlu0 %v575, 96
  %v719 = vpop.permute.xlu0 %718
  %v721 = vsel %vm580, %v719, 0
  %723 = vmatprep.subr.bf16.mxu0 0
  %724 = vmatpush1.bf16.msra.mxu0 %v669
  %725 = vmatprep.subr.bf16.mxu0 0
  %726 = vmatpush1.bf16.msra.mxu0 %v670
  %727 = vmatprep.subr.bf16.mxu0 0
  %728 = vmatpush1.bf16.msra.mxu0 0
  %729 = vmatprep.subr.bf16.mxu0 0
  %730 = vmatpush1.bf16.msra.mxu0 0
  %731 = vmatprep.subr.bf16.mxu0 0
  %732 = vmatpush1.bf16.msra.mxu0 0
  %733 = vmatprep.subr.bf16.mxu0 0
  %734 = vmatpush1.bf16.msra.mxu0 0
  %735 = vmatprep.subr.bf16.mxu0 0
  %736 = vmatpush1.bf16.msra.mxu0 0
  %737 = vmatprep.subr.bf16.mxu0 0
  %738 = vmatpush1.bf16.msra.mxu0 0
  %739 = vmatprep.subr.bf16.mxu0 0
  %740 = vmatpush1.bf16.msra.mxu0 0
  %741 = vmatprep.subr.bf16.mxu0 0
  %742 = vmatpush1.bf16.msra.mxu0 0
  %743 = vmatprep.subr.bf16.mxu0 0
  %744 = vmatpush1.bf16.msra.mxu0 0
  %745 = vmatprep.subr.bf16.mxu0 0
  %746 = vmatpush1.bf16.msra.mxu0 0
  %747 = vmatprep.subr.bf16.mxu0 0
  %748 = vmatpush1.bf16.msra.mxu0 0
  %749 = vmatprep.subr.bf16.mxu0 0
  %750 = vmatpush1.bf16.msra.mxu0 0
  %751 = vmatprep.subr.bf16.mxu0 0
  %752 = vmatpush1.bf16.msra.mxu0 0
  %753 = vmatprep.subr.bf16.mxu0 0
  %754 = vmatpush1.bf16.msra.mxu0 0
  %755 = vmatprep.mubr.bf16.mxu0 0
  %756 = vmatmul.mubr.bf16.gmra.mrb[0].mxu0 %v721
  %v757 = vpop.f32.mrb[0].mxu0
  %v758 = vadd.f32 0.0, %v757
  %v759 = vpop.f32.mrb[0].mxu0
  %v760 = vpop.f32.mrb[0].mxu0
  %v761 = vpop.f32.mrb[0].mxu0
  %762 = vdwg.mxu0
  %v763 = vmul.f32 %v619, 0.17677669
  %v764 = vmul.f32 %v662, 0.17677669
  %v765 = vmul.f32 %v712, 0.17677669
  %v766 = vmul.f32 %v758, 0.17677669
  %vm767 = vcmask 64512
  %v768 = vsel %vm767, %v763, -inf
  %769 = vmax.xlane.f32.xlu0 %v768
  %v770 = vpop.xlane.xlu0 %769
  %v771 = vsel %vm767, %v764, -inf
  %772 = vmax.xlane.f32.xlu0 %v771
  %v773 = vpop.xlane.xlu0 %772
  %v774 = vsel %vm767, %v765, -inf
  %775 = vmax.xlane.f32.xlu0 %v774
  %v776 = vpop.xlane.xlu0 %775
  %v777 = vsel %vm767, %v766, -inf
  %778 = vmax.xlane.f32.xlu0 %v777
  %v779 = vpop.xlane.xlu0 %778
  %v780 = vsub.f32 %v763, %v770
  %v781 = vsub.f32 %v764, %v773
  %v782 = vsub.f32 %v765, %v776
  %v783 = vsub.f32 %v766, %v779
  %v784 = vmul.f32 %v780, 1.442695
  %v785 = vpow.pop %v784
  %v786 = vmul.f32 %v781, 1.442695
  %v787 = vpow.pop %v786
  %v788 = vmul.f32 %v782, 1.442695
  %v789 = vpow.pop %v788
  %v790 = vmul.f32 %v783, 1.442695
  %v791 = vpow.pop %v790
  %v792 = vsel %vm767, %v785, 0.0
  %793 = vadd.xlane.f32.xlu0 %v792
  %v794 = vpop.xlane.xlu0 %793
  %v795 = vsel %vm767, %v787, 0.0
  %796 = vadd.xlane.f32.xlu0 %v795
  %v797 = vpop.xlane.xlu0 %796
  %v798 = vsel %vm767, %v789, 0.0
  %799 = vadd.xlane.f32.xlu0 %v798
  %v800 = vpop.xlane.xlu0 %799
  %v801 = vsel %vm767, %v791, 0.0
  %802 = vadd.xlane.f32.xlu0 %v801
  %v803 = vpop.xlane.xlu0 %802
  %v804 = vrcp.pop %v794
  %v805 = vrcp.pop %v797
  %v806 = vrcp.pop %v800
  %v807 = vrcp.pop %v803
  %v808 = vmul.f32 %v785, %v804
  %v809 = vmul.f32 %v787, %v805
  %v810 = vmul.f32 %v789, %v806
  %v811 = vmul.f32 %v791, %v807
  %v812 = vadd.f32 %v808, %v810
  %v813 = vadd.f32 %v809, %v811
  %v814 = vpack.c.bf16 %v812, %v812
  %v815 = vpack.c.bf16 %v813, %v813
  %817 = vset.pattern.permute.xlu0 0
  %818 = vperm.xlu0 %817, %v23
  %v819 = vpop.permute.xlu0 %818
  %822 = vset.pattern.permute.xlu0 0
  %823 = vperm.xlu0 %822, %v24
  %v824 = vpop.permute.xlu0 %823
  %v826 = vmul.f32 %v504, %v819
  %v827 = vmul.f32 %v507, %v824
  %v828 = vpack.c.bf16 %v826, %v826
  %v829 = vpack.c.bf16 %v827, %v827
  %v831 = vsel %vm767, %v814, 0
  %vm833 = vcmask 1043456
  %v835 = vsel %vm833, %v828, 0
  %837 = vmatprep.subr.bf16.mxu0 0
  %838 = vmatpush1.bf16.msra.mxu0 %v835
  %839 = vmatprep.subr.bf16.mxu0 0
  %840 = vmatpush1.bf16.msra.mxu0 0
  %841 = vmatprep.subr.bf16.mxu0 0
  %842 = vmatpush1.bf16.msra.mxu0 0
  %843 = vmatprep.subr.bf16.mxu0 0
  %844 = vmatpush1.bf16.msra.mxu0 0
  %845 = vmatprep.subr.bf16.mxu0 0
  %846 = vmatpush1.bf16.msra.mxu0 0
  %847 = vmatprep.subr.bf16.mxu0 0
  %848 = vmatpush1.bf16.msra.mxu0 0
  %849 = vmatprep.subr.bf16.mxu0 0
  %850 = vmatpush1.bf16.msra.mxu0 0
  %851 = vmatprep.subr.bf16.mxu0 0
  %852 = vmatpush1.bf16.msra.mxu0 0
  %853 = vmatprep.subr.bf16.mxu0 0
  %854 = vmatpush1.bf16.msra.mxu0 0
  %855 = vmatprep.subr.bf16.mxu0 0
  %856 = vmatpush1.bf16.msra.mxu0 0
  %857 = vmatprep.subr.bf16.mxu0 0
  %858 = vmatpush1.bf16.msra.mxu0 0
  %859 = vmatprep.subr.bf16.mxu0 0
  %860 = vmatpush1.bf16.msra.mxu0 0
  %861 = vmatprep.subr.bf16.mxu0 0
  %862 = vmatpush1.bf16.msra.mxu0 0
  %863 = vmatprep.subr.bf16.mxu0 0
  %864 = vmatpush1.bf16.msra.mxu0 0
  %865 = vmatprep.subr.bf16.mxu0 0
  %866 = vmatpush1.bf16.msra.mxu0 0
  %867 = vmatprep.subr.bf16.mxu0 0
  %868 = vmatpush1.bf16.msra.mxu0 0
  %869 = vmatprep.mubr.bf16.mxu0 0
  %870 = vmatmul.mubr.bf16.gmra.mrb[0].mxu0 %v831
  %v871 = vpop.f32.mrb[0].mxu0
  %v872 = vadd.f32 0.0, %v871
  %v873 = vpop.f32.mrb[0].mxu0
  %v874 = vpop.f32.mrb[0].mxu0
  %v875 = vpop.f32.mrb[0].mxu0
  %876 = vdwg.mxu0
  %v878 = vsel %vm767, %v815, 0
  %v881 = vsel %vm833, %v829, 0
  %883 = vmatprep.subr.bf16.mxu0 0
  %884 = vmatpush1.bf16.msra.mxu0 %v881
  %885 = vmatprep.subr.bf16.mxu0 0
  %886 = vmatpush1.bf16.msra.mxu0 0
  %887 = vmatprep.subr.bf16.mxu0 0
  %888 = vmatpush1.bf16.msra.mxu0 0
  %889 = vmatprep.subr.bf16.mxu0 0
  %890 = vmatpush1.bf16.msra.mxu0 0
  %891 = vmatprep.subr.bf16.mxu0 0
  %892 = vmatpush1.bf16.msra.mxu0 0
  %893 = vmatprep.subr.bf16.mxu0 0
  %894 = vmatpush1.bf16.msra.mxu0 0
  %895 = vmatprep.subr.bf16.mxu0 0
  %896 = vmatpush1.bf16.msra.mxu0 0
  %897 = vmatprep.subr.bf16.mxu0 0
  %898 = vmatpush1.bf16.msra.mxu0 0
  %899 = vmatprep.subr.bf16.mxu0 0
  %900 = vmatpush1.bf16.msra.mxu0 0
  %901 = vmatprep.subr.bf16.mxu0 0
  %902 = vmatpush1.bf16.msra.mxu0 0
  %903 = vmatprep.subr.bf16.mxu0 0
  %904 = vmatpush1.bf16.msra.mxu0 0
  %905 = vmatprep.subr.bf16.mxu0 0
  %906 = vmatpush1.bf16.msra.mxu0 0
  %907 = vmatprep.subr.bf16.mxu0 0
  %908 = vmatpush1.bf16.msra.mxu0 0
  %909 = vmatprep.subr.bf16.mxu0 0
  %910 = vmatpush1.bf16.msra.mxu0 0
  %911 = vmatprep.subr.bf16.mxu0 0
  %912 = vmatpush1.bf16.msra.mxu0 0
  %913 = vmatprep.subr.bf16.mxu0 0
  %914 = vmatpush1.bf16.msra.mxu0 0
  %915 = vmatprep.mubr.bf16.mxu0 0
  %916 = vmatmul.mubr.bf16.gmra.mrb[0].mxu0 %v878
  %v917 = vpop.f32.mrb[0].mxu0
  %v918 = vadd.f32 0.0, %v917
  %v919 = vpop.f32.mrb[0].mxu0
  %v920 = vpop.f32.mrb[0].mxu0
  %v921 = vpop.f32.mrb[0].mxu0
  %922 = vdwg.mxu0
  %v924 = vsel %vm833, %v192, 0
  %926 = vmatprep.subr.bf16.mxu0 0
  %927 = vmatpush1.bf16.msra.mxu0 %v924
  %928 = vmatprep.subr.bf16.mxu0 0
  %929 = vmatpush1.bf16.msra.mxu0 0
  %930 = vmatprep.subr.bf16.mxu0 0
  %931 = vmatpush1.bf16.msra.mxu0 0
  %932 = vmatprep.subr.bf16.mxu0 0
  %933 = vmatpush1.bf16.msra.mxu0 0
  %934 = vmatprep.subr.bf16.mxu0 0
  %935 = vmatpush1.bf16.msra.mxu0 0
  %936 = vmatprep.subr.bf16.mxu0 0
  %937 = vmatpush1.bf16.msra.mxu0 0
  %938 = vmatprep.subr.bf16.mxu0 0
  %939 = vmatpush1.bf16.msra.mxu0 0
  %940 = vmatprep.subr.bf16.mxu0 0
  %941 = vmatpush1.bf16.msra.mxu0 0
  %942 = vmatprep.subr.bf16.mxu0 0
  %943 = vmatpush1.bf16.msra.mxu0 0
  %944 = vmatprep.subr.bf16.mxu0 0
  %945 = vmatpush1.bf16.msra.mxu0 0
  %946 = vmatprep.subr.bf16.mxu0 0
  %947 = vmatpush1.bf16.msra.mxu0 0
  %948 = vmatprep.subr.bf16.mxu0 0
  %949 = vmatpush1.bf16.msra.mxu0 0
  %950 = vmatprep.subr.bf16.mxu0 0
  %951 = vmatpush1.bf16.msra.mxu0 0
  %952 = vmatprep.subr.bf16.mxu0 0
  %953 = vmatpush1.bf16.msra.mxu0 0
  %954 = vmatprep.subr.bf16.mxu0 0
  %955 = vmatpush1.bf16.msra.mxu0 0
  %956 = vmatprep.subr.bf16.mxu0 0
  %957 = vmatpush1.bf16.msra.mxu0 0
  %958 = vmatprep.mubr.bf16.mxu0 0
  %959 = vmatmul.mubr.bf16.gmra.mrb[0].mxu0 %v831
  %v960 = vpop.f32.mrb[0].mxu0
  %v961 = vadd.f32 0.0, %v960
  %v962 = vpop.f32.mrb[0].mxu0
  %v963 = vpop.f32.mrb[0].mxu0
  %v964 = vpop.f32.mrb[0].mxu0
  %965 = vdwg.mxu0
  %v967 = vsel %vm833, %v193, 0
  %969 = vmatprep.subr.bf16.mxu0 0
  %970 = vmatpush1.bf16.msra.mxu0 %v967
  %971 = vmatprep.subr.bf16.mxu0 0
  %972 = vmatpush1.bf16.msra.mxu0 0
  %973 = vmatprep.subr.bf16.mxu0 0
  %974 = vmatpush1.bf16.msra.mxu0 0
  %975 = vmatprep.subr.bf16.mxu0 0
  %976 = vmatpush1.bf16.msra.mxu0 0
  %977 = vmatprep.subr.bf16.mxu0 0
  %978 = vmatpush1.bf16.msra.mxu0 0
  %979 = vmatprep.subr.bf16.mxu0 0
  %980 = vmatpush1.bf16.msra.mxu0 0
  %981 = vmatprep.subr.bf16.mxu0 0
  %982 = vmatpush1.bf16.msra.mxu0 0
  %983 = vmatprep.subr.bf16.mxu0 0
  %984 = vmatpush1.bf16.msra.mxu0 0
  %985 = vmatprep.subr.bf16.mxu0 0
  %986 = vmatpush1.bf16.msra.mxu0 0
  %987 = vmatprep.subr.bf16.mxu0 0
  %988 = vmatpush1.bf16.msra.mxu0 0
  %989 = vmatprep.subr.bf16.mxu0 0
  %990 = vmatpush1.bf16.msra.mxu0 0
  %991 = vmatprep.subr.bf16.mxu0 0
  %992 = vmatpush1.bf16.msra.mxu0 0
  %993 = vmatprep.subr.bf16.mxu0 0
  %994 = vmatpush1.bf16.msra.mxu0 0
  %995 = vmatprep.subr.bf16.mxu0 0
  %996 = vmatpush1.bf16.msra.mxu0 0
  %997 = vmatprep.subr.bf16.mxu0 0
  %998 = vmatpush1.bf16.msra.mxu0 0
  %999 = vmatprep.subr.bf16.mxu0 0
  %1000 = vmatpush1.bf16.msra.mxu0 0
  %1001 = vmatprep.mubr.bf16.mxu0 0
  %1002 = vmatmul.mubr.bf16.gmra.mrb[0].mxu0 %v878
  %v1003 = vpop.f32.mrb[0].mxu0
  %v1004 = vadd.f32 0.0, %v1003
  %v1005 = vpop.f32.mrb[0].mxu0
  %v1006 = vpop.f32.mrb[0].mxu0
  %v1007 = vpop.f32.mrb[0].mxu0
  %1008 = vdwg.mxu0
  %v1009 = vrcp.pop %v961
  %v1010 = vrcp.pop %v1004
  %1012 = vset.pattern.permute.xlu0 0
  %1013 = vperm.xlu0 %1012, %v1009
  %v1014 = vpop.permute.xlu0 %1013
  %1017 = vset.pattern.permute.xlu0 0
  %1018 = vperm.xlu0 %1017, %v1010
  %v1019 = vpop.permute.xlu0 %1018
  %v1021 = vmul.f32 %v872, %v1014
  %v1022 = vmul.f32 %v918, %v1019
  %v1023 = vmax.f32 %v1021, 0.0
  %v1024 = vmax.f32 %v1022, 0.0
  %vm1025 = vcmp.ne.f32.partialorder %v1021, %v1021
  %vm1026 = vcmp.ne.f32.partialorder %v1022, %v1022
  %v1027 = vadd.f32 %v1021, 0.0
  %v1028 = vadd.f32 %v1022, 0.0
  %v1029 = vand.u32 2147483647, %v1021
  %v1030 = vand.u32 2147483647, %v1022
  %v1031 = vsub.f32 0.0, %v1029
  %v1032 = vsub.f32 0.0, %v1030
  %v1033 = vmul.f32 %v1031, 1.442695
  %v1034 = vpow.pop %v1033
  %v1035 = vmul.f32 %v1032, 1.442695
  %v1036 = vpow.pop %v1035
  %v1037 = vadd.f32 %v1034, 1.0
  %v1038 = vlog2.pop %v1037
  %v1039 = vmul.f32 %v1038, 0.6931472
  %v1040 = vmul.f32 -0.5, %v1034
  %v1041 = vadd.f32 %v1040, 1.0
  %v1042 = vmul.f32 %v1041, %v1034
  %v1043 = vand.u32 2147483647, %v1034
  %vm1044 = vcmp.lt.f32.partialorder %v1043, 0.0004427343
  %v1045 = vsel %vm1044, %v1042, %v1039
  %v1046 = vadd.f32 %v1036, 1.0
  %v1047 = vlog2.pop %v1046
  %v1048 = vmul.f32 %v1047, 0.6931472
  %v1049 = vmul.f32 -0.5, %v1036
  %v1050 = vadd.f32 %v1049, 1.0
  %v1051 = vmul.f32 %v1050, %v1036
  %v1052 = vand.u32 2147483647, %v1036
  %vm1053 = vcmp.lt.f32.partialorder %v1052, 0.0004427343
  %v1054 = vsel %vm1053, %v1051, %v1048
  %v1055 = vadd.f32 %v1023, %v1045
  %v1056 = vadd.f32 %v1024, %v1054
  %v1057 = vsel %vm1025, %v1027, %v1055
  %v1058 = vsel %vm1026, %v1028, %v1056
  %v1059 = vadd.f32 %v269, %v1057
  %v1060 = vadd.f32 %v272, %v1058
  %v1061 = vsel %vm151, %v1059, 0.0
  %1062 = vadd.xlane.f32.xlu0 %v1061
  %v1063 = vpop.xlane.xlu0 %1062
  %v1064 = vsel %vm151, %v1060, 0.0
  %1065 = vadd.xlane.f32.xlu0 %v1064
  %v1066 = vpop.xlane.xlu0 %1065
  %v1067 = vmul.f32 %v1063, 0.015625
  %v1068 = vmul.f32 %v1066, 0.015625
  %v1069 = vsub.f32 %v1059, %v1067
  %v1070 = vsub.f32 %v1060, %v1068
  %v1071 = vmul.f32 %v1069, %v1069
  %v1072 = vmul.f32 %v1070, %v1070
  %v1073 = vsel %vm151, %v1071, 0.0
  %1074 = vadd.xlane.f32.xlu0 %v1073
  %v1075 = vpop.xlane.xlu0 %1074
  %v1076 = vsel %vm151, %v1072, 0.0
  %1077 = vadd.xlane.f32.xlu0 %v1076
  %v1078 = vpop.xlane.xlu0 %1077
  %v1079 = vmul.f32 %v1075, 0.015625
  %v1080 = vmul.f32 %v1078, 0.015625
  %v1081 = vadd.f32 %v1079, 1e-05
  %v1082 = vadd.f32 %v1080, 1e-05
  %v1083 = vrsqrt.pop %v1081
  %v1084 = vrsqrt.pop %v1082
  %v1085 = vmul.f32 %v1069, %v1083
  %v1086 = vmul.f32 %v1070, %v1084
  %v1087 = vlaneseq
  %v1088 = vshrl.u32 %v1087, 7
  %v1089 = vsub.s32 7, %v1088
  %v1090 = vrot.slane %v15, %v1089
  %v1091 = vmul.f32 %v1085, %v1090
  %v1092 = vmul.f32 %v1086, %v1090
  %v1093 = vlaneseq
  %v1094 = vshrl.u32 %v1093, 7
  %v1095 = vsub.s32 0, %v1094
  %v1096 = vrot.slane %v16, %v1095
  %v1097 = vadd.f32 %v1091, %v1096
  %v1098 = vadd.f32 %v1092, %v1096
  %v1099 = vpack.c.bf16 %v1098, %v1097
  %v1100 = vld [vmem:[%s1 + $0xc0] sm:$0xf]
  %v1101 = vld [vmem:[%s1 + $0xc4] sm:$0xf]
  %v1102 = vld [vmem:[%s1 + $0xc8] sm:$0xf]
  %v1103 = vld [vmem:[%s1 + $0xcc] sm:$0xf]
  %v1104 = vld [vmem:[%s1 + $0xd0] sm:$0xf]
  %v1105 = vld [vmem:[%s1 + $0xd4] sm:$0xf]
  %v1106 = vld [vmem:[%s1 + $0xd8] sm:$0xf]
  %v1107 = vld [vmem:[%s1 + $0xdc] sm:$0xf]
  %v1108 = vlaneseq
  %v1109 = vshrl.u32 %v1108, 7
  %v1110 = vsub.s32 1, %v1109
  %v1111 = vrot.slane %v16, %v1110
  %v1120 = vunpack.c.l.b16 %v1100
  %v1121 = vunpack.c.l.b16 %v1101
  %v1122 = vunpack.c.l.b16 %v1102
  %v1123 = vunpack.c.l.b16 %v1103
  %v1124 = vunpack.c.l.b16 %v1104
  %v1125 = vunpack.c.l.b16 %v1105
  %v1126 = vunpack.c.l.b16 %v1106
  %v1127 = vunpack.c.l.b16 %v1107
  %v1128 = vpack.c.b16 %v1121, %v1120
  %v1129 = vpack.c.b16 %v1123, %v1122
  %v1130 = vpack.c.b16 %v1125, %v1124
  %v1131 = vpack.c.b16 %v1127, %v1126
  %v1137 = vsel %vm151, %v1099, 0
  %1139 = vmatprep.subr.bf16.mxu0 0
  %1140 = vmatpush1.bf16.msra.mxu0 %v1128
  %1141 = vmatprep.subr.bf16.mxu0 0
  %1142 = vmatpush1.bf16.msra.mxu0 %v1129
  %1143 = vmatprep.subr.bf16.mxu0 0
  %1144 = vmatpush1.bf16.msra.mxu0 %v1130
  %1145 = vmatprep.subr.bf16.mxu0 0
  %1146 = vmatpush1.bf16.msra.mxu0 %v1131
  %1147 = vmatprep.subr.bf16.mxu0 0
  %1148 = vmatpush1.bf16.msra.mxu0 0
  %1149 = vmatprep.subr.bf16.mxu0 0
  %1150 = vmatpush1.bf16.msra.mxu0 0
  %1151 = vmatprep.subr.bf16.mxu0 0
  %1152 = vmatpush1.bf16.msra.mxu0 0
  %1153 = vmatprep.subr.bf16.mxu0 0
  %1154 = vmatpush1.bf16.msra.mxu0 0
  %1155 = vmatprep.subr.bf16.mxu0 0
  %1156 = vmatpush1.bf16.msra.mxu0 0
  %1157 = vmatprep.subr.bf16.mxu0 0
  %1158 = vmatpush1.bf16.msra.mxu0 0
  %1159 = vmatprep.subr.bf16.mxu0 0
  %1160 = vmatpush1.bf16.msra.mxu0 0
  %1161 = vmatprep.subr.bf16.mxu0 0
  %1162 = vmatpush1.bf16.msra.mxu0 0
  %1163 = vmatprep.subr.bf16.mxu0 0
  %1164 = vmatpush1.bf16.msra.mxu0 0
  %1165 = vmatprep.subr.bf16.mxu0 0
  %1166 = vmatpush1.bf16.msra.mxu0 0
  %1167 = vmatprep.subr.bf16.mxu0 0
  %1168 = vmatpush1.bf16.msra.mxu0 0
  %1169 = vmatprep.subr.bf16.mxu0 0
  %1170 = vmatpush1.bf16.msra.mxu0 0
  %1171 = vmatprep.mubr.bf16.mxu0 0
  %1172 = vmatmul.mubr.bf16.gmra.mrb[0].mxu0 %v1137
  %v1173 = vpop.f32.mrb[0].mxu0
  %v1174 = vadd.f32 %v1111, %v1173
  %v1175 = vpop.f32.mrb[0].mxu0
  %v1176 = vpop.f32.mrb[0].mxu0
  %v1177 = vadd.f32 %v1111, %v1176
  %v1178 = vpop.f32.mrb[0].mxu0
  %1179 = vdwg.mxu0
  %v1180 = vpack.c.bf16 %v1177, %v1174
  %v1181 = vld [vmem:[%s1 + $0xe0] sm:$0xf]
  %v1182 = vld [vmem:[%s1 + $0xe4] sm:$0xf]
  %v1183 = vld [vmem:[%s1 + $0xe8] sm:$0xf]
  %v1184 = vld [vmem:[%s1 + $0xec] sm:$0xf]
  %v1185 = vld [vmem:[%s1 + $0xf0] sm:$0xf]
  %v1186 = vld [vmem:[%s1 + $0xf4] sm:$0xf]
  %v1187 = vld [vmem:[%s1 + $0xf8] sm:$0xf]
  %v1188 = vld [vmem:[%s1 + $0xfc] sm:$0xf]
  %v1189 = vlaneseq
  %v1190 = vshrl.u32 %v1189, 7
  %v1191 = vsub.s32 2, %v1190
  %v1192 = vrot.slane %v16, %v1191
  %v1201 = vunpack.c.l.b16 %v1181
  %v1202 = vunpack.c.l.b16 %v1182
  %v1203 = vunpack.c.l.b16 %v1183
  %v1204 = vunpack.c.l.b16 %v1184
  %v1205 = vunpack.c.l.b16 %v1185
  %v1206 = vunpack.c.l.b16 %v1186
  %v1207 = vunpack.c.l.b16 %v1187
  %v1208 = vunpack.c.l.b16 %v1188
  %v1209 = vpack.c.b16 %v1202, %v1201
  %v1210 = vpack.c.b16 %v1204, %v1203
  %v1211 = vpack.c.b16 %v1206, %v1205
  %v1212 = vpack.c.b16 %v1208, %v1207
  %v1218 = vsel %vm151, %v1180, 0
  %1220 = vmatprep.subr.bf16.mxu0 0
  %1221 = vmatpush1.bf16.msra.mxu0 %v1209
  %1222 = vmatprep.subr.bf16.mxu0 0
  %1223 = vmatpush1.bf16.msra.mxu0 %v1210
  %1224 = vmatprep.subr.bf16.mxu0 0
  %1225 = vmatpush1.bf16.msra.mxu0 %v1211
  %1226 = vmatprep.subr.bf16.mxu0 0
  %1227 = vmatpush1.bf16.msra.mxu0 %v1212
  %1228 = vmatprep.subr.bf16.mxu0 0
  %1229 = vmatpush1.bf16.msra.mxu0 0
  %1230 = vmatprep.subr.bf16.mxu0 0
  %1231 = vmatpush1.bf16.msra.mxu0 0
  %1232 = vmatprep.subr.bf16.mxu0 0
  %1233 = vmatpush1.bf16.msra.mxu0 0
  %1234 = vmatprep.subr.bf16.mxu0 0
  %1235 = vmatpush1.bf16.msra.mxu0 0
  %1236 = vmatprep.subr.bf16.mxu0 0
  %1237 = vmatpush1.bf16.msra.mxu0 0
  %1238 = vmatprep.subr.bf16.mxu0 0
  %1239 = vmatpush1.bf16.msra.mxu0 0
  %1240 = vmatprep.subr.bf16.mxu0 0
  %1241 = vmatpush1.bf16.msra.mxu0 0
  %1242 = vmatprep.subr.bf16.mxu0 0
  %1243 = vmatpush1.bf16.msra.mxu0 0
  %1244 = vmatprep.subr.bf16.mxu0 0
  %1245 = vmatpush1.bf16.msra.mxu0 0
  %1246 = vmatprep.subr.bf16.mxu0 0
  %1247 = vmatpush1.bf16.msra.mxu0 0
  %1248 = vmatprep.subr.bf16.mxu0 0
  %1249 = vmatpush1.bf16.msra.mxu0 0
  %1250 = vmatprep.subr.bf16.mxu0 0
  %1251 = vmatpush1.bf16.msra.mxu0 0
  %1252 = vmatprep.mubr.bf16.mxu0 0
  %1253 = vmatmul.mubr.bf16.gmra.mrb[0].mxu0 %v1218
  %v1254 = vpop.f32.mrb[0].mxu0
  %v1255 = vadd.f32 %v1192, %v1254
  %v1256 = vpop.f32.mrb[0].mxu0
  %v1257 = vpop.f32.mrb[0].mxu0
  %v1258 = vadd.f32 %v1192, %v1257
  %v1259 = vpop.f32.mrb[0].mxu0
  %1260 = vdwg.mxu0
  %v1261 = vpack.c.bf16 %v1258, %v1255
  %v1262 = vld [vmem:[%s1 + $0x100] sm:$0xf]
  %v1263 = vld [vmem:[%s1 + $0x104] sm:$0xf]
  %v1264 = vld [vmem:[%s1 + $0x108] sm:$0xf]
  %v1265 = vld [vmem:[%s1 + $0x10c] sm:$0xf]
  %v1266 = vld [vmem:[%s1 + $0x110] sm:$0xf]
  %v1267 = vld [vmem:[%s1 + $0x114] sm:$0xf]
  %v1268 = vld [vmem:[%s1 + $0x118] sm:$0xf]
  %v1269 = vld [vmem:[%s1 + $0x11c] sm:$0xf]
  %v1270 = vlaneseq
  %v1271 = vshrl.u32 %v1270, 7
  %v1272 = vsub.s32 3, %v1271
  %v1273 = vrot.slane %v16, %v1272
  %v1282 = vunpack.c.l.b16 %v1262
  %v1283 = vunpack.c.l.b16 %v1263
  %v1284 = vunpack.c.l.b16 %v1264
  %v1285 = vunpack.c.l.b16 %v1265
  %v1286 = vunpack.c.l.b16 %v1266
  %v1287 = vunpack.c.l.b16 %v1267
  %v1288 = vunpack.c.l.b16 %v1268
  %v1289 = vunpack.c.l.b16 %v1269
  %v1290 = vpack.c.b16 %v1283, %v1282
  %v1291 = vpack.c.b16 %v1285, %v1284
  %v1292 = vpack.c.b16 %v1287, %v1286
  %v1293 = vpack.c.b16 %v1289, %v1288
  %v1299 = vsel %vm151, %v1261, 0
  %1301 = vmatprep.subr.bf16.mxu0 0
  %1302 = vmatpush1.bf16.msra.mxu0 %v1290
  %1303 = vmatprep.subr.bf16.mxu0 0
  %1304 = vmatpush1.bf16.msra.mxu0 %v1291
  %1305 = vmatprep.subr.bf16.mxu0 0
  %1306 = vmatpush1.bf16.msra.mxu0 %v1292
  %1307 = vmatprep.subr.bf16.mxu0 0
  %1308 = vmatpush1.bf16.msra.mxu0 %v1293
  %1309 = vmatprep.subr.bf16.mxu0 0
  %1310 = vmatpush1.bf16.msra.mxu0 0
  %1311 = vmatprep.subr.bf16.mxu0 0
  %1312 = vmatpush1.bf16.msra.mxu0 0
  %1313 = vmatprep.subr.bf16.mxu0 0
  %1314 = vmatpush1.bf16.msra.mxu0 0
  %1315 = vmatprep.subr.bf16.mxu0 0
  %1316 = vmatpush1.bf16.msra.mxu0 0
  %1317 = vmatprep.subr.bf16.mxu0 0
  %1318 = vmatpush1.bf16.msra.mxu0 0
  %1319 = vmatprep.subr.bf16.mxu0 0
  %1320 = vmatpush1.bf16.msra.mxu0 0
  %1321 = vmatprep.subr.bf16.mxu0 0
  %1322 = vmatpush1.bf16.msra.mxu0 0
  %1323 = vmatprep.subr.bf16.mxu0 0
  %1324 = vmatpush1.bf16.msra.mxu0 0
  %1325 = vmatprep.subr.bf16.mxu0 0
  %1326 = vmatpush1.bf16.msra.mxu0 0
  %1327 = vmatprep.subr.bf16.mxu0 0
  %1328 = vmatpush1.bf16.msra.mxu0 0
  %1329 = vmatprep.subr.bf16.mxu0 0
  %1330 = vmatpush1.bf16.msra.mxu0 0
  %1331 = vmatprep.subr.bf16.mxu0 0
  %1332 = vmatpush1.bf16.msra.mxu0 0
  %1333 = vmatprep.mubr.bf16.mxu0 0
  %1334 = vmatmul.mubr.bf16.gmra.mrb[0].mxu0 %v1299
  %v1335 = vpop.f32.mrb[0].mxu0
  %v1336 = vadd.f32 %v1273, %v1335
  %v1337 = vpop.f32.mrb[0].mxu0
  %v1338 = vpop.f32.mrb[0].mxu0
  %v1339 = vadd.f32 %v1273, %v1338
  %v1340 = vpop.f32.mrb[0].mxu0
  %1341 = vdwg.mxu0
  %v1342 = vld [vmem:[%s1 + $0x120] sm:$0xf]
  %v1343 = vld [vmem:[%s1 + $0x124] sm:$0xf]
  %v1344 = vld [vmem:[%s1 + $0x128] sm:$0xf]
  %v1345 = vld [vmem:[%s1 + $0x12c] sm:$0xf]
  %v1346 = vld [vmem:[%s1 + $0x130] sm:$0xf]
  %v1347 = vld [vmem:[%s1 + $0x134] sm:$0xf]
  %v1348 = vld [vmem:[%s1 + $0x138] sm:$0xf]
  %v1349 = vld [vmem:[%s1 + $0x13c] sm:$0xf]
  %v1350 = vlaneseq
  %v1351 = vshrl.u32 %v1350, 7
  %v1352 = vsub.s32 4, %v1351
  %v1353 = vrot.slane %v16, %v1352
  %v1362 = vunpack.c.l.b16 %v1342
  %v1363 = vunpack.c.l.b16 %v1343
  %v1364 = vunpack.c.l.b16 %v1344
  %v1365 = vunpack.c.l.b16 %v1345
  %v1366 = vunpack.c.l.b16 %v1346
  %v1367 = vunpack.c.l.b16 %v1347
  %v1368 = vunpack.c.l.b16 %v1348
  %v1369 = vunpack.c.l.b16 %v1349
  %v1370 = vpack.c.b16 %v1363, %v1362
  %v1371 = vpack.c.b16 %v1365, %v1364
  %v1372 = vpack.c.b16 %v1367, %v1366
  %v1373 = vpack.c.b16 %v1369, %v1368
  %1378 = vmatprep.subr.bf16.mxu0 0
  %1379 = vmatpush1.bf16.msra.mxu0 %v1370
  %1380 = vmatprep.subr.bf16.mxu0 0
  %1381 = vmatpush1.bf16.msra.mxu0 %v1371
  %1382 = vmatprep.subr.bf16.mxu0 0
  %1383 = vmatpush1.bf16.msra.mxu0 %v1372
  %1384 = vmatprep.subr.bf16.mxu0 0
  %1385 = vmatpush1.bf16.msra.mxu0 %v1373
  %1386 = vmatprep.subr.bf16.mxu0 0
  %1387 = vmatpush1.bf16.msra.mxu0 0
  %1388 = vmatprep.subr.bf16.mxu0 0
  %1389 = vmatpush1.bf16.msra.mxu0 0
  %1390 = vmatprep.subr.bf16.mxu0 0
  %1391 = vmatpush1.bf16.msra.mxu0 0
  %1392 = vmatprep.subr.bf16.mxu0 0
  %1393 = vmatpush1.bf16.msra.mxu0 0
  %1394 = vmatprep.subr.bf16.mxu0 0
  %1395 = vmatpush1.bf16.msra.mxu0 0
  %1396 = vmatprep.subr.bf16.mxu0 0
  %1397 = vmatpush1.bf16.msra.mxu0 0
  %1398 = vmatprep.subr.bf16.mxu0 0
  %1399 = vmatpush1.bf16.msra.mxu0 0
  %1400 = vmatprep.subr.bf16.mxu0 0
  %1401 = vmatpush1.bf16.msra.mxu0 0
  %1402 = vmatprep.subr.bf16.mxu0 0
  %1403 = vmatpush1.bf16.msra.mxu0 0
  %1404 = vmatprep.subr.bf16.mxu0 0
  %1405 = vmatpush1.bf16.msra.mxu0 0
  %1406 = vmatprep.subr.bf16.mxu0 0
  %1407 = vmatpush1.bf16.msra.mxu0 0
  %1408 = vmatprep.subr.bf16.mxu0 0
  %1409 = vmatpush1.bf16.msra.mxu0 0
  %1410 = vmatprep.mubr.bf16.mxu0 0
  %1411 = vmatmul.mubr.bf16.gmra.mrb[0].mxu0 %v1299
  %v1412 = vpop.f32.mrb[0].mxu0
  %v1413 = vadd.f32 %v1353, %v1412
  %v1414 = vpop.f32.mrb[0].mxu0
  %v1415 = vpop.f32.mrb[0].mxu0
  %v1416 = vadd.f32 %v1353, %v1415
  %v1417 = vpop.f32.mrb[0].mxu0
  %1418 = vdwg.mxu0
  %v1419 = vld [vmem:[%s1 + $0x140] sm:$0xf]
  %v1420 = vld [vmem:[%s1 + $0x144] sm:$0xf]
  %v1421 = vld [vmem:[%s1 + $0x148] sm:$0xf]
  %v1422 = vld [vmem:[%s1 + $0x14c] sm:$0xf]
  %v1423 = vld [vmem:[%s1 + $0x150] sm:$0xf]
  %v1424 = vld [vmem:[%s1 + $0x154] sm:$0xf]
  %v1425 = vld [vmem:[%s1 + $0x158] sm:$0xf]
  %v1426 = vld [vmem:[%s1 + $0x15c] sm:$0xf]
  %v1427 = vlaneseq
  %v1428 = vshrl.u32 %v1427, 7
  %v1429 = vsub.s32 5, %v1428
  %v1430 = vrot.slane %v16, %v1429
  %v1439 = vunpack.c.l.b16 %v1419
  %v1440 = vunpack.c.l.b16 %v1420
  %v1441 = vunpack.c.l.b16 %v1421
  %v1442 = vunpack.c.l.b16 %v1422
  %v1443 = vunpack.c.l.b16 %v1423
  %v1444 = vunpack.c.l.b16 %v1424
  %v1445 = vunpack.c.l.b16 %v1425
  %v1446 = vunpack.c.l.b16 %v1426
  %v1447 = vpack.c.b16 %v1440, %v1439
  %v1448 = vpack.c.b16 %v1442, %v1441
  %v1449 = vpack.c.b16 %v1444, %v1443
  %v1450 = vpack.c.b16 %v1446, %v1445
  %1455 = vmatprep.subr.bf16.mxu0 0
  %1456 = vmatpush1.bf16.msra.mxu0 %v1447
  %1457 = vmatprep.subr.bf16.mxu0 0
  %1458 = vmatpush1.bf16.msra.mxu0 %v1448
  %1459 = vmatprep.subr.bf16.mxu0 0
  %1460 = vmatpush1.bf16.msra.mxu0 %v1449
  %1461 = vmatprep.subr.bf16.mxu0 0
  %1462 = vmatpush1.bf16.msra.mxu0 %v1450
  %1463 = vmatprep.subr.bf16.mxu0 0
  %1464 = vmatpush1.bf16.msra.mxu0 0
  %1465 = vmatprep.subr.bf16.mxu0 0
  %1466 = vmatpush1.bf16.msra.mxu0 0
  %1467 = vmatprep.subr.bf16.mxu0 0
  %1468 = vmatpush1.bf16.msra.mxu0 0
  %1469 = vmatprep.subr.bf16.mxu0 0
  %1470 = vmatpush1.bf16.msra.mxu0 0
  %1471 = vmatprep.subr.bf16.mxu0 0
  %1472 = vmatpush1.bf16.msra.mxu0 0
  %1473 = vmatprep.subr.bf16.mxu0 0
  %1474 = vmatpush1.bf16.msra.mxu0 0
  %1475 = vmatprep.subr.bf16.mxu0 0
  %1476 = vmatpush1.bf16.msra.mxu0 0
  %1477 = vmatprep.subr.bf16.mxu0 0
  %1478 = vmatpush1.bf16.msra.mxu0 0
  %1479 = vmatprep.subr.bf16.mxu0 0
  %1480 = vmatpush1.bf16.msra.mxu0 0
  %1481 = vmatprep.subr.bf16.mxu0 0
  %1482 = vmatpush1.bf16.msra.mxu0 0
  %1483 = vmatprep.subr.bf16.mxu0 0
  %1484 = vmatpush1.bf16.msra.mxu0 0
  %1485 = vmatprep.subr.bf16.mxu0 0
  %1486 = vmatpush1.bf16.msra.mxu0 0
  %1487 = vmatprep.mubr.bf16.mxu0 0
  %1488 = vmatmul.mubr.bf16.gmra.mrb[0].mxu0 %v1299
  %v1489 = vpop.f32.mrb[0].mxu0
  %v1490 = vadd.f32 %v1430, %v1489
  %v1491 = vpop.f32.mrb[0].mxu0
  %v1492 = vpop.f32.mrb[0].mxu0
  %v1493 = vadd.f32 %v1430, %v1492
  %v1494 = vpop.f32.mrb[0].mxu0
  %1495 = vdwg.mxu0
  %1496 = vxpose.xlu0.b32.start [1/16] %v1413, 128
  %1497 = vxpose.xlu0.b32.cont [2/16] 0.0, 128
  %1498 = vxpose.xlu0.b32.cont [3/16] 0.0, 128
  %1499 = vxpose.xlu0.b32.cont [4/16] 0.0, 128
  %1500 = vxpose.xlu0.b32.cont [5/16] 0.0, 128
  %1501 = vxpose.xlu0.b32.cont [6/16] 0.0, 128
  %1502 = vxpose.xlu0.b32.cont [7/16] 0.0, 128
  %1503 = vxpose.xlu0.b32.cont [8/16] 0.0, 128
  %1504 = vxpose.xlu0.b32.cont [9/16] 0.0, 128
  %1505 = vxpose.xlu0.b32.cont [10/16] 0.0, 128
  %1506 = vxpose.xlu0.b32.cont [11/16] 0.0, 128
  %1507 = vxpose.xlu0.b32.cont [12/16] 0.0, 128
  %1508 = vxpose.xlu0.b32.cont [13/16] 0.0, 128
  %1509 = vxpose.xlu0.b32.cont [14/16] 0.0, 128
  %1510 = vxpose.xlu0.b32.cont [15/16] 0.0, 128
  %1511 = vxpose.xlu0.b32.end [16/16] 0.0, 128
  %v1512 = vpop.trf.xlu0
  %v1513 = vpop.trf.xlu0
  %v1514 = vpop.trf.xlu0
  %v1515 = vpop.trf.xlu0
  %v1516 = vpop.trf.xlu0
  %v1517 = vpop.trf.xlu0
  %v1518 = vpop.trf.xlu0
  %v1519 = vpop.trf.xlu0
  %v1520 = vpop.trf.xlu0
  %v1521 = vpop.trf.xlu0
  %v1522 = vpop.trf.xlu0
  %v1523 = vpop.trf.xlu0
  %v1524 = vpop.trf.xlu0
  %v1525 = vpop.trf.xlu0
  %v1526 = vpop.trf.xlu0
  %v1527 = vpop.trf.xlu0
  %1528 = vxpose.xlu0.b32.start [1/16] %v1416, 128
  %1529 = vxpose.xlu0.b32.cont [2/16] 0.0, 128
  %1530 = vxpose.xlu0.b32.cont [3/16] 0.0, 128
  %1531 = vxpose.xlu0.b32.cont [4/16] 0.0, 128
  %1532 = vxpose.xlu0.b32.cont [5/16] 0.0, 128
  %1533 = vxpose.xlu0.b32.cont [6/16] 0.0, 128
  %1534 = vxpose.xlu0.b32.cont [7/16] 0.0, 128
  %1535 = vxpose.xlu0.b32.cont [8/16] 0.0, 128
  %1536 = vxpose.xlu0.b32.cont [9/16] 0.0, 128
  %1537 = vxpose.xlu0.b32.cont [10/16] 0.0, 128
  %1538 = vxpose.xlu0.b32.cont [11/16] 0.0, 128
  %1539 = vxpose.xlu0.b32.cont [12/16] 0.0, 128
  %1540 = vxpose.xlu0.b32.cont [13/16] 0.0, 128
  %1541 = vxpose.xlu0.b32.cont [14/16] 0.0, 128
  %1542 = vxpose.xlu0.b32.cont [15/16] 0.0, 128
  %1543 = vxpose.xlu0.b32.end [16/16] 0.0, 128
  %v1544 = vpop.trf.xlu0
  %v1545 = vpop.trf.xlu0
  %v1546 = vpop.trf.xlu0
  %v1547 = vpop.trf.xlu0
  %v1548 = vpop.trf.xlu0
  %v1549 = vpop.trf.xlu0
  %v1550 = vpop.trf.xlu0
  %v1551 = vpop.trf.xlu0
  %v1552 = vpop.trf.xlu0
  %v1553 = vpop.trf.xlu0
  %v1554 = vpop.trf.xlu0
  %v1555 = vpop.trf.xlu0
  %v1556 = vpop.trf.xlu0
  %v1557 = vpop.trf.xlu0
  %v1558 = vpop.trf.xlu0
  %v1559 = vpop.trf.xlu0
  %v1560 = vpack.c.bf16 %v1336, %v1336
  %v1561 = vpack.c.bf16 %v1339, %v1339
  %v1562 = vpack.c.bf16 %v1513, %v1512
  %v1563 = vpack.c.bf16 %v1515, %v1514
  %v1564 = vpack.c.bf16 %v1545, %v1544
  %v1565 = vpack.c.bf16 %v1547, %v1546
  %v1567 = vsel %vm580, %v1560, 0
  %1569 = vmatprep.subr.bf16.mxu0 0
  %1570 = vmatpush1.bf16.msra.mxu0 %v1562
  %1571 = vmatprep.subr.bf16.mxu0 0
  %1572 = vmatpush1.bf16.msra.mxu0 %v1563
  %1573 = vmatprep.subr.bf16.mxu0 0
  %1574 = vmatpush1.bf16.msra.mxu0 0
  %1575 = vmatprep.subr.bf16.mxu0 0
  %1576 = vmatpush1.bf16.msra.mxu0 0
  %1577 = vmatprep.subr.bf16.mxu0 0
  %1578 = vmatpush1.bf16.msra.mxu0 0
  %1579 = vmatprep.subr.bf16.mxu0 0
  %1580 = vmatpush1.bf16.msra.mxu0 0
  %1581 = vmatprep.subr.bf16.mxu0 0
  %1582 = vmatpush1.bf16.msra.mxu0 0
  %1583 = vmatprep.subr.bf16.mxu0 0
  %1584 = vmatpush1.bf16.msra.mxu0 0
  %1585 = vmatprep.subr.bf16.mxu0 0
  %1586 = vmatpush1.bf16.msra.mxu0 0
  %1587 = vmatprep.subr.bf16.mxu0 0
  %1588 = vmatpush1.bf16.msra.mxu0 0
  %1589 = vmatprep.subr.bf16.mxu0 0
  %1590 = vmatpush1.bf16.msra.mxu0 0
  %1591 = vmatprep.subr.bf16.mxu0 0
  %1592 = vmatpush1.bf16.msra.mxu0 0
  %1593 = vmatprep.subr.bf16.mxu0 0
  %1594 = vmatpush1.bf16.msra.mxu0 0
  %1595 = vmatprep.subr.bf16.mxu0 0
  %1596 = vmatpush1.bf16.msra.mxu0 0
  %1597 = vmatprep.subr.bf16.mxu0 0
  %1598 = vmatpush1.bf16.msra.mxu0 0
  %1599 = vmatprep.subr.bf16.mxu0 0
  %1600 = vmatpush1.bf16.msra.mxu0 0
  %1601 = vmatprep.mubr.bf16.mxu0 0
  %1602 = vmatmul.mubr.bf16.gmra.mrb[0].mxu0 %v1567
  %v1603 = vpop.f32.mrb[0].mxu0
  %v1604 = vadd.f32 0.0, %v1603
  %v1605 = vpop.f32.mrb[0].mxu0
  %v1606 = vpop.f32.mrb[0].mxu0
  %v1607 = vpop.f32.mrb[0].mxu0
  %1608 = vdwg.mxu0
  %v1610 = vsel %vm580, %v1561, 0
  %1612 = vmatprep.subr.bf16.mxu0 0
  %1613 = vmatpush1.bf16.msra.mxu0 %v1564
  %1614 = vmatprep.subr.bf16.mxu0 0
  %1615 = vmatpush1.bf16.msra.mxu0 %v1565
  %1616 = vmatprep.subr.bf16.mxu0 0
  %1617 = vmatpush1.bf16.msra.mxu0 0
  %1618 = vmatprep.subr.bf16.mxu0 0
  %1619 = vmatpush1.bf16.msra.mxu0 0
  %1620 = vmatprep.subr.bf16.mxu0 0
  %1621 = vmatpush1.bf16.msra.mxu0 0
  %1622 = vmatprep.subr.bf16.mxu0 0
  %1623 = vmatpush1.bf16.msra.mxu0 0
  %1624 = vmatprep.subr.bf16.mxu0 0
  %1625 = vmatpush1.bf16.msra.mxu0 0
  %1626 = vmatprep.subr.bf16.mxu0 0
  %1627 = vmatpush1.bf16.msra.mxu0 0
  %1628 = vmatprep.subr.bf16.mxu0 0
  %1629 = vmatpush1.bf16.msra.mxu0 0
  %1630 = vmatprep.subr.bf16.mxu0 0
  %1631 = vmatpush1.bf16.msra.mxu0 0
  %1632 = vmatprep.subr.bf16.mxu0 0
  %1633 = vmatpush1.bf16.msra.mxu0 0
  %1634 = vmatprep.subr.bf16.mxu0 0
  %1635 = vmatpush1.bf16.msra.mxu0 0
  %1636 = vmatprep.subr.bf16.mxu0 0
  %1637 = vmatpush1.bf16.msra.mxu0 0
  %1638 = vmatprep.subr.bf16.mxu0 0
  %1639 = vmatpush1.bf16.msra.mxu0 0
  %1640 = vmatprep.subr.bf16.mxu0 0
  %1641 = vmatpush1.bf16.msra.mxu0 0
  %1642 = vmatprep.subr.bf16.mxu0 0
  %1643 = vmatpush1.bf16.msra.mxu0 0
  %1644 = vmatprep.mubr.bf16.mxu0 0
  %1645 = vmatmul.mubr.bf16.gmra.mrb[0].mxu0 %v1610
  %v1646 = vpop.f32.mrb[0].mxu0
  %v1647 = vadd.f32 0.0, %v1646
  %v1648 = vpop.f32.mrb[0].mxu0
  %v1649 = vpop.f32.mrb[0].mxu0
  %v1650 = vpop.f32.mrb[0].mxu0
  %1651 = vdwg.mxu0
  %v1652 = vpack.c.bf16 %v1517, %v1516
  %v1653 = vpack.c.bf16 %v1519, %v1518
  %v1654 = vpack.c.bf16 %v1549, %v1548
  %v1655 = vpack.c.bf16 %v1551, %v1550
  %1657 = vrot.lane.b32.xlu0 %v1560, 96
  %v1658 = vpop.permute.xlu0 %1657
  %v1660 = vsel %vm580, %v1658, 0
  %1662 = vmatprep.subr.bf16.mxu0 0
  %1663 = vmatpush1.bf16.msra.mxu0 %v1652
  %1664 = vmatprep.subr.bf16.mxu0 0
  %1665 = vmatpush1.bf16.msra.mxu0 %v1653
  %1666 = vmatprep.subr.bf16.mxu0 0
  %1667 = vmatpush1.bf16.msra.mxu0 0
  %1668 = vmatprep.subr.bf16.mxu0 0
  %1669 = vmatpush1.bf16.msra.mxu0 0
  %1670 = vmatprep.subr.bf16.mxu0 0
  %1671 = vmatpush1.bf16.msra.mxu0 0
  %1672 = vmatprep.subr.bf16.mxu0 0
  %1673 = vmatpush1.bf16.msra.mxu0 0
  %1674 = vmatprep.subr.bf16.mxu0 0
  %1675 = vmatpush1.bf16.msra.mxu0 0
  %1676 = vmatprep.subr.bf16.mxu0 0
  %1677 = vmatpush1.bf16.msra.mxu0 0
  %1678 = vmatprep.subr.bf16.mxu0 0
  %1679 = vmatpush1.bf16.msra.mxu0 0
  %1680 = vmatprep.subr.bf16.mxu0 0
  %1681 = vmatpush1.bf16.msra.mxu0 0
  %1682 = vmatprep.subr.bf16.mxu0 0
  %1683 = vmatpush1.bf16.msra.mxu0 0
  %1684 = vmatprep.subr.bf16.mxu0 0
  %1685 = vmatpush1.bf16.msra.mxu0 0
  %1686 = vmatprep.subr.bf16.mxu0 0
  %1687 = vmatpush1.bf16.msra.mxu0 0
  %1688 = vmatprep.subr.bf16.mxu0 0
  %1689 = vmatpush1.bf16.msra.mxu0 0
  %1690 = vmatprep.subr.bf16.mxu0 0
  %1691 = vmatpush1.bf16.msra.mxu0 0
  %1692 = vmatprep.subr.bf16.mxu0 0
  %1693 = vmatpush1.bf16.msra.mxu0 0
  %1694 = vmatprep.mubr.bf16.mxu0 0
  %1695 = vmatmul.mubr.bf16.gmra.mrb[0].mxu0 %v1660
  %v1696 = vpop.f32.mrb[0].mxu0
  %v1697 = vadd.f32 0.0, %v1696
  %v1698 = vpop.f32.mrb[0].mxu0
  %v1699 = vpop.f32.mrb[0].mxu0
  %v1700 = vpop.f32.mrb[0].mxu0
  %1701 = vdwg.mxu0
  %1703 = vrot.lane.b32.xlu0 %v1561, 96
  %v1704 = vpop.permute.xlu0 %1703
  %v1706 = vsel %vm580, %v1704, 0
  %1708 = vmatprep.subr.bf16.mxu0 0
  %1709 = vmatpush1.bf16.msra.mxu0 %v1654
  %1710 = vmatprep.subr.bf16.mxu0 0
  %1711 = vmatpush1.bf16.msra.mxu0 %v1655
  %1712 = vmatprep.subr.bf16.mxu0 0
  %1713 = vmatpush1.bf16.msra.mxu0 0
  %1714 = vmatprep.subr.bf16.mxu0 0
  %1715 = vmatpush1.bf16.msra.mxu0 0
  %1716 = vmatprep.subr.bf16.mxu0 0
  %1717 = vmatpush1.bf16.msra.mxu0 0
  %1718 = vmatprep.subr.bf16.mxu0 0
  %1719 = vmatpush1.bf16.msra.mxu0 0
  %1720 = vmatprep.subr.bf16.mxu0 0
  %1721 = vmatpush1.bf16.msra.mxu0 0
  %1722 = vmatprep.subr.bf16.mxu0 0
  %1723 = vmatpush1.bf16.msra.mxu0 0
  %1724 = vmatprep.subr.bf16.mxu0 0
  %1725 = vmatpush1.bf16.msra.mxu0 0
  %1726 = vmatprep.subr.bf16.mxu0 0
  %1727 = vmatpush1.bf16.msra.mxu0 0
  %1728 = vmatprep.subr.bf16.mxu0 0
  %1729 = vmatpush1.bf16.msra.mxu0 0
  %1730 = vmatprep.subr.bf16.mxu0 0
  %1731 = vmatpush1.bf16.msra.mxu0 0
  %1732 = vmatprep.subr.bf16.mxu0 0
  %1733 = vmatpush1.bf16.msra.mxu0 0
  %1734 = vmatprep.subr.bf16.mxu0 0
  %1735 = vmatpush1.bf16.msra.mxu0 0
  %1736 = vmatprep.subr.bf16.mxu0 0
  %1737 = vmatpush1.bf16.msra.mxu0 0
  %1738 = vmatprep.subr.bf16.mxu0 0
  %1739 = vmatpush1.bf16.msra.mxu0 0
  %1740 = vmatprep.mubr.bf16.mxu0 0
  %1741 = vmatmul.mubr.bf16.gmra.mrb[0].mxu0 %v1706
  %v1742 = vpop.f32.mrb[0].mxu0
  %v1743 = vadd.f32 0.0, %v1742
  %v1744 = vpop.f32.mrb[0].mxu0
  %v1745 = vpop.f32.mrb[0].mxu0
  %v1746 = vpop.f32.mrb[0].mxu0
  %1747 = vdwg.mxu0
  %v1748 = vmul.f32 %v1604, 0.17677669
  %v1749 = vmul.f32 %v1647, 0.17677669
  %v1750 = vmul.f32 %v1697, 0.17677669
  %v1751 = vmul.f32 %v1743, 0.17677669
  %v1752 = vsel %vm767, %v1748, -inf
  %1753 = vmax.xlane.f32.xlu0 %v1752
  %v1754 = vpop.xlane.xlu0 %1753
  %v1755 = vsel %vm767, %v1749, -inf
  %1756 = vmax.xlane.f32.xlu0 %v1755
  %v1757 = vpop.xlane.xlu0 %1756
  %v1758 = vsel %vm767, %v1750, -inf
  %1759 = vmax.xlane.f32.xlu0 %v1758
  %v1760 = vpop.xlane.xlu0 %1759
  %v1761 = vsel %vm767, %v1751, -inf
  %1762 = vmax.xlane.f32.xlu0 %v1761
  %v1763 = vpop.xlane.xlu0 %1762
  %v1764 = vsub.f32 %v1748, %v1754
  %v1765 = vsub.f32 %v1749, %v1757
  %v1766 = vsub.f32 %v1750, %v1760
  %v1767 = vsub.f32 %v1751, %v1763
  %v1768 = vmul.f32 %v1764, 1.442695
  %v1769 = vpow.pop %v1768
  %v1770 = vmul.f32 %v1765, 1.442695
  %v1771 = vpow.pop %v1770
  %v1772 = vmul.f32 %v1766, 1.442695
  %v1773 = vpow.pop %v1772
  %v1774 = vmul.f32 %v1767, 1.442695
  %v1775 = vpow.pop %v1774
  %v1776 = vsel %vm767, %v1769, 0.0
  %1777 = vadd.xlane.f32.xlu0 %v1776
  %v1778 = vpop.xlane.xlu0 %1777
  %v1779 = vsel %vm767, %v1771, 0.0
  %1780 = vadd.xlane.f32.xlu0 %v1779
  %v1781 = vpop.xlane.xlu0 %1780
  %v1782 = vsel %vm767, %v1773, 0.0
  %1783 = vadd.xlane.f32.xlu0 %v1782
  %v1784 = vpop.xlane.xlu0 %1783
  %v1785 = vsel %vm767, %v1775, 0.0
  %1786 = vadd.xlane.f32.xlu0 %v1785
  %v1787 = vpop.xlane.xlu0 %1786
  %v1788 = vrcp.pop %v1778
  %v1789 = vrcp.pop %v1781
  %v1790 = vrcp.pop %v1784
  %v1791 = vrcp.pop %v1787
  %v1792 = vmul.f32 %v1769, %v1788
  %v1793 = vmul.f32 %v1771, %v1789
  %v1794 = vmul.f32 %v1773, %v1790
  %v1795 = vmul.f32 %v1775, %v1791
  %v1796 = vadd.f32 %v1792, %v1794
  %v1797 = vadd.f32 %v1793, %v1795
  %v1798 = vpack.c.bf16 %v1796, %v1796
  %v1799 = vpack.c.bf16 %v1797, %v1797
  %v1800 = vmul.f32 %v1490, %v819
  %v1801 = vmul.f32 %v1493, %v824
  %v1802 = vpack.c.bf16 %v1800, %v1800
  %v1803 = vpack.c.bf16 %v1801, %v1801
  %v1805 = vsel %vm767, %v1798, 0
  %v1808 = vsel %vm833, %v1802, 0
  %1810 = vmatprep.subr.bf16.mxu0 0
  %1811 = vmatpush1.bf16.msra.mxu0 %v1808
  %1812 = vmatprep.subr.bf16.mxu0 0
  %1813 = vmatpush1.bf16.msra.mxu0 0
  %1814 = vmatprep.subr.bf16.mxu0 0
  %1815 = vmatpush1.bf16.msra.mxu0 0
  %1816 = vmatprep.subr.bf16.mxu0 0
  %1817 = vmatpush1.bf16.msra.mxu0 0
  %1818 = vmatprep.subr.bf16.mxu0 0
  %1819 = vmatpush1.bf16.msra.mxu0 0
  %1820 = vmatprep.subr.bf16.mxu0 0
  %1821 = vmatpush1.bf16.msra.mxu0 0
  %1822 = vmatprep.subr.bf16.mxu0 0
  %1823 = vmatpush1.bf16.msra.mxu0 0
  %1824 = vmatprep.subr.bf16.mxu0 0
  %1825 = vmatpush1.bf16.msra.mxu0 0
  %1826 = vmatprep.subr.bf16.mxu0 0
  %1827 = vmatpush1.bf16.msra.mxu0 0
  %1828 = vmatprep.subr.bf16.mxu0 0
  %1829 = vmatpush1.bf16.msra.mxu0 0
  %1830 = vmatprep.subr.bf16.mxu0 0
  %1831 = vmatpush1.bf16.msra.mxu0 0
  %1832 = vmatprep.subr.bf16.mxu0 0
  %1833 = vmatpush1.bf16.msra.mxu0 0
  %1834 = vmatprep.subr.bf16.mxu0 0
  %1835 = vmatpush1.bf16.msra.mxu0 0
  %1836 = vmatprep.subr.bf16.mxu0 0
  %1837 = vmatpush1.bf16.msra.mxu0 0
  %1838 = vmatprep.subr.bf16.mxu0 0
  %1839 = vmatpush1.bf16.msra.mxu0 0
  %1840 = vmatprep.subr.bf16.mxu0 0
  %1841 = vmatpush1.bf16.msra.mxu0 0
  %1842 = vmatprep.mubr.bf16.mxu0 0
  %1843 = vmatmul.mubr.bf16.gmra.mrb[0].mxu0 %v1805
  %v1844 = vpop.f32.mrb[0].mxu0
  %v1845 = vadd.f32 0.0, %v1844
  %v1846 = vpop.f32.mrb[0].mxu0
  %v1847 = vpop.f32.mrb[0].mxu0
  %v1848 = vpop.f32.mrb[0].mxu0
  %1849 = vdwg.mxu0
  %v1851 = vsel %vm767, %v1799, 0
  %v1854 = vsel %vm833, %v1803, 0
  %1856 = vmatprep.subr.bf16.mxu0 0
  %1857 = vmatpush1.bf16.msra.mxu0 %v1854
  %1858 = vmatprep.subr.bf16.mxu0 0
  %1859 = vmatpush1.bf16.msra.mxu0 0
  %1860 = vmatprep.subr.bf16.mxu0 0
  %1861 = vmatpush1.bf16.msra.mxu0 0
  %1862 = vmatprep.subr.bf16.mxu0 0
  %1863 = vmatpush1.bf16.msra.mxu0 0
  %1864 = vmatprep.subr.bf16.mxu0 0
  %1865 = vmatpush1.bf16.msra.mxu0 0
  %1866 = vmatprep.subr.bf16.mxu0 0
  %1867 = vmatpush1.bf16.msra.mxu0 0
  %1868 = vmatprep.subr.bf16.mxu0 0
  %1869 = vmatpush1.bf16.msra.mxu0 0
  %1870 = vmatprep.subr.bf16.mxu0 0
  %1871 = vmatpush1.bf16.msra.mxu0 0
  %1872 = vmatprep.subr.bf16.mxu0 0
  %1873 = vmatpush1.bf16.msra.mxu0 0
  %1874 = vmatprep.subr.bf16.mxu0 0
  %1875 = vmatpush1.bf16.msra.mxu0 0
  %1876 = vmatprep.subr.bf16.mxu0 0
  %1877 = vmatpush1.bf16.msra.mxu0 0
  %1878 = vmatprep.subr.bf16.mxu0 0
  %1879 = vmatpush1.bf16.msra.mxu0 0
  %1880 = vmatprep.subr.bf16.mxu0 0
  %1881 = vmatpush1.bf16.msra.mxu0 0
  %1882 = vmatprep.subr.bf16.mxu0 0
  %1883 = vmatpush1.bf16.msra.mxu0 0
  %1884 = vmatprep.subr.bf16.mxu0 0
  %1885 = vmatpush1.bf16.msra.mxu0 0
  %1886 = vmatprep.subr.bf16.mxu0 0
  %1887 = vmatpush1.bf16.msra.mxu0 0
  %1888 = vmatprep.mubr.bf16.mxu0 0
  %1889 = vmatmul.mubr.bf16.gmra.mrb[0].mxu0 %v1851
  %v1890 = vpop.f32.mrb[0].mxu0
  %v1891 = vadd.f32 0.0, %v1890
  %v1892 = vpop.f32.mrb[0].mxu0
  %v1893 = vpop.f32.mrb[0].mxu0
  %v1894 = vpop.f32.mrb[0].mxu0
  %1895 = vdwg.mxu0
  %1896 = vmatprep.subr.bf16.mxu0 0
  %1897 = vmatpush1.bf16.msra.mxu0 %v924
  %1898 = vmatprep.subr.bf16.mxu0 0
  %1899 = vmatpush1.bf16.msra.mxu0 0
  %1900 = vmatprep.subr.bf16.mxu0 0
  %1901 = vmatpush1.bf16.msra.mxu0 0
  %1902 = vmatprep.subr.bf16.mxu0 0
  %1903 = vmatpush1.bf16.msra.mxu0 0
  %1904 = vmatprep.subr.bf16.mxu0 0
  %1905 = vmatpush1.bf16.msra.mxu0 0
  %1906 = vmatprep.subr.bf16.mxu0 0
  %1907 = vmatpush1.bf16.msra.mxu0 0
  %1908 = vmatprep.subr.bf16.mxu0 0
  %1909 = vmatpush1.bf16.msra.mxu0 0
  %1910 = vmatprep.subr.bf16.mxu0 0
  %1911 = vmatpush1.bf16.msra.mxu0 0
  %1912 = vmatprep.subr.bf16.mxu0 0
  %1913 = vmatpush1.bf16.msra.mxu0 0
  %1914 = vmatprep.subr.bf16.mxu0 0
  %1915 = vmatpush1.bf16.msra.mxu0 0
  %1916 = vmatprep.subr.bf16.mxu0 0
  %1917 = vmatpush1.bf16.msra.mxu0 0
  %1918 = vmatprep.subr.bf16.mxu0 0
  %1919 = vmatpush1.bf16.msra.mxu0 0
  %1920 = vmatprep.subr.bf16.mxu0 0
  %1921 = vmatpush1.bf16.msra.mxu0 0
  %1922 = vmatprep.subr.bf16.mxu0 0
  %1923 = vmatpush1.bf16.msra.mxu0 0
  %1924 = vmatprep.subr.bf16.mxu0 0
  %1925 = vmatpush1.bf16.msra.mxu0 0
  %1926 = vmatprep.subr.bf16.mxu0 0
  %1927 = vmatpush1.bf16.msra.mxu0 0
  %1928 = vmatprep.mubr.bf16.mxu0 0
  %1929 = vmatmul.mubr.bf16.gmra.mrb[0].mxu0 %v1805
  %v1930 = vpop.f32.mrb[0].mxu0
  %v1931 = vadd.f32 0.0, %v1930
  %v1932 = vpop.f32.mrb[0].mxu0
  %v1933 = vpop.f32.mrb[0].mxu0
  %v1934 = vpop.f32.mrb[0].mxu0
  %1935 = vdwg.mxu0
  %1936 = vmatprep.subr.bf16.mxu0 0
  %1937 = vmatpush1.bf16.msra.mxu0 %v967
  %1938 = vmatprep.subr.bf16.mxu0 0
  %1939 = vmatpush1.bf16.msra.mxu0 0
  %1940 = vmatprep.subr.bf16.mxu0 0
  %1941 = vmatpush1.bf16.msra.mxu0 0
  %1942 = vmatprep.subr.bf16.mxu0 0
  %1943 = vmatpush1.bf16.msra.mxu0 0
  %1944 = vmatprep.subr.bf16.mxu0 0
  %1945 = vmatpush1.bf16.msra.mxu0 0
  %1946 = vmatprep.subr.bf16.mxu0 0
  %1947 = vmatpush1.bf16.msra.mxu0 0
  %1948 = vmatprep.subr.bf16.mxu0 0
  %1949 = vmatpush1.bf16.msra.mxu0 0
  %1950 = vmatprep.subr.bf16.mxu0 0
  %1951 = vmatpush1.bf16.msra.mxu0 0
  %1952 = vmatprep.subr.bf16.mxu0 0
  %1953 = vmatpush1.bf16.msra.mxu0 0
  %1954 = vmatprep.subr.bf16.mxu0 0
  %1955 = vmatpush1.bf16.msra.mxu0 0
  %1956 = vmatprep.subr.bf16.mxu0 0
  %1957 = vmatpush1.bf16.msra.mxu0 0
  %1958 = vmatprep.subr.bf16.mxu0 0
  %1959 = vmatpush1.bf16.msra.mxu0 0
  %1960 = vmatprep.subr.bf16.mxu0 0
  %1961 = vmatpush1.bf16.msra.mxu0 0
  %1962 = vmatprep.subr.bf16.mxu0 0
  %1963 = vmatpush1.bf16.msra.mxu0 0
  %1964 = vmatprep.subr.bf16.mxu0 0
  %1965 = vmatpush1.bf16.msra.mxu0 0
  %1966 = vmatprep.subr.bf16.mxu0 0
  %1967 = vmatpush1.bf16.msra.mxu0 0
  %1968 = vmatprep.mubr.bf16.mxu0 0
  %1969 = vmatmul.mubr.bf16.gmra.mrb[0].mxu0 %v1851
  %v1970 = vpop.f32.mrb[0].mxu0
  %v1971 = vadd.f32 0.0, %v1970
  %v1972 = vpop.f32.mrb[0].mxu0
  %v1973 = vpop.f32.mrb[0].mxu0
  %v1974 = vpop.f32.mrb[0].mxu0
  %1975 = vdwg.mxu0
  %v1976 = vrcp.pop %v1931
  %v1977 = vrcp.pop %v1971
  %1979 = vset.pattern.permute.xlu0 0
  %1980 = vperm.xlu0 %1979, %v1976
  %v1981 = vpop.permute.xlu0 %1980
  %1984 = vset.pattern.permute.xlu0 0
  %1985 = vperm.xlu0 %1984, %v1977
  %v1986 = vpop.permute.xlu0 %1985
  %v1988 = vmul.f32 %v1845, %v1981
  %v1989 = vmul.f32 %v1891, %v1986
  %v1990 = vmax.f32 %v1988, 0.0
  %v1991 = vmax.f32 %v1989, 0.0
  %vm1992 = vcmp.ne.f32.partialorder %v1988, %v1988
  %vm1993 = vcmp.ne.f32.partialorder %v1989, %v1989
  %v1994 = vadd.f32 %v1988, 0.0
  %v1995 = vadd.f32 %v1989, 0.0
  %v1996 = vand.u32 2147483647, %v1988
  %v1997 = vand.u32 2147483647, %v1989
  %v1998 = vsub.f32 0.0, %v1996
  %v1999 = vsub.f32 0.0, %v1997
  %v2000 = vmul.f32 %v1998, 1.442695
  %v2001 = vpow.pop %v2000
  %v2002 = vmul.f32 %v1999, 1.442695
  %v2003 = vpow.pop %v2002
  %v2004 = vadd.f32 %v2001, 1.0
  %v2005 = vlog2.pop %v2004
  %v2006 = vmul.f32 %v2005, 0.6931472
  %v2007 = vmul.f32 -0.5, %v2001
  %v2008 = vadd.f32 %v2007, 1.0
  %v2009 = vmul.f32 %v2008, %v2001
  %v2010 = vand.u32 2147483647, %v2001
  %vm2011 = vcmp.lt.f32.partialorder %v2010, 0.0004427343
  %v2012 = vsel %vm2011, %v2009, %v2006
  %v2013 = vadd.f32 %v2003, 1.0
  %v2014 = vlog2.pop %v2013
  %v2015 = vmul.f32 %v2014, 0.6931472
  %v2016 = vmul.f32 -0.5, %v2003
  %v2017 = vadd.f32 %v2016, 1.0
  %v2018 = vmul.f32 %v2017, %v2003
  %v2019 = vand.u32 2147483647, %v2003
  %vm2020 = vcmp.lt.f32.partialorder %v2019, 0.0004427343
  %v2021 = vsel %vm2020, %v2018, %v2015
  %v2022 = vadd.f32 %v1990, %v2012
  %v2023 = vadd.f32 %v1991, %v2021
  %v2024 = vsel %vm1992, %v1994, %v2022
  %v2025 = vsel %vm1993, %v1995, %v2023
  %v2026 = vadd.f32 %v1255, %v2024
  %v2027 = vadd.f32 %v1258, %v2025
  %v2028 = vsel %vm151, %v2026, 0.0
  %2029 = vadd.xlane.f32.xlu0 %v2028
  %v2030 = vpop.xlane.xlu0 %2029
  %v2031 = vsel %vm151, %v2027, 0.0
  %2032 = vadd.xlane.f32.xlu0 %v2031
  %v2033 = vpop.xlane.xlu0 %2032
  %v2034 = vmul.f32 %v2030, 0.015625
  %v2035 = vmul.f32 %v2033, 0.015625
  %v2036 = vsub.f32 %v2026, %v2034
  %v2037 = vsub.f32 %v2027, %v2035
  %v2038 = vmul.f32 %v2036, %v2036
  %v2039 = vmul.f32 %v2037, %v2037
  %v2040 = vsel %vm151, %v2038, 0.0
  %2041 = vadd.xlane.f32.xlu0 %v2040
  %v2042 = vpop.xlane.xlu0 %2041
  %v2043 = vsel %vm151, %v2039, 0.0
  %2044 = vadd.xlane.f32.xlu0 %v2043
  %v2045 = vpop.xlane.xlu0 %2044
  %v2046 = vmul.f32 %v2042, 0.015625
  %v2047 = vmul.f32 %v2045, 0.015625
  %v2048 = vadd.f32 %v2046, 1e-05
  %v2049 = vadd.f32 %v2047, 1e-05
  %v2050 = vrsqrt.pop %v2048
  %v2051 = vrsqrt.pop %v2049
  %v2052 = vmul.f32 %v2036, %v2050
  %v2053 = vmul.f32 %v2037, %v2051
  %v2054 = vlaneseq
  %v2055 = vshrl.u32 %v2054, 7
  %v2056 = vsub.s32 6, %v2055
  %v2057 = vrot.slane %v16, %v2056
  %v2058 = vmul.f32 %v2052, %v2057
  %v2059 = vmul.f32 %v2053, %v2057
  %v2060 = vlaneseq
  %v2061 = vshrl.u32 %v2060, 7
  %v2062 = vsub.s32 7, %v2061
  %v2063 = vrot.slane %v16, %v2062
  %v2064 = vadd.f32 %v2058, %v2063
  %v2065 = vadd.f32 %v2059, %v2063
  %v2066 = vpack.c.bf16 %v2065, %v2064
  %v2067 = vld [vmem:[%s1 + $0x160] sm:$0xf]
  %v2068 = vld [vmem:[%s1 + $0x164] sm:$0xf]
  %v2069 = vld [vmem:[%s1 + $0x168] sm:$0xf]
  %v2070 = vld [vmem:[%s1 + $0x16c] sm:$0xf]
  %v2071 = vld [vmem:[%s1 + $0x170] sm:$0xf]
  %v2072 = vld [vmem:[%s1 + $0x174] sm:$0xf]
  %v2073 = vld [vmem:[%s1 + $0x178] sm:$0xf]
  %v2074 = vld [vmem:[%s1 + $0x17c] sm:$0xf]
  %v2075 = vlaneseq
  %v2076 = vshrl.u32 %v2075, 7
  %v2077 = vsub.s32 0, %v2076
  %v2078 = vrot.slane %v17, %v2077
  %v2087 = vunpack.c.l.b16 %v2067
  %v2088 = vunpack.c.l.b16 %v2068
  %v2089 = vunpack.c.l.b16 %v2069
  %v2090 = vunpack.c.l.b16 %v2070
  %v2091 = vunpack.c.l.b16 %v2071
  %v2092 = vunpack.c.l.b16 %v2072
  %v2093 = vunpack.c.l.b16 %v2073
  %v2094 = vunpack.c.l.b16 %v2074
  %v2095 = vpack.c.b16 %v2088, %v2087
  %v2096 = vpack.c.b16 %v2090, %v2089
  %v2097 = vpack.c.b16 %v2092, %v2091
  %v2098 = vpack.c.b16 %v2094, %v2093
  %v2104 = vsel %vm151, %v2066, 0
  %2106 = vmatprep.subr.bf16.mxu0 0
  %2107 = vmatpush1.bf16.msra.mxu0 %v2095
  %2108 = vmatprep.subr.bf16.mxu0 0
  %2109 = vmatpush1.bf16.msra.mxu0 %v2096
  %2110 = vmatprep.subr.bf16.mxu0 0
  %2111 = vmatpush1.bf16.msra.mxu0 %v2097
  %2112 = vmatprep.subr.bf16.mxu0 0
  %2113 = vmatpush1.bf16.msra.mxu0 %v2098
  %2114 = vmatprep.subr.bf16.mxu0 0
  %2115 = vmatpush1.bf16.msra.mxu0 0
  %2116 = vmatprep.subr.bf16.mxu0 0
  %2117 = vmatpush1.bf16.msra.mxu0 0
  %2118 = vmatprep.subr.bf16.mxu0 0
  %2119 = vmatpush1.bf16.msra.mxu0 0
  %2120 = vmatprep.subr.bf16.mxu0 0
  %2121 = vmatpush1.bf16.msra.mxu0 0
  %2122 = vmatprep.subr.bf16.mxu0 0
  %2123 = vmatpush1.bf16.msra.mxu0 0
  %2124 = vmatprep.subr.bf16.mxu0 0
  %2125 = vmatpush1.bf16.msra.mxu0 0
  %2126 = vmatprep.subr.bf16.mxu0 0
  %2127 = vmatpush1.bf16.msra.mxu0 0
  %2128 = vmatprep.subr.bf16.mxu0 0
  %2129 = vmatpush1.bf16.msra.mxu0 0
  %2130 = vmatprep.subr.bf16.mxu0 0
  %2131 = vmatpush1.bf16.msra.mxu0 0
  %2132 = vmatprep.subr.bf16.mxu0 0
  %2133 = vmatpush1.bf16.msra.mxu0 0
  %2134 = vmatprep.subr.bf16.mxu0 0
  %2135 = vmatpush1.bf16.msra.mxu0 0
  %2136 = vmatprep.subr.bf16.mxu0 0
  %2137 = vmatpush1.bf16.msra.mxu0 0
  %2138 = vmatprep.mubr.bf16.mxu0 0
  %2139 = vmatmul.mubr.bf16.gmra.mrb[0].mxu0 %v2104
  %v2140 = vpop.f32.mrb[0].mxu0
  %v2141 = vadd.f32 %v2078, %v2140
  %v2142 = vpop.f32.mrb[0].mxu0
  %v2143 = vpop.f32.mrb[0].mxu0
  %v2144 = vadd.f32 %v2078, %v2143
  %v2145 = vpop.f32.mrb[0].mxu0
  %2146 = vdwg.mxu0
  %v2147 = vpack.c.bf16 %v2144, %v2141
  %v2148 = vld [vmem:[%s1 + $0x180] sm:$0xf]
  %v2149 = vld [vmem:[%s1 + $0x184] sm:$0xf]
  %v2150 = vld [vmem:[%s1 + $0x188] sm:$0xf]
  %v2151 = vld [vmem:[%s1 + $0x18c] sm:$0xf]
  %v2152 = vld [vmem:[%s1 + $0x190] sm:$0xf]
  %v2153 = vld [vmem:[%s1 + $0x194] sm:$0xf]
  %v2154 = vld [vmem:[%s1 + $0x198] sm:$0xf]
  %v2155 = vld [vmem:[%s1 + $0x19c] sm:$0xf]
  %v2156 = vlaneseq
  %v2157 = vshrl.u32 %v2156, 7
  %v2158 = vsub.s32 1, %v2157
  %v2159 = vrot.slane %v17, %v2158
  %v2168 = vunpack.c.l.b16 %v2148
  %v2169 = vunpack.c.l.b16 %v2149
  %v2170 = vunpack.c.l.b16 %v2150
  %v2171 = vunpack.c.l.b16 %v2151
  %v2172 = vunpack.c.l.b16 %v2152
  %v2173 = vunpack.c.l.b16 %v2153
  %v2174 = vunpack.c.l.b16 %v2154
  %v2175 = vunpack.c.l.b16 %v2155
  %v2176 = vpack.c.b16 %v2169, %v2168
  %v2177 = vpack.c.b16 %v2171, %v2170
  %v2178 = vpack.c.b16 %v2173, %v2172
  %v2179 = vpack.c.b16 %v2175, %v2174
  %v2185 = vsel %vm151, %v2147, 0
  %2187 = vmatprep.subr.bf16.mxu0 0
  %2188 = vmatpush1.bf16.msra.mxu0 %v2176
  %2189 = vmatprep.subr.bf16.mxu0 0
  %2190 = vmatpush1.bf16.msra.mxu0 %v2177
  %2191 = vmatprep.subr.bf16.mxu0 0
  %2192 = vmatpush1.bf16.msra.mxu0 %v2178
  %2193 = vmatprep.subr.bf16.mxu0 0
  %2194 = vmatpush1.bf16.msra.mxu0 %v2179
  %2195 = vmatprep.subr.bf16.mxu0 0
  %2196 = vmatpush1.bf16.msra.mxu0 0
  %2197 = vmatprep.subr.bf16.mxu0 0
  %2198 = vmatpush1.bf16.msra.mxu0 0
  %2199 = vmatprep.subr.bf16.mxu0 0
  %2200 = vmatpush1.bf16.msra.mxu0 0
  %2201 = vmatprep.subr.bf16.mxu0 0
  %2202 = vmatpush1.bf16.msra.mxu0 0
  %2203 = vmatprep.subr.bf16.mxu0 0
  %2204 = vmatpush1.bf16.msra.mxu0 0
  %2205 = vmatprep.subr.bf16.mxu0 0
  %2206 = vmatpush1.bf16.msra.mxu0 0
  %2207 = vmatprep.subr.bf16.mxu0 0
  %2208 = vmatpush1.bf16.msra.mxu0 0
  %2209 = vmatprep.subr.bf16.mxu0 0
  %2210 = vmatpush1.bf16.msra.mxu0 0
  %2211 = vmatprep.subr.bf16.mxu0 0
  %2212 = vmatpush1.bf16.msra.mxu0 0
  %2213 = vmatprep.subr.bf16.mxu0 0
  %2214 = vmatpush1.bf16.msra.mxu0 0
  %2215 = vmatprep.subr.bf16.mxu0 0
  %2216 = vmatpush1.bf16.msra.mxu0 0
  %2217 = vmatprep.subr.bf16.mxu0 0
  %2218 = vmatpush1.bf16.msra.mxu0 0
  %2219 = vmatprep.mubr.bf16.mxu0 0
  %2220 = vmatmul.mubr.bf16.gmra.mrb[0].mxu0 %v2185
  %v2221 = vpop.f32.mrb[0].mxu0
  %v2222 = vadd.f32 %v2159, %v2221
  %v2223 = vpop.f32.mrb[0].mxu0
  %v2224 = vpop.f32.mrb[0].mxu0
  %v2225 = vadd.f32 %v2159, %v2224
  %v2226 = vpop.f32.mrb[0].mxu0
  %2227 = vdwg.mxu0
  %v2228 = vpack.c.bf16 %v2225, %v2222
  %v2229 = vld [vmem:[%s1 + $0x1a0] sm:$0xf]
  %v2230 = vld [vmem:[%s1 + $0x1a4] sm:$0xf]
  %v2231 = vld [vmem:[%s1 + $0x1a8] sm:$0xf]
  %v2232 = vld [vmem:[%s1 + $0x1ac] sm:$0xf]
  %v2233 = vld [vmem:[%s1 + $0x1b0] sm:$0xf]
  %v2234 = vld [vmem:[%s1 + $0x1b4] sm:$0xf]
  %v2235 = vld [vmem:[%s1 + $0x1b8] sm:$0xf]
  %v2236 = vld [vmem:[%s1 + $0x1bc] sm:$0xf]
  %v2237 = vlaneseq
  %v2238 = vshrl.u32 %v2237, 7
  %v2239 = vsub.s32 2, %v2238
  %v2240 = vrot.slane %v17, %v2239
  %v2249 = vunpack.c.l.b16 %v2229
  %v2250 = vunpack.c.l.b16 %v2230
  %v2251 = vunpack.c.l.b16 %v2231
  %v2252 = vunpack.c.l.b16 %v2232
  %v2253 = vunpack.c.l.b16 %v2233
  %v2254 = vunpack.c.l.b16 %v2234
  %v2255 = vunpack.c.l.b16 %v2235
  %v2256 = vunpack.c.l.b16 %v2236
  %v2257 = vpack.c.b16 %v2250, %v2249
  %v2258 = vpack.c.b16 %v2252, %v2251
  %v2259 = vpack.c.b16 %v2254, %v2253
  %v2260 = vpack.c.b16 %v2256, %v2255
  %v2266 = vsel %vm151, %v2228, 0
  %2268 = vmatprep.subr.bf16.mxu0 0
  %2269 = vmatpush1.bf16.msra.mxu0 %v2257
  %2270 = vmatprep.subr.bf16.mxu0 0
  %2271 = vmatpush1.bf16.msra.mxu0 %v2258
  %2272 = vmatprep.subr.bf16.mxu0 0
  %2273 = vmatpush1.bf16.msra.mxu0 %v2259
  %2274 = vmatprep.subr.bf16.mxu0 0
  %2275 = vmatpush1.bf16.msra.mxu0 %v2260
  %2276 = vmatprep.subr.bf16.mxu0 0
  %2277 = vmatpush1.bf16.msra.mxu0 0
  %2278 = vmatprep.subr.bf16.mxu0 0
  %2279 = vmatpush1.bf16.msra.mxu0 0
  %2280 = vmatprep.subr.bf16.mxu0 0
  %2281 = vmatpush1.bf16.msra.mxu0 0
  %2282 = vmatprep.subr.bf16.mxu0 0
  %2283 = vmatpush1.bf16.msra.mxu0 0
  %2284 = vmatprep.subr.bf16.mxu0 0
  %2285 = vmatpush1.bf16.msra.mxu0 0
  %2286 = vmatprep.subr.bf16.mxu0 0
  %2287 = vmatpush1.bf16.msra.mxu0 0
  %2288 = vmatprep.subr.bf16.mxu0 0
  %2289 = vmatpush1.bf16.msra.mxu0 0
  %2290 = vmatprep.subr.bf16.mxu0 0
  %2291 = vmatpush1.bf16.msra.mxu0 0
  %2292 = vmatprep.subr.bf16.mxu0 0
  %2293 = vmatpush1.bf16.msra.mxu0 0
  %2294 = vmatprep.subr.bf16.mxu0 0
  %2295 = vmatpush1.bf16.msra.mxu0 0
  %2296 = vmatprep.subr.bf16.mxu0 0
  %2297 = vmatpush1.bf16.msra.mxu0 0
  %2298 = vmatprep.subr.bf16.mxu0 0
  %2299 = vmatpush1.bf16.msra.mxu0 0
  %2300 = vmatprep.mubr.bf16.mxu0 0
  %2301 = vmatmul.mubr.bf16.gmra.mrb[0].mxu0 %v2266
  %v2302 = vpop.f32.mrb[0].mxu0
  %v2303 = vadd.f32 %v2240, %v2302
  %v2304 = vpop.f32.mrb[0].mxu0
  %v2305 = vpop.f32.mrb[0].mxu0
  %v2306 = vadd.f32 %v2240, %v2305
  %v2307 = vpop.f32.mrb[0].mxu0
  %2308 = vdwg.mxu0
  %v2309 = vld [vmem:[%s1 + $0x1c0] sm:$0xf]
  %v2310 = vld [vmem:[%s1 + $0x1c4] sm:$0xf]
  %v2311 = vld [vmem:[%s1 + $0x1c8] sm:$0xf]
  %v2312 = vld [vmem:[%s1 + $0x1cc] sm:$0xf]
  %v2313 = vld [vmem:[%s1 + $0x1d0] sm:$0xf]
  %v2314 = vld [vmem:[%s1 + $0x1d4] sm:$0xf]
  %v2315 = vld [vmem:[%s1 + $0x1d8] sm:$0xf]
  %v2316 = vld [vmem:[%s1 + $0x1dc] sm:$0xf]
  %v2317 = vlaneseq
  %v2318 = vshrl.u32 %v2317, 7
  %v2319 = vsub.s32 3, %v2318
  %v2320 = vrot.slane %v17, %v2319
  %v2329 = vunpack.c.l.b16 %v2309
  %v2330 = vunpack.c.l.b16 %v2310
  %v2331 = vunpack.c.l.b16 %v2311
  %v2332 = vunpack.c.l.b16 %v2312
  %v2333 = vunpack.c.l.b16 %v2313
  %v2334 = vunpack.c.l.b16 %v2314
  %v2335 = vunpack.c.l.b16 %v2315
  %v2336 = vunpack.c.l.b16 %v2316
  %v2337 = vpack.c.b16 %v2330, %v2329
  %v2338 = vpack.c.b16 %v2332, %v2331
  %v2339 = vpack.c.b16 %v2334, %v2333
  %v2340 = vpack.c.b16 %v2336, %v2335
  %2345 = vmatprep.subr.bf16.mxu0 0
  %2346 = vmatpush1.bf16.msra.mxu0 %v2337
  %2347 = vmatprep.subr.bf16.mxu0 0
  %2348 = vmatpush1.bf16.msra.mxu0 %v2338
  %2349 = vmatprep.subr.bf16.mxu0 0
  %2350 = vmatpush1.bf16.msra.mxu0 %v2339
  %2351 = vmatprep.subr.bf16.mxu0 0
  %2352 = vmatpush1.bf16.msra.mxu0 %v2340
  %2353 = vmatprep.subr.bf16.mxu0 0
  %2354 = vmatpush1.bf16.msra.mxu0 0
  %2355 = vmatprep.subr.bf16.mxu0 0
  %2356 = vmatpush1.bf16.msra.mxu0 0
  %2357 = vmatprep.subr.bf16.mxu0 0
  %2358 = vmatpush1.bf16.msra.mxu0 0
  %2359 = vmatprep.subr.bf16.mxu0 0
  %2360 = vmatpush1.bf16.msra.mxu0 0
  %2361 = vmatprep.subr.bf16.mxu0 0
  %2362 = vmatpush1.bf16.msra.mxu0 0
  %2363 = vmatprep.subr.bf16.mxu0 0
  %2364 = vmatpush1.bf16.msra.mxu0 0
  %2365 = vmatprep.subr.bf16.mxu0 0
  %2366 = vmatpush1.bf16.msra.mxu0 0
  %2367 = vmatprep.subr.bf16.mxu0 0
  %2368 = vmatpush1.bf16.msra.mxu0 0
  %2369 = vmatprep.subr.bf16.mxu0 0
  %2370 = vmatpush1.bf16.msra.mxu0 0
  %2371 = vmatprep.subr.bf16.mxu0 0
  %2372 = vmatpush1.bf16.msra.mxu0 0
  %2373 = vmatprep.subr.bf16.mxu0 0
  %2374 = vmatpush1.bf16.msra.mxu0 0
  %2375 = vmatprep.subr.bf16.mxu0 0
  %2376 = vmatpush1.bf16.msra.mxu0 0
  %2377 = vmatprep.mubr.bf16.mxu0 0
  %2378 = vmatmul.mubr.bf16.gmra.mrb[0].mxu0 %v2266
  %v2379 = vpop.f32.mrb[0].mxu0
  %v2380 = vadd.f32 %v2320, %v2379
  %v2381 = vpop.f32.mrb[0].mxu0
  %v2382 = vpop.f32.mrb[0].mxu0
  %v2383 = vadd.f32 %v2320, %v2382
  %v2384 = vpop.f32.mrb[0].mxu0
  %2385 = vdwg.mxu0
  %v2386 = vld [vmem:[%s1 + $0x1e0] sm:$0xf]
  %v2387 = vld [vmem:[%s1 + $0x1e4] sm:$0xf]
  %v2388 = vld [vmem:[%s1 + $0x1e8] sm:$0xf]
  %v2389 = vld [vmem:[%s1 + $0x1ec] sm:$0xf]
  %v2390 = vld [vmem:[%s1 + $0x1f0] sm:$0xf]
  %v2391 = vld [vmem:[%s1 + $0x1f4] sm:$0xf]
  %v2392 = vld [vmem:[%s1 + $0x1f8] sm:$0xf]
  %v2393 = vld [vmem:[%s1 + $0x1fc] sm:$0xf]
  %v2394 = vlaneseq
  %v2395 = vshrl.u32 %v2394, 7
  %v2396 = vsub.s32 4, %v2395
  %v2397 = vrot.slane %v17, %v2396
  %v2406 = vunpack.c.l.b16 %v2386
  %v2407 = vunpack.c.l.b16 %v2387
  %v2408 = vunpack.c.l.b16 %v2388
  %v2409 = vunpack.c.l.b16 %v2389
  %v2410 = vunpack.c.l.b16 %v2390
  %v2411 = vunpack.c.l.b16 %v2391
  %v2412 = vunpack.c.l.b16 %v2392
  %v2413 = vunpack.c.l.b16 %v2393
  %v2414 = vpack.c.b16 %v2407, %v2406
  %v2415 = vpack.c.b16 %v2409, %v2408
  %v2416 = vpack.c.b16 %v2411, %v2410
  %v2417 = vpack.c.b16 %v2413, %v2412
  %2422 = vmatprep.subr.bf16.mxu0 0
  %2423 = vmatpush1.bf16.msra.mxu0 %v2414
  %2424 = vmatprep.subr.bf16.mxu0 0
  %2425 = vmatpush1.bf16.msra.mxu0 %v2415
  %2426 = vmatprep.subr.bf16.mxu0 0
  %2427 = vmatpush1.bf16.msra.mxu0 %v2416
  %2428 = vmatprep.subr.bf16.mxu0 0
  %2429 = vmatpush1.bf16.msra.mxu0 %v2417
  %2430 = vmatprep.subr.bf16.mxu0 0
  %2431 = vmatpush1.bf16.msra.mxu0 0
  %2432 = vmatprep.subr.bf16.mxu0 0
  %2433 = vmatpush1.bf16.msra.mxu0 0
  %2434 = vmatprep.subr.bf16.mxu0 0
  %2435 = vmatpush1.bf16.msra.mxu0 0
  %2436 = vmatprep.subr.bf16.mxu0 0
  %2437 = vmatpush1.bf16.msra.mxu0 0
  %2438 = vmatprep.subr.bf16.mxu0 0
  %2439 = vmatpush1.bf16.msra.mxu0 0
  %2440 = vmatprep.subr.bf16.mxu0 0
  %2441 = vmatpush1.bf16.msra.mxu0 0
  %2442 = vmatprep.subr.bf16.mxu0 0
  %2443 = vmatpush1.bf16.msra.mxu0 0
  %2444 = vmatprep.subr.bf16.mxu0 0
  %2445 = vmatpush1.bf16.msra.mxu0 0
  %2446 = vmatprep.subr.bf16.mxu0 0
  %2447 = vmatpush1.bf16.msra.mxu0 0
  %2448 = vmatprep.subr.bf16.mxu0 0
  %2449 = vmatpush1.bf16.msra.mxu0 0
  %2450 = vmatprep.subr.bf16.mxu0 0
  %2451 = vmatpush1.bf16.msra.mxu0 0
  %2452 = vmatprep.subr.bf16.mxu0 0
  %2453 = vmatpush1.bf16.msra.mxu0 0
  %2454 = vmatprep.mubr.bf16.mxu0 0
  %2455 = vmatmul.mubr.bf16.gmra.mrb[0].mxu0 %v2266
  %v2456 = vpop.f32.mrb[0].mxu0
  %v2457 = vadd.f32 %v2397, %v2456
  %v2458 = vpop.f32.mrb[0].mxu0
  %v2459 = vpop.f32.mrb[0].mxu0
  %v2460 = vadd.f32 %v2397, %v2459
  %v2461 = vpop.f32.mrb[0].mxu0
  %2462 = vdwg.mxu0
  %2463 = vxpose.xlu0.b32.start [1/16] %v2380, 128
  %2464 = vxpose.xlu0.b32.cont [2/16] 0.0, 128
  %2465 = vxpose.xlu0.b32.cont [3/16] 0.0, 128
  %2466 = vxpose.xlu0.b32.cont [4/16] 0.0, 128
  %2467 = vxpose.xlu0.b32.cont [5/16] 0.0, 128
  %2468 = vxpose.xlu0.b32.cont [6/16] 0.0, 128
  %2469 = vxpose.xlu0.b32.cont [7/16] 0.0, 128
  %2470 = vxpose.xlu0.b32.cont [8/16] 0.0, 128
  %2471 = vxpose.xlu0.b32.cont [9/16] 0.0, 128
  %2472 = vxpose.xlu0.b32.cont [10/16] 0.0, 128
  %2473 = vxpose.xlu0.b32.cont [11/16] 0.0, 128
  %2474 = vxpose.xlu0.b32.cont [12/16] 0.0, 128
  %2475 = vxpose.xlu0.b32.cont [13/16] 0.0, 128
  %2476 = vxpose.xlu0.b32.cont [14/16] 0.0, 128
  %2477 = vxpose.xlu0.b32.cont [15/16] 0.0, 128
  %2478 = vxpose.xlu0.b32.end [16/16] 0.0, 128
  %v2479 = vpop.trf.xlu0
  %v2480 = vpop.trf.xlu0
  %v2481 = vpop.trf.xlu0
  %v2482 = vpop.trf.xlu0
  %v2483 = vpop.trf.xlu0
  %v2484 = vpop.trf.xlu0
  %v2485 = vpop.trf.xlu0
  %v2486 = vpop.trf.xlu0
  %v2487 = vpop.trf.xlu0
  %v2488 = vpop.trf.xlu0
  %v2489 = vpop.trf.xlu0
  %v2490 = vpop.trf.xlu0
  %v2491 = vpop.trf.xlu0
  %v2492 = vpop.trf.xlu0
  %v2493 = vpop.trf.xlu0
  %v2494 = vpop.trf.xlu0
  %2495 = vxpose.xlu0.b32.start [1/16] %v2383, 128
  %2496 = vxpose.xlu0.b32.cont [2/16] 0.0, 128
  %2497 = vxpose.xlu0.b32.cont [3/16] 0.0, 128
  %2498 = vxpose.xlu0.b32.cont [4/16] 0.0, 128
  %2499 = vxpose.xlu0.b32.cont [5/16] 0.0, 128
  %2500 = vxpose.xlu0.b32.cont [6/16] 0.0, 128
  %2501 = vxpose.xlu0.b32.cont [7/16] 0.0, 128
  %2502 = vxpose.xlu0.b32.cont [8/16] 0.0, 128
  %2503 = vxpose.xlu0.b32.cont [9/16] 0.0, 128
  %2504 = vxpose.xlu0.b32.cont [10/16] 0.0, 128
  %2505 = vxpose.xlu0.b32.cont [11/16] 0.0, 128
  %2506 = vxpose.xlu0.b32.cont [12/16] 0.0, 128
  %2507 = vxpose.xlu0.b32.cont [13/16] 0.0, 128
  %2508 = vxpose.xlu0.b32.cont [14/16] 0.0, 128
  %2509 = vxpose.xlu0.b32.cont [15/16] 0.0, 128
  %2510 = vxpose.xlu0.b32.end [16/16] 0.0, 128
  %v2511 = vpop.trf.xlu0
  %v2512 = vpop.trf.xlu0
  %v2513 = vpop.trf.xlu0
  %v2514 = vpop.trf.xlu0
  %v2515 = vpop.trf.xlu0
  %v2516 = vpop.trf.xlu0
  %v2517 = vpop.trf.xlu0
  %v2518 = vpop.trf.xlu0
  %v2519 = vpop.trf.xlu0
  %v2520 = vpop.trf.xlu0
  %v2521 = vpop.trf.xlu0
  %v2522 = vpop.trf.xlu0
  %v2523 = vpop.trf.xlu0
  %v2524 = vpop.trf.xlu0
  %v2525 = vpop.trf.xlu0
  %v2526 = vpop.trf.xlu0
  %v2527 = vpack.c.bf16 %v2303, %v2303
  %v2528 = vpack.c.bf16 %v2306, %v2306
  %v2529 = vpack.c.bf16 %v2480, %v2479
  %v2530 = vpack.c.bf16 %v2482, %v2481
  %v2531 = vpack.c.bf16 %v2512, %v2511
  %v2532 = vpack.c.bf16 %v2514, %v2513
  %v2534 = vsel %vm580, %v2527, 0
  %2536 = vmatprep.subr.bf16.mxu0 0
  %2537 = vmatpush1.bf16.msra.mxu0 %v2529
  %2538 = vmatprep.subr.bf16.mxu0 0
  %2539 = vmatpush1.bf16.msra.mxu0 %v2530
  %2540 = vmatprep.subr.bf16.mxu0 0
  %2541 = vmatpush1.bf16.msra.mxu0 0
  %2542 = vmatprep.subr.bf16.mxu0 0
  %2543 = vmatpush1.bf16.msra.mxu0 0
  %2544 = vmatprep.subr.bf16.mxu0 0
  %2545 = vmatpush1.bf16.msra.mxu0 0
  %2546 = vmatprep.subr.bf16.mxu0 0
  %2547 = vmatpush1.bf16.msra.mxu0 0
  %2548 = vmatprep.subr.bf16.mxu0 0
  %2549 = vmatpush1.bf16.msra.mxu0 0
  %2550 = vmatprep.subr.bf16.mxu0 0
  %2551 = vmatpush1.bf16.msra.mxu0 0
  %2552 = vmatprep.subr.bf16.mxu0 0
  %2553 = vmatpush1.bf16.msra.mxu0 0
  %2554 = vmatprep.subr.bf16.mxu0 0
  %2555 = vmatpush1.bf16.msra.mxu0 0
  %2556 = vmatprep.subr.bf16.mxu0 0
  %2557 = vmatpush1.bf16.msra.mxu0 0
  %2558 = vmatprep.subr.bf16.mxu0 0
  %2559 = vmatpush1.bf16.msra.mxu0 0
  %2560 = vmatprep.subr.bf16.mxu0 0
  %2561 = vmatpush1.bf16.msra.mxu0 0
  %2562 = vmatprep.subr.bf16.mxu0 0
  %2563 = vmatpush1.bf16.msra.mxu0 0
  %2564 = vmatprep.subr.bf16.mxu0 0
  %2565 = vmatpush1.bf16.msra.mxu0 0
  %2566 = vmatprep.subr.bf16.mxu0 0
  %2567 = vmatpush1.bf16.msra.mxu0 0
  %2568 = vmatprep.mubr.bf16.mxu0 0
  %2569 = vmatmul.mubr.bf16.gmra.mrb[0].mxu0 %v2534
  %v2570 = vpop.f32.mrb[0].mxu0
  %v2571 = vadd.f32 0.0, %v2570
  %v2572 = vpop.f32.mrb[0].mxu0
  %v2573 = vpop.f32.mrb[0].mxu0
  %v2574 = vpop.f32.mrb[0].mxu0
  %2575 = vdwg.mxu0
  %v2577 = vsel %vm580, %v2528, 0
  %2579 = vmatprep.subr.bf16.mxu0 0
  %2580 = vmatpush1.bf16.msra.mxu0 %v2531
  %2581 = vmatprep.subr.bf16.mxu0 0
  %2582 = vmatpush1.bf16.msra.mxu0 %v2532
  %2583 = vmatprep.subr.bf16.mxu0 0
  %2584 = vmatpush1.bf16.msra.mxu0 0
  %2585 = vmatprep.subr.bf16.mxu0 0
  %2586 = vmatpush1.bf16.msra.mxu0 0
  %2587 = vmatprep.subr.bf16.mxu0 0
  %2588 = vmatpush1.bf16.msra.mxu0 0
  %2589 = vmatprep.subr.bf16.mxu0 0
  %2590 = vmatpush1.bf16.msra.mxu0 0
  %2591 = vmatprep.subr.bf16.mxu0 0
  %2592 = vmatpush1.bf16.msra.mxu0 0
  %2593 = vmatprep.subr.bf16.mxu0 0
  %2594 = vmatpush1.bf16.msra.mxu0 0
  %2595 = vmatprep.subr.bf16.mxu0 0
  %2596 = vmatpush1.bf16.msra.mxu0 0
  %2597 = vmatprep.subr.bf16.mxu0 0
  %2598 = vmatpush1.bf16.msra.mxu0 0
  %2599 = vmatprep.subr.bf16.mxu0 0
  %2600 = vmatpush1.bf16.msra.mxu0 0
  %2601 = vmatprep.subr.bf16.mxu0 0
  %2602 = vmatpush1.bf16.msra.mxu0 0
  %2603 = vmatprep.subr.bf16.mxu0 0
  %2604 = vmatpush1.bf16.msra.mxu0 0
  %2605 = vmatprep.subr.bf16.mxu0 0
  %2606 = vmatpush1.bf16.msra.mxu0 0
  %2607 = vmatprep.subr.bf16.mxu0 0
  %2608 = vmatpush1.bf16.msra.mxu0 0
  %2609 = vmatprep.subr.bf16.mxu0 0
  %2610 = vmatpush1.bf16.msra.mxu0 0
  %2611 = vmatprep.mubr.bf16.mxu0 0
  %2612 = vmatmul.mubr.bf16.gmra.mrb[0].mxu0 %v2577
  %v2613 = vpop.f32.mrb[0].mxu0
  %v2614 = vadd.f32 0.0, %v2613
  %v2615 = vpop.f32.mrb[0].mxu0
  %v2616 = vpop.f32.mrb[0].mxu0
  %v2617 = vpop.f32.mrb[0].mxu0
  %2618 = vdwg.mxu0
  %v2619 = vpack.c.bf16 %v2484, %v2483
  %v2620 = vpack.c.bf16 %v2486, %v2485
  %v2621 = vpack.c.bf16 %v2516, %v2515
  %v2622 = vpack.c.bf16 %v2518, %v2517
  %2624 = vrot.lane.b32.xlu0 %v2527, 96
  %v2625 = vpop.permute.xlu0 %2624
  %v2627 = vsel %vm580, %v2625, 0
  %2629 = vmatprep.subr.bf16.mxu0 0
  %2630 = vmatpush1.bf16.msra.mxu0 %v2619
  %2631 = vmatprep.subr.bf16.mxu0 0
  %2632 = vmatpush1.bf16.msra.mxu0 %v2620
  %2633 = vmatprep.subr.bf16.mxu0 0
  %2634 = vmatpush1.bf16.msra.mxu0 0
  %2635 = vmatprep.subr.bf16.mxu0 0
  %2636 = vmatpush1.bf16.msra.mxu0 0
  %2637 = vmatprep.subr.bf16.mxu0 0
  %2638 = vmatpush1.bf16.msra.mxu0 0
  %2639 = vmatprep.subr.bf16.mxu0 0
  %2640 = vmatpush1.bf16.msra.mxu0 0
  %2641 = vmatprep.subr.bf16.mxu0 0
  %2642 = vmatpush1.bf16.msra.mxu0 0
  %2643 = vmatprep.subr.bf16.mxu0 0
  %2644 = vmatpush1.bf16.msra.mxu0 0
  %2645 = vmatprep.subr.bf16.mxu0 0
  %2646 = vmatpush1.bf16.msra.mxu0 0
  %2647 = vmatprep.subr.bf16.mxu0 0
  %2648 = vmatpush1.bf16.msra.mxu0 0
  %2649 = vmatprep.subr.bf16.mxu0 0
  %2650 = vmatpush1.bf16.msra.mxu0 0
  %2651 = vmatprep.subr.bf16.mxu0 0
  %2652 = vmatpush1.bf16.msra.mxu0 0
  %2653 = vmatprep.subr.bf16.mxu0 0
  %2654 = vmatpush1.bf16.msra.mxu0 0
  %2655 = vmatprep.subr.bf16.mxu0 0
  %2656 = vmatpush1.bf16.msra.mxu0 0
  %2657 = vmatprep.subr.bf16.mxu0 0
  %2658 = vmatpush1.bf16.msra.mxu0 0
  %2659 = vmatprep.subr.bf16.mxu0 0
  %2660 = vmatpush1.bf16.msra.mxu0 0
  %2661 = vmatprep.mubr.bf16.mxu0 0
  %2662 = vmatmul.mubr.bf16.gmra.mrb[0].mxu0 %v2627
  %v2663 = vpop.f32.mrb[0].mxu0
  %v2664 = vadd.f32 0.0, %v2663
  %v2665 = vpop.f32.mrb[0].mxu0
  %v2666 = vpop.f32.mrb[0].mxu0
  %v2667 = vpop.f32.mrb[0].mxu0
  %2668 = vdwg.mxu0
  %2670 = vrot.lane.b32.xlu0 %v2528, 96
  %v2671 = vpop.permute.xlu0 %2670
  %v2673 = vsel %vm580, %v2671, 0
  %2675 = vmatprep.subr.bf16.mxu0 0
  %2676 = vmatpush1.bf16.msra.mxu0 %v2621
  %2677 = vmatprep.subr.bf16.mxu0 0
  %2678 = vmatpush1.bf16.msra.mxu0 %v2622
  %2679 = vmatprep.subr.bf16.mxu0 0
  %2680 = vmatpush1.bf16.msra.mxu0 0
  %2681 = vmatprep.subr.bf16.mxu0 0
  %2682 = vmatpush1.bf16.msra.mxu0 0
  %2683 = vmatprep.subr.bf16.mxu0 0
  %2684 = vmatpush1.bf16.msra.mxu0 0
  %2685 = vmatprep.subr.bf16.mxu0 0
  %2686 = vmatpush1.bf16.msra.mxu0 0
  %2687 = vmatprep.subr.bf16.mxu0 0
  %2688 = vmatpush1.bf16.msra.mxu0 0
  %2689 = vmatprep.subr.bf16.mxu0 0
  %2690 = vmatpush1.bf16.msra.mxu0 0
  %2691 = vmatprep.subr.bf16.mxu0 0
  %2692 = vmatpush1.bf16.msra.mxu0 0
  %2693 = vmatprep.subr.bf16.mxu0 0
  %2694 = vmatpush1.bf16.msra.mxu0 0
  %2695 = vmatprep.subr.bf16.mxu0 0
  %2696 = vmatpush1.bf16.msra.mxu0 0
  %2697 = vmatprep.subr.bf16.mxu0 0
  %2698 = vmatpush1.bf16.msra.mxu0 0
  %2699 = vmatprep.subr.bf16.mxu0 0
  %2700 = vmatpush1.bf16.msra.mxu0 0
  %2701 = vmatprep.subr.bf16.mxu0 0
  %2702 = vmatpush1.bf16.msra.mxu0 0
  %2703 = vmatprep.subr.bf16.mxu0 0
  %2704 = vmatpush1.bf16.msra.mxu0 0
  %2705 = vmatprep.subr.bf16.mxu0 0
  %2706 = vmatpush1.bf16.msra.mxu0 0
  %2707 = vmatprep.mubr.bf16.mxu0 0
  %2708 = vmatmul.mubr.bf16.gmra.mrb[0].mxu0 %v2673
  %v2709 = vpop.f32.mrb[0].mxu0
  %v2710 = vadd.f32 0.0, %v2709
  %v2711 = vpop.f32.mrb[0].mxu0
  %v2712 = vpop.f32.mrb[0].mxu0
  %v2713 = vpop.f32.mrb[0].mxu0
  %2714 = vdwg.mxu0
  %v2715 = vmul.f32 %v2571, 0.17677669
  %v2716 = vmul.f32 %v2614, 0.17677669
  %v2717 = vmul.f32 %v2664, 0.17677669
  %v2718 = vmul.f32 %v2710, 0.17677669
  %v2719 = vsel %vm767, %v2715, -inf
  %2720 = vmax.xlane.f32.xlu0 %v2719
  %v2721 = vpop.xlane.xlu0 %2720
  %v2722 = vsel %vm767, %v2716, -inf
  %2723 = vmax.xlane.f32.xlu0 %v2722
  %v2724 = vpop.xlane.xlu0 %2723
  %v2725 = vsel %vm767, %v2717, -inf
  %2726 = vmax.xlane.f32.xlu0 %v2725
  %v2727 = vpop.xlane.xlu0 %2726
  %v2728 = vsel %vm767, %v2718, -inf
  %2729 = vmax.xlane.f32.xlu0 %v2728
  %v2730 = vpop.xlane.xlu0 %2729
  %v2731 = vsub.f32 %v2715, %v2721
  %v2732 = vsub.f32 %v2716, %v2724
  %v2733 = vsub.f32 %v2717, %v2727
  %v2734 = vsub.f32 %v2718, %v2730
  %v2735 = vmul.f32 %v2731, 1.442695
  %v2736 = vpow.pop %v2735
  %v2737 = vmul.f32 %v2732, 1.442695
  %v2738 = vpow.pop %v2737
  %v2739 = vmul.f32 %v2733, 1.442695
  %v2740 = vpow.pop %v2739
  %v2741 = vmul.f32 %v2734, 1.442695
  %v2742 = vpow.pop %v2741
  %v2743 = vsel %vm767, %v2736, 0.0
  %2744 = vadd.xlane.f32.xlu0 %v2743
  %v2745 = vpop.xlane.xlu0 %2744
  %v2746 = vsel %vm767, %v2738, 0.0
  %2747 = vadd.xlane.f32.xlu0 %v2746
  %v2748 = vpop.xlane.xlu0 %2747
  %v2749 = vsel %vm767, %v2740, 0.0
  %2750 = vadd.xlane.f32.xlu0 %v2749
  %v2751 = vpop.xlane.xlu0 %2750
  %v2752 = vsel %vm767, %v2742, 0.0
  %2753 = vadd.xlane.f32.xlu0 %v2752
  %v2754 = vpop.xlane.xlu0 %2753
  %v2755 = vrcp.pop %v2745
  %v2756 = vrcp.pop %v2748
  %v2757 = vrcp.pop %v2751
  %v2758 = vrcp.pop %v2754
  %v2759 = vmul.f32 %v2736, %v2755
  %v2760 = vmul.f32 %v2738, %v2756
  %v2761 = vmul.f32 %v2740, %v2757
  %v2762 = vmul.f32 %v2742, %v2758
  %v2763 = vadd.f32 %v2759, %v2761
  %v2764 = vadd.f32 %v2760, %v2762
  %v2765 = vpack.c.bf16 %v2763, %v2763
  %v2766 = vpack.c.bf16 %v2764, %v2764
  %v2767 = vmul.f32 %v2457, %v819
  %v2768 = vmul.f32 %v2460, %v824
  %v2769 = vpack.c.bf16 %v2767, %v2767
  %v2770 = vpack.c.bf16 %v2768, %v2768
  %v2772 = vsel %vm767, %v2765, 0
  %v2775 = vsel %vm833, %v2769, 0
  %2777 = vmatprep.subr.bf16.mxu0 0
  %2778 = vmatpush1.bf16.msra.mxu0 %v2775
  %2779 = vmatprep.subr.bf16.mxu0 0
  %2780 = vmatpush1.bf16.msra.mxu0 0
  %2781 = vmatprep.subr.bf16.mxu0 0
  %2782 = vmatpush1.bf16.msra.mxu0 0
  %2783 = vmatprep.subr.bf16.mxu0 0
  %2784 = vmatpush1.bf16.msra.mxu0 0
  %2785 = vmatprep.subr.bf16.mxu0 0
  %2786 = vmatpush1.bf16.msra.mxu0 0
  %2787 = vmatprep.subr.bf16.mxu0 0
  %2788 = vmatpush1.bf16.msra.mxu0 0
  %2789 = vmatprep.subr.bf16.mxu0 0
  %2790 = vmatpush1.bf16.msra.mxu0 0
  %2791 = vmatprep.subr.bf16.mxu0 0
  %2792 = vmatpush1.bf16.msra.mxu0 0
  %2793 = vmatprep.subr.bf16.mxu0 0
  %2794 = vmatpush1.bf16.msra.mxu0 0
  %2795 = vmatprep.subr.bf16.mxu0 0
  %2796 = vmatpush1.bf16.msra.mxu0 0
  %2797 = vmatprep.subr.bf16.mxu0 0
  %2798 = vmatpush1.bf16.msra.mxu0 0
  %2799 = vmatprep.subr.bf16.mxu0 0
  %2800 = vmatpush1.bf16.msra.mxu0 0
  %2801 = vmatprep.subr.bf16.mxu0 0
  %2802 = vmatpush1.bf16.msra.mxu0 0
  %2803 = vmatprep.subr.bf16.mxu0 0
  %2804 = vmatpush1.bf16.msra.mxu0 0
  %2805 = vmatprep.subr.bf16.mxu0 0
  %2806 = vmatpush1.bf16.msra.mxu0 0
  %2807 = vmatprep.subr.bf16.mxu0 0
  %2808 = vmatpush1.bf16.msra.mxu0 0
  %2809 = vmatprep.mubr.bf16.mxu0 0
  %2810 = vmatmul.mubr.bf16.gmra.mrb[0].mxu0 %v2772
  %v2811 = vpop.f32.mrb[0].mxu0
  %v2812 = vadd.f32 0.0, %v2811
  %v2813 = vpop.f32.mrb[0].mxu0
  %v2814 = vpop.f32.mrb[0].mxu0
  %v2815 = vpop.f32.mrb[0].mxu0
  %2816 = vdwg.mxu0
  %v2818 = vsel %vm767, %v2766, 0
  %v2821 = vsel %vm833, %v2770, 0
  %2823 = vmatprep.subr.bf16.mxu0 0
  %2824 = vmatpush1.bf16.msra.mxu0 %v2821
  %2825 = vmatprep.subr.bf16.mxu0 0
  %2826 = vmatpush1.bf16.msra.mxu0 0
  %2827 = vmatprep.subr.bf16.mxu0 0
  %2828 = vmatpush1.bf16.msra.mxu0 0
  %2829 = vmatprep.subr.bf16.mxu0 0
  %2830 = vmatpush1.bf16.msra.mxu0 0
  %2831 = vmatprep.subr.bf16.mxu0 0
  %2832 = vmatpush1.bf16.msra.mxu0 0
  %2833 = vmatprep.subr.bf16.mxu0 0
  %2834 = vmatpush1.bf16.msra.mxu0 0
  %2835 = vmatprep.subr.bf16.mxu0 0
  %2836 = vmatpush1.bf16.msra.mxu0 0
  %2837 = vmatprep.subr.bf16.mxu0 0
  %2838 = vmatpush1.bf16.msra.mxu0 0
  %2839 = vmatprep.subr.bf16.mxu0 0
  %2840 = vmatpush1.bf16.msra.mxu0 0
  %2841 = vmatprep.subr.bf16.mxu0 0
  %2842 = vmatpush1.bf16.msra.mxu0 0
  %2843 = vmatprep.subr.bf16.mxu0 0
  %2844 = vmatpush1.bf16.msra.mxu0 0
  %2845 = vmatprep.subr.bf16.mxu0 0
  %2846 = vmatpush1.bf16.msra.mxu0 0
  %2847 = vmatprep.subr.bf16.mxu0 0
  %2848 = vmatpush1.bf16.msra.mxu0 0
  %2849 = vmatprep.subr.bf16.mxu0 0
  %2850 = vmatpush1.bf16.msra.mxu0 0
  %2851 = vmatprep.subr.bf16.mxu0 0
  %2852 = vmatpush1.bf16.msra.mxu0 0
  %2853 = vmatprep.subr.bf16.mxu0 0
  %2854 = vmatpush1.bf16.msra.mxu0 0
  %2855 = vmatprep.mubr.bf16.mxu0 0
  %2856 = vmatmul.mubr.bf16.gmra.mrb[0].mxu0 %v2818
  %v2857 = vpop.f32.mrb[0].mxu0
  %v2858 = vadd.f32 0.0, %v2857
  %v2859 = vpop.f32.mrb[0].mxu0
  %v2860 = vpop.f32.mrb[0].mxu0
  %v2861 = vpop.f32.mrb[0].mxu0
  %2862 = vdwg.mxu0
  %2863 = vmatprep.subr.bf16.mxu0 0
  %2864 = vmatpush1.bf16.msra.mxu0 %v924
  %2865 = vmatprep.subr.bf16.mxu0 0
  %2866 = vmatpush1.bf16.msra.mxu0 0
  %2867 = vmatprep.subr.bf16.mxu0 0
  %2868 = vmatpush1.bf16.msra.mxu0 0
  %2869 = vmatprep.subr.bf16.mxu0 0
  %2870 = vmatpush1.bf16.msra.mxu0 0
  %2871 = vmatprep.subr.bf16.mxu0 0
  %2872 = vmatpush1.bf16.msra.mxu0 0
  %2873 = vmatprep.subr.bf16.mxu0 0
  %2874 = vmatpush1.bf16.msra.mxu0 0
  %2875 = vmatprep.subr.bf16.mxu0 0
  %2876 = vmatpush1.bf16.msra.mxu0 0
  %2877 = vmatprep.subr.bf16.mxu0 0
  %2878 = vmatpush1.bf16.msra.mxu0 0
  %2879 = vmatprep.subr.bf16.mxu0 0
  %2880 = vmatpush1.bf16.msra.mxu0 0
  %2881 = vmatprep.subr.bf16.mxu0 0
  %2882 = vmatpush1.bf16.msra.mxu0 0
  %2883 = vmatprep.subr.bf16.mxu0 0
  %2884 = vmatpush1.bf16.msra.mxu0 0
  %2885 = vmatprep.subr.bf16.mxu0 0
  %2886 = vmatpush1.bf16.msra.mxu0 0
  %2887 = vmatprep.subr.bf16.mxu0 0
  %2888 = vmatpush1.bf16.msra.mxu0 0
  %2889 = vmatprep.subr.bf16.mxu0 0
  %2890 = vmatpush1.bf16.msra.mxu0 0
  %2891 = vmatprep.subr.bf16.mxu0 0
  %2892 = vmatpush1.bf16.msra.mxu0 0
  %2893 = vmatprep.subr.bf16.mxu0 0
  %2894 = vmatpush1.bf16.msra.mxu0 0
  %2895 = vmatprep.mubr.bf16.mxu0 0
  %2896 = vmatmul.mubr.bf16.gmra.mrb[0].mxu0 %v2772
  %v2897 = vpop.f32.mrb[0].mxu0
  %v2898 = vadd.f32 0.0, %v2897
  %v2899 = vpop.f32.mrb[0].mxu0
  %v2900 = vpop.f32.mrb[0].mxu0
  %v2901 = vpop.f32.mrb[0].mxu0
  %2902 = vdwg.mxu0
  %2903 = vmatprep.subr.bf16.mxu0 0
  %2904 = vmatpush1.bf16.msra.mxu0 %v967
  %2905 = vmatprep.subr.bf16.mxu0 0
  %2906 = vmatpush1.bf16.msra.mxu0 0
  %2907 = vmatprep.subr.bf16.mxu0 0
  %2908 = vmatpush1.bf16.msra.mxu0 0
  %2909 = vmatprep.subr.bf16.mxu0 0
  %2910 = vmatpush1.bf16.msra.mxu0 0
  %2911 = vmatprep.subr.bf16.mxu0 0
  %2912 = vmatpush1.bf16.msra.mxu0 0
  %2913 = vmatprep.subr.bf16.mxu0 0
  %2914 = vmatpush1.bf16.msra.mxu0 0
  %2915 = vmatprep.subr.bf16.mxu0 0
  %2916 = vmatpush1.bf16.msra.mxu0 0
  %2917 = vmatprep.subr.bf16.mxu0 0
  %2918 = vmatpush1.bf16.msra.mxu0 0
  %2919 = vmatprep.subr.bf16.mxu0 0
  %2920 = vmatpush1.bf16.msra.mxu0 0
  %2921 = vmatprep.subr.bf16.mxu0 0
  %2922 = vmatpush1.bf16.msra.mxu0 0
  %2923 = vmatprep.subr.bf16.mxu0 0
  %2924 = vmatpush1.bf16.msra.mxu0 0
  %2925 = vmatprep.subr.bf16.mxu0 0
  %2926 = vmatpush1.bf16.msra.mxu0 0
  %2927 = vmatprep.subr.bf16.mxu0 0
  %2928 = vmatpush1.bf16.msra.mxu0 0
  %2929 = vmatprep.subr.bf16.mxu0 0
  %2930 = vmatpush1.bf16.msra.mxu0 0
  %2931 = vmatprep.subr.bf16.mxu0 0
  %2932 = vmatpush1.bf16.msra.mxu0 0
  %2933 = vmatprep.subr.bf16.mxu0 0
  %2934 = vmatpush1.bf16.msra.mxu0 0
  %2935 = vmatprep.mubr.bf16.mxu0 0
  %2936 = vmatmul.mubr.bf16.gmra.mrb[0].mxu0 %v2818
  %v2937 = vpop.f32.mrb[0].mxu0
  %v2938 = vadd.f32 0.0, %v2937
  %v2939 = vpop.f32.mrb[0].mxu0
  %v2940 = vpop.f32.mrb[0].mxu0
  %v2941 = vpop.f32.mrb[0].mxu0
  %2942 = vdwg.mxu0
  %v2943 = vrcp.pop %v2898
  %v2944 = vrcp.pop %v2938
  %2946 = vset.pattern.permute.xlu0 0
  %2947 = vperm.xlu0 %2946, %v2943
  %v2948 = vpop.permute.xlu0 %2947
  %2951 = vset.pattern.permute.xlu0 0
  %2952 = vperm.xlu0 %2951, %v2944
  %v2953 = vpop.permute.xlu0 %2952
  %v2955 = vmul.f32 %v2812, %v2948
  %v2956 = vmul.f32 %v2858, %v2953
  %v2957 = vmax.f32 %v2955, 0.0
  %v2958 = vmax.f32 %v2956, 0.0
  %vm2959 = vcmp.ne.f32.partialorder %v2955, %v2955
  %vm2960 = vcmp.ne.f32.partialorder %v2956, %v2956
  %v2961 = vadd.f32 %v2955, 0.0
  %v2962 = vadd.f32 %v2956, 0.0
  %v2963 = vand.u32 2147483647, %v2955
  %v2964 = vand.u32 2147483647, %v2956
  %v2965 = vsub.f32 0.0, %v2963
  %v2966 = vsub.f32 0.0, %v2964
  %v2967 = vmul.f32 %v2965, 1.442695
  %v2968 = vpow.pop %v2967
  %v2969 = vmul.f32 %v2966, 1.442695
  %v2970 = vpow.pop %v2969
  %v2971 = vadd.f32 %v2968, 1.0
  %v2972 = vlog2.pop %v2971
  %v2973 = vmul.f32 %v2972, 0.6931472
  %v2974 = vmul.f32 -0.5, %v2968
  %v2975 = vadd.f32 %v2974, 1.0
  %v2976 = vmul.f32 %v2975, %v2968
  %v2977 = vand.u32 2147483647, %v2968
  %vm2978 = vcmp.lt.f32.partialorder %v2977, 0.0004427343
  %v2979 = vsel %vm2978, %v2976, %v2973
  %v2980 = vadd.f32 %v2970, 1.0
  %v2981 = vlog2.pop %v2980
  %v2982 = vmul.f32 %v2981, 0.6931472
  %v2983 = vmul.f32 -0.5, %v2970
  %v2984 = vadd.f32 %v2983, 1.0
  %v2985 = vmul.f32 %v2984, %v2970
  %v2986 = vand.u32 2147483647, %v2970
  %vm2987 = vcmp.lt.f32.partialorder %v2986, 0.0004427343
  %v2988 = vsel %vm2987, %v2985, %v2982
  %v2989 = vadd.f32 %v2957, %v2979
  %v2990 = vadd.f32 %v2958, %v2988
  %v2991 = vsel %vm2959, %v2961, %v2989
  %v2992 = vsel %vm2960, %v2962, %v2990
  %v2993 = vadd.f32 %v2222, %v2991
  %v2994 = vadd.f32 %v2225, %v2992
  %v2995 = vsel %vm151, %v2993, 0.0
  %2996 = vadd.xlane.f32.xlu0 %v2995
  %v2997 = vpop.xlane.xlu0 %2996
  %v2998 = vsel %vm151, %v2994, 0.0
  %2999 = vadd.xlane.f32.xlu0 %v2998
  %v3000 = vpop.xlane.xlu0 %2999
  %v3001 = vmul.f32 %v2997, 0.015625
  %v3002 = vmul.f32 %v3000, 0.015625
  %v3003 = vsub.f32 %v2993, %v3001
  %v3004 = vsub.f32 %v2994, %v3002
  %v3005 = vmul.f32 %v3003, %v3003
  %v3006 = vmul.f32 %v3004, %v3004
  %v3007 = vsel %vm151, %v3005, 0.0
  %3008 = vadd.xlane.f32.xlu0 %v3007
  %v3009 = vpop.xlane.xlu0 %3008
  %v3010 = vsel %vm151, %v3006, 0.0
  %3011 = vadd.xlane.f32.xlu0 %v3010
  %v3012 = vpop.xlane.xlu0 %3011
  %v3013 = vmul.f32 %v3009, 0.015625
  %v3014 = vmul.f32 %v3012, 0.015625
  %v3015 = vadd.f32 %v3013, 1e-05
  %v3016 = vadd.f32 %v3014, 1e-05
  %v3017 = vrsqrt.pop %v3015
  %v3018 = vrsqrt.pop %v3016
  %v3019 = vmul.f32 %v3003, %v3017
  %v3020 = vmul.f32 %v3004, %v3018
  %v3021 = vlaneseq
  %v3022 = vshrl.u32 %v3021, 7
  %v3023 = vsub.s32 5, %v3022
  %v3024 = vrot.slane %v17, %v3023
  %v3025 = vmul.f32 %v3019, %v3024
  %v3026 = vmul.f32 %v3020, %v3024
  %v3027 = vlaneseq
  %v3028 = vshrl.u32 %v3027, 7
  %v3029 = vsub.s32 6, %v3028
  %v3030 = vrot.slane %v17, %v3029
  %v3031 = vadd.f32 %v3025, %v3030
  %v3032 = vadd.f32 %v3026, %v3030
  %v3033 = vpack.c.bf16 %v3032, %v3031
  %v3034 = vld [vmem:[%s1 + $0x200] sm:$0xf]
  %v3035 = vld [vmem:[%s1 + $0x204] sm:$0xf]
  %v3036 = vld [vmem:[%s1 + $0x208] sm:$0xf]
  %v3037 = vld [vmem:[%s1 + $0x20c] sm:$0xf]
  %v3038 = vld [vmem:[%s1 + $0x210] sm:$0xf]
  %v3039 = vld [vmem:[%s1 + $0x214] sm:$0xf]
  %v3040 = vld [vmem:[%s1 + $0x218] sm:$0xf]
  %v3041 = vld [vmem:[%s1 + $0x21c] sm:$0xf]
  %v3042 = vlaneseq
  %v3043 = vshrl.u32 %v3042, 7
  %v3044 = vsub.s32 7, %v3043
  %v3045 = vrot.slane %v17, %v3044
  %v3054 = vunpack.c.l.b16 %v3034
  %v3055 = vunpack.c.l.b16 %v3035
  %v3056 = vunpack.c.l.b16 %v3036
  %v3057 = vunpack.c.l.b16 %v3037
  %v3058 = vunpack.c.l.b16 %v3038
  %v3059 = vunpack.c.l.b16 %v3039
  %v3060 = vunpack.c.l.b16 %v3040
  %v3061 = vunpack.c.l.b16 %v3041
  %v3062 = vpack.c.b16 %v3055, %v3054
  %v3063 = vpack.c.b16 %v3057, %v3056
  %v3064 = vpack.c.b16 %v3059, %v3058
  %v3065 = vpack.c.b16 %v3061, %v3060
  %v3071 = vsel %vm151, %v3033, 0
  %3073 = vmatprep.subr.bf16.mxu0 0
  %3074 = vmatpush1.bf16.msra.mxu0 %v3062
  %3075 = vmatprep.subr.bf16.mxu0 0
  %3076 = vmatpush1.bf16.msra.mxu0 %v3063
  %3077 = vmatprep.subr.bf16.mxu0 0
  %3078 = vmatpush1.bf16.msra.mxu0 %v3064
  %3079 = vmatprep.subr.bf16.mxu0 0
  %3080 = vmatpush1.bf16.msra.mxu0 %v3065
  %3081 = vmatprep.subr.bf16.mxu0 0
  %3082 = vmatpush1.bf16.msra.mxu0 0
  %3083 = vmatprep.subr.bf16.mxu0 0
  %3084 = vmatpush1.bf16.msra.mxu0 0
  %3085 = vmatprep.subr.bf16.mxu0 0
  %3086 = vmatpush1.bf16.msra.mxu0 0
  %3087 = vmatprep.subr.bf16.mxu0 0
  %3088 = vmatpush1.bf16.msra.mxu0 0
  %3089 = vmatprep.subr.bf16.mxu0 0
  %3090 = vmatpush1.bf16.msra.mxu0 0
  %3091 = vmatprep.subr.bf16.mxu0 0
  %3092 = vmatpush1.bf16.msra.mxu0 0
  %3093 = vmatprep.subr.bf16.mxu0 0
  %3094 = vmatpush1.bf16.msra.mxu0 0
  %3095 = vmatprep.subr.bf16.mxu0 0
  %3096 = vmatpush1.bf16.msra.mxu0 0
  %3097 = vmatprep.subr.bf16.mxu0 0
  %3098 = vmatpush1.bf16.msra.mxu0 0
  %3099 = vmatprep.subr.bf16.mxu0 0
  %3100 = vmatpush1.bf16.msra.mxu0 0
  %3101 = vmatprep.subr.bf16.mxu0 0
  %3102 = vmatpush1.bf16.msra.mxu0 0
  %3103 = vmatprep.subr.bf16.mxu0 0
  %3104 = vmatpush1.bf16.msra.mxu0 0
  %3105 = vmatprep.mubr.bf16.mxu0 0
  %3106 = vmatmul.mubr.bf16.gmra.mrb[0].mxu0 %v3071
  %v3107 = vpop.f32.mrb[0].mxu0
  %v3108 = vadd.f32 %v3045, %v3107
  %v3109 = vpop.f32.mrb[0].mxu0
  %v3110 = vpop.f32.mrb[0].mxu0
  %v3111 = vadd.f32 %v3045, %v3110
  %v3112 = vpop.f32.mrb[0].mxu0
  %3113 = vdwg.mxu0
  %v3114 = vadd.f32 %v3108, %v190
  %v3115 = vadd.f32 %v3111, %v191
  %v3116 = vmul.f32 %v3114, %v819
  %v3117 = vmul.f32 %v3115, %v824
  %v3118 = vsel %vm151, %v3116, 0.0
  %v3119 = vrot.slane %v3118, 4
  %v3120 = vadd.f32 %v3118, %v3119
  %v3121 = vrot.slane %v3120, 2
  %v3122 = vadd.f32 %v3120, %v3121
  %v3123 = vrot.slane %v3122, 1
  %v3124 = vadd.f32 %v3122, %v3123
  %v3125 = vsel %vm151, %v3117, 0.0
  %v3126 = vrot.slane %v3125, 4
  %v3127 = vadd.f32 %v3125, %v3126
  %v3128 = vrot.slane %v3127, 2
  %v3129 = vadd.f32 %v3127, %v3128
  %v3130 = vrot.slane %v3129, 1
  %v3131 = vadd.f32 %v3129, %v3130
  %vm3134 = vcmask 1041409
  %v3135 = vsel %vm3134, %v3131, %v3124
  %vm3137 = vcmask 517120
  %v3138 = vsel %vm3137, %v3135, 0.0
  %3139 = vadd.xlane.f32.xlu0 %v3138
  %v3140 = vpop.xlane.xlu0 %3139
  %v3141 = vmul.f32 %v3140, 0.03125
  %v3143 = vrot.slane %v3141, 1
  %v3146 = vsub.f32 %v3124, %v3141
  %v3147 = vsub.f32 %v3131, %v3143
  %v3148 = vmul.f32 %v3146, %v3146
  %v3149 = vmul.f32 %v3147, %v3147
  %v3150 = vmul.f32 %v3148, %v22
  %v3151 = vmul.f32 %v3149, %v22
  %v3154 = vrot.slane %v3151, 7
  %v3155 = vsel %vm3134, %v3154, %v3150
  %v3157 = vsel %vm3137, %v3155, 0.0
  %3158 = vadd.xlane.f32.xlu0 %v3157
  %v3159 = vpop.xlane.xlu0 %3158
  %v3160 = vmul.f32 %v3159, 0.03125
  %v3161 = vadd.f32 %v3160, 1e-05
  %v3162 = vrsqrt.pop %v3161
  %v3164 = vrot.slane %v3162, 1
  %v3167 = vmul.f32 %v3146, %v3162
  %v3168 = vmul.f32 %v3147, %v3164
  %v3169 = vmul.f32 %v3167, %v183
  %v3170 = vmul.f32 %v3168, %v183
  %v3171 = vadd.f32 %v3169, %v189
  %v3172 = vadd.f32 %v3170, %v189
  %v3173 = vpack.c.bf16 %v3171, %v3171
  %v3174 = vpack.c.bf16 %v3172, %v3172
  %v3175 = vld [vmem:[%s1 + $0x220] sm:$0xf]
  %v3176 = vld [vmem:[%s1 + $0x224] sm:$0xf]
  %v3177 = vld [vmem:[%s1 + $0x228] sm:$0xf]
  %v3178 = vld [vmem:[%s1 + $0x22c] sm:$0xf]
  %v3179 = vld [vmem:[%s1 + $0x230] sm:$0xf]
  %v3180 = vld [vmem:[%s1 + $0x234] sm:$0xf]
  %v3181 = vld [vmem:[%s1 + $0x238] sm:$0xf]
  %v3182 = vld [vmem:[%s1 + $0x23c] sm:$0xf]
  %v3183 = vlaneseq
  %v3184 = vshrl.u32 %v3183, 7
  %v3185 = vsub.s32 0, %v3184
  %v3186 = vrot.slane %v18, %v3185
  %v3189 = vunpack.c.l.b16 %v3173
  %v3190 = vunpack.c.l.b16 %v3174
  %v3191 = vrot.slane %v3190, 7
  %v3192 = vsel %vm3134, %v3191, %v3189
  %v3193 = vpack.c.b16 %v3192, %v3192
  %v3202 = vunpack.c.l.b16 %v3175
  %v3203 = vunpack.c.l.b16 %v3176
  %v3204 = vunpack.c.l.b16 %v3177
  %v3205 = vunpack.c.l.b16 %v3178
  %v3206 = vunpack.c.l.b16 %v3179
  %v3207 = vunpack.c.l.b16 %v3180
  %v3208 = vunpack.c.l.b16 %v3181
  %v3209 = vunpack.c.l.b16 %v3182
  %v3210 = vpack.c.b16 %v3203, %v3202
  %v3211 = vpack.c.b16 %v3205, %v3204
  %v3212 = vpack.c.b16 %v3207, %v3206
  %v3213 = vpack.c.b16 %v3209, %v3208
  %v3219 = vsel %vm151, %v3193, 0
  %3221 = vmatprep.subr.bf16.mxu0 0
  %3222 = vmatpush1.bf16.msra.mxu0 %v3210
  %3223 = vmatprep.subr.bf16.mxu0 0
  %3224 = vmatpush1.bf16.msra.mxu0 %v3211
  %3225 = vmatprep.subr.bf16.mxu0 0
  %3226 = vmatpush1.bf16.msra.mxu0 %v3212
  %3227 = vmatprep.subr.bf16.mxu0 0
  %3228 = vmatpush1.bf16.msra.mxu0 %v3213
  %3229 = vmatprep.subr.bf16.mxu0 0
  %3230 = vmatpush1.bf16.msra.mxu0 0
  %3231 = vmatprep.subr.bf16.mxu0 0
  %3232 = vmatpush1.bf16.msra.mxu0 0
  %3233 = vmatprep.subr.bf16.mxu0 0
  %3234 = vmatpush1.bf16.msra.mxu0 0
  %3235 = vmatprep.subr.bf16.mxu0 0
  %3236 = vmatpush1.bf16.msra.mxu0 0
  %3237 = vmatprep.subr.bf16.mxu0 0
  %3238 = vmatpush1.bf16.msra.mxu0 0
  %3239 = vmatprep.subr.bf16.mxu0 0
  %3240 = vmatpush1.bf16.msra.mxu0 0
  %3241 = vmatprep.subr.bf16.mxu0 0
  %3242 = vmatpush1.bf16.msra.mxu0 0
  %3243 = vmatprep.subr.bf16.mxu0 0
  %3244 = vmatpush1.bf16.msra.mxu0 0
  %3245 = vmatprep.subr.bf16.mxu0 0
  %3246 = vmatpush1.bf16.msra.mxu0 0
  %3247 = vmatprep.subr.bf16.mxu0 0
  %3248 = vmatpush1.bf16.msra.mxu0 0
  %3249 = vmatprep.subr.bf16.mxu0 0
  %3250 = vmatpush1.bf16.msra.mxu0 0
  %3251 = vmatprep.subr.bf16.mxu0 0
  %3252 = vmatpush1.bf16.msra.mxu0 0
  %3253 = vmatprep.mubr.bf16.mxu0 0
  %3254 = vmatmul.mubr.bf16.gmra.mrb[0].mxu0 %v3219
  %v3255 = vpop.f32.mrb[0].mxu0
  %v3256 = vadd.f32 %v3186, %v3255
  %v3257 = vpop.f32.mrb[0].mxu0
  %v3258 = vpop.f32.mrb[0].mxu0
  %v3259 = vpop.f32.mrb[0].mxu0
  %3260 = vdwg.mxu0
  %3261 = vst.msk [vmem:[%s3] sm:$0x3] %vm3137, %v3256
  // Predicated region
  $region14: #{periodic_set_transformer.1} parent=0 // pred_check
    _
  $region15: #{periodic_set_transformer.1} parent=0 // pred_check_branch
    %3263 = sbr.rel (0) target = $region17
  $region16: #{periodic_set_transformer.1} parent=0 // pred_region
    _
  $region17: #{periodic_set_transformer.1} parent=0 // pred_fallthru
    _
  // Predicated region
  $region18: #{periodic_set_transformer.1} parent=0 // pred_check
    _
  $region19: #{periodic_set_transformer.1} parent=0 // pred_check_branch
    %3265 = sbr.rel (0) target = $region21
  $region20: #{periodic_set_transformer.1} parent=0 // pred_region
    _
  $region21: #{periodic_set_transformer.1} parent=0 // pred_fallthru
    _

</llo_original>
